<compile_context>
chip_gen: v7x
topology: tpu7x:2x2x1
jax: 0.10.0
libtpu: 0.0.40
codegen_flags: <defaults>
</compile_context>

<pallas_src>
from functools import lru_cache, partial

import numpy as np
import jax
import jax.numpy as jnp
from jax import lax
from jax.experimental import pallas as pl
from jax.experimental.pallas import tpu as pltpu

EPS = 1e-5                               # torch.nn.LayerNorm default eps
MATMUL_DTYPE = jnp.bfloat16              # MXU operand dtype (f32 accumulation)


# ---------------------------------------------------------------------------
# generation-aware knobs & helpers
# ---------------------------------------------------------------------------
@lru_cache(maxsize=None)
def _vmem_limit_bytes():
    """Request most of VMEM but always leave headroom for Mosaic scratch."""
    try:
        cap = int(pltpu.get_tpu_info().vmem_capacity_bytes)
    except Exception:                     # query unavailable -> conservative
        cap = 64 * 1024 * 1024
    return max(32 * 1024 * 1024, min(cap - 16 * 1024 * 1024, 112 * 1024 * 1024))


@lru_cache(maxsize=None)
def _seq_tile_target():
    # larger tiles amortize per-grid-step overhead on 128 MiB parts (v5e/v6e);
    # stay at 256 on 64 MiB-VMEM parts (v7x).
    return 512 if _vmem_limit_bytes() >= (96 << 20) else 256


def _round_up(n, m):
    return ((n + m - 1) // m) * m


def _seq_tile(t):
    """(tile, padded length) for a fresh sequence length t."""
    target = _seq_tile_target()
    tp8 = _round_up(t, 8)
    if tp8 <= target:
        return tp8, tp8
    return target, _round_up(t, target)


def _tile_of(t_pad):
    """Tile for an already-padded sequence length (as produced by _seq_tile)."""
    target = _seq_tile_target()
    return target if (t_pad >= target and t_pad % target == 0) else t_pad


def _head_group(n_head, dh):
    """Heads per flash-attention group; hg*dh lane-aligned (128) if possible."""
    cands = [h for h in range(1, n_head + 1)
             if n_head % h == 0 and (h * dh) % 128 == 0]
    if not cands:
        return n_head                     # hg*dh == C (full dim) is also legal
    return min(cands, key=lambda h: (abs(h * dh - 256), h))


def _hidden_tile(n_mlp, target=2048):
    """MLP hidden-dim tile: multiple of 128 that divides 4C, capped by target."""
    if n_mlp <= target:
        return n_mlp
    for th in range(target, 127, -128):
        if n_mlp % th == 0:
            return th
    return n_mlp


def _compiler_params(semantics):
    return pltpu.CompilerParams(dimension_semantics=semantics,
                                vmem_limit_bytes=_vmem_limit_bytes())


def _gelu(x):
    # exact (erf) GELU, matching torch.nn.GELU / F.gelu defaults
    return 0.5 * x * (1.0 + lax.erf(x / jnp.sqrt(jnp.float32(2.0))))


def _layernorm(x, w, b):
    # f32 math (whisper's LayerNorm computes in float32)
    xf = x.astype(jnp.float32)
    mu = jnp.mean(xf, axis=-1, keepdims=True)
    var = jnp.mean((xf - mu) ** 2, axis=-1, keepdims=True)
    return (xf - mu) * lax.rsqrt(var + EPS) * w + b


# ---------------------------------------------------------------------------
# Kernel 1: Conv1d (3 tap-matmuls) + bias + GELU (+ optional positional add)
# ---------------------------------------------------------------------------
def _conv_gelu_kernel(x_ref, w_ref, b_ref, o_ref):
    acc = jnp.dot(x_ref[0, 0], w_ref[0], preferred_element_type=jnp.float32)
    acc += jnp.dot(x_ref[0, 1], w_ref[1], preferred_element_type=jnp.float32)
    acc += jnp.dot(x_ref[0, 2], w_ref[2], preferred_element_type=jnp.float32)
    acc += b_ref[...]
    o_ref[0] = _gelu(acc).astype(o_ref.dtype)


def _conv_gelu_pos_kernel(x_ref, w_ref, b_ref, pos_ref, o_ref):
    acc = jnp.dot(x_ref[0, 0], w_ref[0], preferred_element_type=jnp.float32)
    acc += jnp.dot(x_ref[0, 1], w_ref[1], preferred_element_type=jnp.float32)
    acc += jnp.dot(x_ref[0, 2], w_ref[2], preferred_element_type=jnp.float32)
    acc += b_ref[...]
    o_ref[0] = (_gelu(acc) + pos_ref[...]).astype(o_ref.dtype)


def conv1d_gelu(x_nlc, real_len, w, b2d, stride, pos=None,
                out_dtype=jnp.float32):
    """x_nlc: (B, L_pad, C_in) with real_len valid rows. kernel=3, padding=1.

    Returns (out (B, T_pad, C_out), T_out_real)."""
    B = x_nlc.shape[0]
    C_in = x_nlc.shape[-1]
    C_out = w.shape[-1]
    L = real_len
    T_out = (L + 2 - 3) // stride + 1
    tq, T_pad = _seq_tile(T_out)
    n_t = T_pad // tq

    # TODO(synk): read the 3 taps in-kernel from a padded HBM ref (manual halo
    # DMA) to remove the im2col stack's extra HBM traffic; conv is a small
    # fraction of encoder FLOPs so the taps stack is kept for robustness.
    x_pad = jnp.pad(x_nlc[:, :L].astype(MATMUL_DTYPE), ((0, 0), (1, 1), (0, 0)))
    taps = jnp.stack(
        [x_pad[:, k: k + stride * (T_out - 1) + 1: stride, :] for k in range(3)],
        axis=1)                                            # (B, 3, T_out, C_in)
    if T_pad != T_out:
        taps = jnp.pad(taps, ((0, 0), (0, 0), (0, T_pad - T_out), (0, 0)))

    in_specs = [
        pl.BlockSpec((1, 3, tq, C_in), lambda t, bi: (bi, 0, t, 0)),
        pl.BlockSpec((3, C_in, C_out), lambda t, bi: (0, 0, 0)),
        pl.BlockSpec((1, C_out), lambda t, bi: (0, 0)),
    ]
    args = [taps, w, b2d]
    kernel = _conv_gelu_kernel
    if pos is not None:
        assert pos.shape[0] == T_out, "incorrect audio shape"
        pos_p = pos if T_pad == T_out else jnp.pad(
            pos, ((0, T_pad - T_out), (0, 0)))
        in_specs.append(pl.BlockSpec((tq, C_out), lambda t, bi: (t, 0)))
        args.append(pos_p)
        kernel = _conv_gelu_pos_kernel

    out = pl.pallas_call(
        kernel,
        out_shape=jax.ShapeDtypeStruct((B, T_pad, C_out), out_dtype),
        grid=(n_t, B),
        in_specs=in_specs,
        out_specs=pl.BlockSpec((1, tq, C_out), lambda t, bi: (bi, t, 0)),
        compiler_params=_compiler_params(("parallel", "parallel")),
    )(*args)
    return out, T_out


# ---------------------------------------------------------------------------
# Kernel 2: fused LayerNorm + Q/K/V projections -> lane-dense (B, T_pad, C)
#           (dh**-0.25 scale already folded into W_q / W_k / b_q)
# ---------------------------------------------------------------------------
def _qkv_proj_kernel(x_ref, lnw_ref, lnb_ref, wq_ref, bq_ref, wk_ref,
                     wv_ref, bv_ref, q_ref, k_ref, v_ref):
    xn = _layernorm(x_ref[0], lnw_ref[...], lnb_ref[...]).astype(wq_ref.dtype)
    q_ref[0] = (jnp.dot(xn, wq_ref[...], preferred_element_type=jnp.float32)
                + bq_ref[...]).astype(q_ref.dtype)
    k_ref[0] = jnp.dot(xn, wk_ref[...],
                       preferred_element_type=jnp.float32).astype(k_ref.dtype)
    v_ref[0] = (jnp.dot(xn, wv_ref[...], preferred_element_type=jnp.float32)
                + bv_ref[...]).astype(v_ref.dtype)


def qkv_projection(x, blk):
    B, T_pad, C = x.shape
    tq = _tile_of(T_pad)
    out_sd = jax.ShapeDtypeStruct((B, T_pad, C), MATMUL_DTYPE)
    return pl.pallas_call(
        _qkv_proj_kernel,
        out_shape=(out_sd, out_sd, out_sd),
        grid=(T_pad // tq, B),
        in_specs=[
            pl.BlockSpec((1, tq, C), lambda t, bi: (bi, t, 0)),
            pl.BlockSpec((1, C), lambda t, bi: (0, 0)),
            pl.BlockSpec((1, C), lambda t, bi: (0, 0)),
            pl.BlockSpec((C, C), lambda t, bi: (0, 0)),
            pl.BlockSpec((1, C), lambda t, bi: (0, 0)),
            pl.BlockSpec((C, C), lambda t, bi: (0, 0)),
            pl.BlockSpec((C, C), lambda t, bi: (0, 0)),
            pl.BlockSpec((1, C), lambda t, bi: (0, 0)),
        ],
        out_specs=tuple(pl.BlockSpec((1, tq, C), lambda t, bi: (bi, t, 0))
                        for _ in range(3)),
        compiler_params=_compiler_params(("parallel", "parallel")),
    )(x, blk["ln1_w"], blk["ln1_b"], blk["wq"], blk["bq"], blk["wk"],
      blk["wv"], blk["bv"])


# ---------------------------------------------------------------------------
# Kernel 3: flash attention, per (batch, head-group, q-tile) grid step with an
#           in-kernel KV loop. K/V of the group are VMEM-resident across all
#           q tiles; pad key columns masked with -inf.
# ---------------------------------------------------------------------------
def _flash_attn_kernel(q_ref, k_ref, v_ref, o_ref,
                       k_hm, v_hm, m_sc, l_sc, acc_sc,
                       *, hg, dh, tk, t_actual, t_pad):
    qi = pl.program_id(2)

    # Relayout token-major K/V of this head group into head-major scratch once
    # per (batch, group); the input blocks are resident across all q tiles.
    @pl.when(qi == 0)
    def _():
        for h in range(hg):
            k_hm[h] = k_ref[0, :, h * dh:(h + 1) * dh]
            v_hm[h] = v_ref[0, :, h * dh:(h + 1) * dh]

    q = q_ref[0]                                              # (tq, hg*dh) bf16
    q_hm = jnp.stack([q[:, h * dh:(h + 1) * dh] for h in range(hg)], axis=0)

    m_sc[...] = jnp.full(m_sc.shape, -jnp.inf, jnp.float32)
    l_sc[...] = jnp.zeros(l_sc.shape, jnp.float32)
    acc_sc[...] = jnp.zeros(acc_sc.shape, jnp.float32)

    n_kv = t_pad // tk
    masked = t_actual < t_pad

    @pl.loop(0, n_kv)
    def _(i):
        start = pl.multiple_of(i * tk, tk)
        k_t = k_hm[:, pl.ds(start, tk), :]                    # (hg, tk, dh)
        v_t = v_hm[:, pl.ds(start, tk), :]
        s = lax.dot_general(q_hm, k_t, (((2,), (2,)), ((0,), (0,))),
                            preferred_element_type=jnp.float32)   # (hg, tq, tk)
        if masked:
            col = lax.broadcasted_iota(jnp.int32, s.shape, 2)
            s = jnp.where(col < (t_actual - i * tk), s, -jnp.inf)
        m_prev = m_sc[...]
        m_new = jnp.maximum(m_prev, jnp.max(s, axis=-1, keepdims=True))
        alpha = jnp.exp(m_prev - m_new)
        p = jnp.exp((s - m_new).astype(jnp.bfloat16))         # bf16 EUP exp
        l_sc[...] = alpha * l_sc[...] + jnp.sum(
            p.astype(jnp.float32), axis=-1, keepdims=True)
        pv = lax.dot_general(p, v_t, (((2,), (1,)), ((0,), (0,))),
                             preferred_element_type=jnp.float32)  # (hg, tq, dh)
        acc_sc[...] = alpha * acc_sc[...] + pv
        m_sc[...] = m_new

    ctx = acc_sc[...] / l_sc[...]                 # exact normalization (epilogue)
    o_ref[0] = jnp.concatenate([ctx[h] for h in range(hg)],
                               axis=-1).astype(o_ref.dtype)


def flash_attention(q, k, v, *, n_head, t_actual):
    B, T_pad, C = q.shape
    dh = C // n_head
    hg = _head_group(n_head, dh)
    G = n_head // hg
    hgdh = hg * dh
    tq = _tile_of(T_pad)
    tk = tq
    assert T_pad % tk == 0
    kv_spec = pl.BlockSpec((1, T_pad, hgdh), lambda b, g, qi: (b, 0, g))
    return pl.pallas_call(
        partial(_flash_attn_kernel, hg=hg, dh=dh, tk=tk,
                t_actual=t_actual, t_pad=T_pad),
        out_shape=jax.ShapeDtypeStruct((B, T_pad, C), MATMUL_DTYPE),
        grid=(B, G, T_pad // tq),
        in_specs=[
            pl.BlockSpec((1, tq, hgdh), lambda b, g, qi: (b, qi, g)),
            kv_spec,
            kv_spec,
        ],
        out_specs=pl.BlockSpec((1, tq, hgdh), lambda b, g, qi: (b, qi, g)),
        scratch_shapes=[
            pltpu.VMEM((hg, T_pad, dh), MATMUL_DTYPE),   # head-major K
            pltpu.VMEM((hg, T_pad, dh), MATMUL_DTYPE),   # head-major V
            pltpu.VMEM((hg, tq, 1), jnp.float32),        # running max
            pltpu.VMEM((hg, tq, 1), jnp.float32),        # running denom
            pltpu.VMEM((hg, tq, dh), jnp.float32),       # running context
        ],
        compiler_params=_compiler_params(("parallel", "parallel", "arbitrary")),
    )(q, k, v)


# ---------------------------------------------------------------------------
# Kernel 4: attention out-proj + residual + LayerNorm + MLP + residual,
#           with the 4C hidden dim tiled on an 'arbitrary' grid axis
# ---------------------------------------------------------------------------
def _attn_out_mlp_kernel(x_ref, a_ref, wo_ref, bo_ref, ln2w_ref, ln2b_ref,
                         w1_ref, b1_ref, w2_ref, b2_ref, o_ref,
                         xres_sc, xn_sc, h2_sc):
    j = pl.program_id(2)

    @pl.when(j == 0)
    def _():
        attn = jnp.dot(a_ref[0], wo_ref[...],
                       preferred_element_type=jnp.float32) + bo_ref[...]
        xr = x_ref[0].astype(jnp.float32) + attn
        xres_sc[...] = xr
        xn_sc[...] = _layernorm(xr, ln2w_ref[...],
                                ln2b_ref[...]).astype(xn_sc.dtype)
        h2_sc[...] = jnp.zeros(h2_sc.shape, jnp.float32)

    h1 = jnp.dot(xn_sc[...], w1_ref[...],
                 preferred_element_type=jnp.float32) + b1_ref[...]
    h1 = _gelu(h1)
    h2_sc[...] += jnp.dot(h1.astype(w2_ref.dtype), w2_ref[...],
                          preferred_element_type=jnp.float32)

    @pl.when(j == pl.num_programs(2) - 1)
    def _():
        o_ref[0] = (xres_sc[...] + h2_sc[...] + b2_ref[...]).astype(o_ref.dtype)


def attn_out_mlp(x, attn_ctx, blk):
    B, T_pad, C = x.shape
    tq = _tile_of(T_pad)
    n_mlp = blk["w1"].shape[-1]
    th = _hidden_tile(n_mlp)
    n_h = n_mlp // th
    return pl.pallas_call(
        _attn_out_mlp_kernel,
        out_shape=jax.ShapeDtypeStruct((B, T_pad, C), x.dtype),
        grid=(T_pad // tq, B, n_h),
        in_specs=[
            pl.BlockSpec((1, tq, C), lambda t, bi, j: (bi, t, 0)),
            pl.BlockSpec((1, tq, C), lambda t, bi, j: (bi, t, 0)),
            pl.BlockSpec((C, C), lambda t, bi, j: (0, 0)),
            pl.BlockSpec((1, C), lambda t, bi, j: (0, 0)),
            pl.BlockSpec((1, C), lambda t, bi, j: (0, 0)),
            pl.BlockSpec((1, C), lambda t, bi, j: (0, 0)),
            pl.BlockSpec((C, th), lambda t, bi, j: (0, j)),
            pl.BlockSpec((1, th), lambda t, bi, j: (0, j)),
            pl.BlockSpec((th, C), lambda t, bi, j: (j, 0)),
            pl.BlockSpec((1, C), lambda t, bi, j: (0, 0)),
        ],
        out_specs=pl.BlockSpec((1, tq, C), lambda t, bi, j: (bi, t, 0)),
        scratch_shapes=[
            pltpu.VMEM((tq, C), jnp.float32),    # residual x + attn out
            pltpu.VMEM((tq, C), MATMUL_DTYPE),   # LN2(x) in matmul dtype
            pltpu.VMEM((tq, C), jnp.float32),    # h2 accumulator
        ],
        compiler_params=_compiler_params(("parallel", "parallel", "arbitrary")),
    )(x, attn_ctx, blk["wo"], blk["bo"], blk["ln2_w"], blk["ln2_b"],
      blk["w1"], blk["b1"], blk["w2"], blk["b2"])


# ---------------------------------------------------------------------------
# Kernel 5: final LayerNorm (ln_post)
# ---------------------------------------------------------------------------
def _layernorm_kernel(x_ref, w_ref, b_ref, o_ref):
    o_ref[0] = _layernorm(x_ref[0], w_ref[...], b_ref[...]).astype(o_ref.dtype)


def layernorm(x, w, b):
    B, T_pad, C = x.shape
    tq = _tile_of(T_pad)
    return pl.pallas_call(
        _layernorm_kernel,
        out_shape=jax.ShapeDtypeStruct((B, T_pad, C), x.dtype),
        grid=(T_pad // tq, B),
        in_specs=[
            pl.BlockSpec((1, tq, C), lambda t, bi: (bi, t, 0)),
            pl.BlockSpec((1, C), lambda t, bi: (0, 0)),
            pl.BlockSpec((1, C), lambda t, bi: (0, 0)),
        ],
        out_specs=pl.BlockSpec((1, tq, C), lambda t, bi: (bi, t, 0)),
        compiler_params=_compiler_params(("parallel", "parallel")),
    )(x, w, b)


# ---------------------------------------------------------------------------
# Full AudioEncoder forward
# ---------------------------------------------------------------------------
def audio_encoder_forward(x_bml, kp, n_head):
    """x_bml: (B, n_mels, L) — same axis convention as the PyTorch module."""
    x = jnp.transpose(x_bml, (0, 2, 1))                          # (B, L, n_mels)
    x, l1 = conv1d_gelu(x, x.shape[1], kp["conv1_w"], kp["conv1_b"],
                        stride=1, out_dtype=MATMUL_DTYPE)        # feeds conv2
    x, t = conv1d_gelu(x, l1, kp["conv2_w"], kp["conv2_b"], stride=2,
                       pos=kp["pos_emb"], out_dtype=jnp.float32)  # f32 residual
    # x: (B, T_pad, C) with t real rows; pad rows are masked in attention and
    # sliced off at the end.
    for blk in kp["blocks"]:
        q, k, v = qkv_projection(x, blk)
        ctx = flash_attention(q, k, v, n_head=n_head, t_actual=t)
        x = attn_out_mlp(x, ctx, blk)
    y = layernorm(x, kp["ln_post_w"], kp["ln_post_b"])
    return y[:, :t, :]


# ---------------------------------------------------------------------------
# parameter prep: torch-layout f32 params -> kernel-ready params
#   (bf16 matmul weights, dh**-0.25 scale folded into W_q / W_k / b_q)
# ---------------------------------------------------------------------------
def prepare_params(params, n_head):
    def bf16(a):
        return jnp.asarray(a, MATMUL_DTYPE)

    kp = dict(
        conv1_w=bf16(params["conv1_w"]),
        conv1_b=params["conv1_b"].reshape(1, -1).astype(jnp.float32),
        conv2_w=bf16(params["conv2_w"]),
        conv2_b=params["conv2_b"].reshape(1, -1).astype(jnp.float32),
        pos_emb=params["pos_emb"].astype(jnp.float32),
        ln_post_w=params["ln_post_w"].astype(jnp.float32),
        ln_post_b=params["ln_post_b"].astype(jnp.float32),
        blocks=[],
    )
    for blk in params["blocks"]:
        C = blk["wq"].shape[0]
        scale = (C // n_head) ** (-0.25)
        kp["blocks"].append(dict(
            ln1_w=blk["ln1_w"].astype(jnp.float32),
            ln1_b=blk["ln1_b"].astype(jnp.float32),
            wq=bf16(blk["wq"] * scale),
            bq=(blk["bq"] * scale).astype(jnp.float32),
            wk=bf16(blk["wk"] * scale),
            wv=bf16(blk["wv"]), bv=blk["bv"].astype(jnp.float32),
            wo=bf16(blk["wo"]), bo=blk["bo"].astype(jnp.float32),
            ln2_w=blk["ln2_w"].astype(jnp.float32),
            ln2_b=blk["ln2_b"].astype(jnp.float32),
            w1=bf16(blk["w1"]), b1=blk["b1"].astype(jnp.float32),
            w2=bf16(blk["w2"]), b2=blk["b2"].astype(jnp.float32),
        ))
    return kp


# ---------------------------------------------------------------------------
# deterministic synthetic parameters
# ---------------------------------------------------------------------------
def sinusoids(length, channels, max_timescale=10000):
    assert channels % 2 == 0
    log_inc = np.log(max_timescale) / (channels // 2 - 1)
    inv = np.exp(-log_inc * np.arange(channels // 2))
    t = np.arange(length)[:, None] * inv[None, :]
    return np.concatenate([np.sin(t), np.cos(t)], axis=1).astype(np.float32)


def init_params(key, n_mels, n_ctx, n_state, n_head, n_layer):
    keys = iter(jax.random.split(key, 16 + 16 * n_layer))

    def nrm(shape, scale=0.05):
        return jax.random.normal(next(keys), shape, jnp.float32) * scale

    params = dict(
        conv1_w=nrm((3, n_mels, n_state)),
        conv1_b=nrm((n_state,)),
        conv2_w=nrm((3, n_state, n_state)),
        conv2_b=nrm((n_state,)),
        pos_emb=jnp.asarray(sinusoids(n_ctx, n_state)),
        ln_post_w=jnp.ones((1, n_state), jnp.float32) + nrm((1, n_state)),
        ln_post_b=nrm((1, n_state)),
        blocks=[],
    )
    for _ in range(n_layer):
        params["blocks"].append(dict(
            ln1_w=jnp.ones((1, n_state), jnp.float32) + nrm((1, n_state)),
            ln1_b=nrm((1, n_state)),
            wq=nrm((n_state, n_state)), bq=nrm((1, n_state)),
            wk=nrm((n_state, n_state)),
            wv=nrm((n_state, n_state)), bv=nrm((1, n_state)),
            wo=nrm((n_state, n_state)), bo=nrm((1, n_state)),
            ln2_w=jnp.ones((1, n_state), jnp.float32) + nrm((1, n_state)),
            ln2_b=nrm((1, n_state)),
            w1=nrm((n_state, 4 * n_state)), b1=nrm((1, 4 * n_state)),
            w2=nrm((4 * n_state, n_state)), b2=nrm((1, n_state)),
        ))
    return params


# ---------------------------------------------------------------------------
# pure-JAX f32 reference (correctness check only)
# ---------------------------------------------------------------------------
def reference_forward(x_bml, params, n_head):
    def gelu(x):
        return 0.5 * x * (1.0 + lax.erf(x / jnp.sqrt(jnp.float32(2.0))))

    def ln(x, w, b):
        mu = jnp.mean(x, -1, keepdims=True)
        var = jnp.mean((x - mu) ** 2, -1, keepdims=True)
        return (x - mu) / jnp.sqrt(var + EPS) * w + b

    x = jnp.transpose(x_bml, (0, 2, 1))
    L = x.shape[1]
    xp = jnp.pad(x, ((0, 0), (1, 1), (0, 0)))
    w = params["conv1_w"]
    x = gelu(sum(xp[:, k:k + L, :] @ w[k] for k in range(3)) + params["conv1_b"])
    T = (L + 2 - 3) // 2 + 1
    xp = jnp.pad(x, ((0, 0), (1, 1), (0, 0)))
    w = params["conv2_w"]
    x = gelu(sum(xp[:, k:k + 2 * (T - 1) + 1:2, :] @ w[k] for k in range(3))
             + params["conv2_b"])
    x = x + params["pos_emb"]

    H = n_head
    for blk in params["blocks"]:
        xn = ln(x, blk["ln1_w"], blk["ln1_b"])
        q = xn @ blk["wq"] + blk["bq"]
        k = xn @ blk["wk"]
        v = xn @ blk["wv"] + blk["bv"]
        B, T_, C = q.shape
        dh = C // H
        scale = dh ** (-0.25)
        qh = q.reshape(B, T_, H, dh).transpose(0, 2, 1, 3) * scale
        kh = k.reshape(B, T_, H, dh).transpose(0, 2, 1, 3) * scale
        vh = v.reshape(B, T_, H, dh).transpose(0, 2, 1, 3)
        s = qh @ kh.transpose(0, 1, 3, 2)
        p = jax.nn.softmax(s, axis=-1)
        o = (p @ vh).transpose(0, 2, 1, 3).reshape(B, T_, C)
        x = x + (o @ blk["wo"] + blk["bo"])
        xn2 = ln(x, blk["ln2_w"], blk["ln2_b"])
        h1 = gelu(xn2 @ blk["w1"] + blk["b1"])
        x = x + (h1 @ blk["w2"] + blk["b2"])
    return ln(x, params["ln_post_w"], params["ln_post_b"])


# ---------------------------------------------------------------------------
if __name__ == "__main__":
    # n_ctx=12 -> padded to 16 in-kernel: also exercises the pad-key masking.
    B, n_mels, n_ctx, n_state, n_head, n_layer = 2, 8, 12, 32, 4, 2
    L = 2 * n_ctx  # stride-2 conv2 halves this to n_ctx

    key = jax.random.PRNGKey(0)
    kx, kp = jax.random.split(key)
    x = jax.random.normal(kx, (B, n_mels, L), jnp.float32)
    params = init_params(kp, n_mels, n_ctx, n_state, n_head, n_layer)
    kparams = prepare_params(params, n_head)

    fwd = jax.jit(partial(audio_encoder_forward, n_head=n_head))
    out = jax.block_until_ready(fwd(x, kparams))
    assert out.shape == (B, n_ctx, n_state), out.shape

    ref = reference_forward(x, params, n_head)
    # bf16 matmul operands / bf16 exp perturb results slightly vs the pure-f32
    # reference; f32 accumulation keeps it well inside 2e-2.
    np.testing.assert_allclose(np.asarray(out), np.asarray(ref),
                               rtol=2e-2, atol=2e-2)
    print("KERNEL_OK")
</pallas_src>

<mosaic_0001>
module attributes {stable_mosaic.version = 11 : i64} {
  func.func @_conv_gelu_kernel(%arg0: i32, %arg1: i32, %arg2: memref<1x3x24x8xbf16, #tpu.memory_space<vmem>>, %arg3: memref<3x8x32xbf16, #tpu.memory_space<vmem>>, %arg4: memref<1x32xf32, #tpu.memory_space<vmem>>, %arg5: memref<1x24x32xbf16, #tpu.memory_space<vmem>>) attributes {dimension_semantics = [#tpu.dimension_semantics<parallel>, #tpu.dimension_semantics<parallel>], iteration_bounds = array<i64: 1, 2>, scalar_prefetch = 0 : i64, scratch_operands = 0 : i64, tpu.core_type = #tpu.core_type<tc>, window_params = [{transform_indices = @transform_0, window_bounds = array<i64: 1, 3, 24, 8>}, {pipeline_mode = #tpu.pipeline_mode<synchronous>, transform_indices = @transform_1, window_bounds = array<i64: 3, 8, 32>}, {pipeline_mode = #tpu.pipeline_mode<synchronous>, transform_indices = @transform_2, window_bounds = array<i64: 1, 32>}, {transform_indices = @transform_3, window_bounds = array<i64: 1, 24, 32>}]} {
    %c0 = arith.constant 0 : index
    %c0_0 = arith.constant 0 : index
    %c0_1 = arith.constant 0 : index
    %c0_2 = arith.constant 0 : index
    %0 = vector.load %arg2[%c0, %c0_0, %c0_1, %c0_2] : memref<1x3x24x8xbf16, #tpu.memory_space<vmem>>, vector<1x1x24x8xbf16>
    %1 = vector.shape_cast %0 : vector<1x1x24x8xbf16> to vector<24x8xbf16>
    %c0_3 = arith.constant 0 : index
    %c0_4 = arith.constant 0 : index
    %c0_5 = arith.constant 0 : index
    %2 = vector.load %arg3[%c0_3, %c0_4, %c0_5] : memref<3x8x32xbf16, #tpu.memory_space<vmem>>, vector<1x8x32xbf16>
    %3 = vector.shape_cast %2 : vector<1x8x32xbf16> to vector<8x32xbf16>
    %cst = arith.constant dense<0.000000e+00> : vector<24x32xf32>
    %4 = tpu.matmul %1, %3, %cst {dimension_numbers = #tpu.dot_dimension_numbers<[1], [0], [0], [1], [0, 0, 1, 1], [], []>} : vector<24x8xbf16>, vector<8x32xbf16>, vector<24x32xf32> -> vector<24x32xf32>
    %c0_6 = arith.constant 0 : index
    %c1 = arith.constant 1 : index
    %c0_7 = arith.constant 0 : index
    %c0_8 = arith.constant 0 : index
    %5 = vector.load %arg2[%c0_6, %c1, %c0_7, %c0_8] : memref<1x3x24x8xbf16, #tpu.memory_space<vmem>>, vector<1x1x24x8xbf16>
    %6 = vector.shape_cast %5 : vector<1x1x24x8xbf16> to vector<24x8xbf16>
    %c1_9 = arith.constant 1 : index
    %c0_10 = arith.constant 0 : index
    %c0_11 = arith.constant 0 : index
    %7 = vector.load %arg3[%c1_9, %c0_10, %c0_11] : memref<3x8x32xbf16, #tpu.memory_space<vmem>>, vector<1x8x32xbf16>
    %8 = vector.shape_cast %7 : vector<1x8x32xbf16> to vector<8x32xbf16>
    %cst_12 = arith.constant dense<0.000000e+00> : vector<24x32xf32>
    %9 = tpu.matmul %6, %8, %cst_12 {dimension_numbers = #tpu.dot_dimension_numbers<[1], [0], [0], [1], [0, 0, 1, 1], [], []>} : vector<24x8xbf16>, vector<8x32xbf16>, vector<24x32xf32> -> vector<24x32xf32>
    %10 = arith.addf %4, %9 : vector<24x32xf32>
    %c0_13 = arith.constant 0 : index
    %c2 = arith.constant 2 : index
    %c0_14 = arith.constant 0 : index
    %c0_15 = arith.constant 0 : index
    %11 = vector.load %arg2[%c0_13, %c2, %c0_14, %c0_15] : memref<1x3x24x8xbf16, #tpu.memory_space<vmem>>, vector<1x1x24x8xbf16>
    %12 = vector.shape_cast %11 : vector<1x1x24x8xbf16> to vector<24x8xbf16>
    %c2_16 = arith.constant 2 : index
    %c0_17 = arith.constant 0 : index
    %c0_18 = arith.constant 0 : index
    %13 = vector.load %arg3[%c2_16, %c0_17, %c0_18] : memref<3x8x32xbf16, #tpu.memory_space<vmem>>, vector<1x8x32xbf16>
    %14 = vector.shape_cast %13 : vector<1x8x32xbf16> to vector<8x32xbf16>
    %cst_19 = arith.constant dense<0.000000e+00> : vector<24x32xf32>
    %15 = tpu.matmul %12, %14, %cst_19 {dimension_numbers = #tpu.dot_dimension_numbers<[1], [0], [0], [1], [0, 0, 1, 1], [], []>} : vector<24x8xbf16>, vector<8x32xbf16>, vector<24x32xf32> -> vector<24x32xf32>
    %16 = arith.addf %10, %15 : vector<24x32xf32>
    %c0_20 = arith.constant 0 : index
    %c0_21 = arith.constant 0 : index
    %17 = vector.load %arg4[%c0_20, %c0_21] : memref<1x32xf32, #tpu.memory_space<vmem>>, vector<1x32xf32>
    %18 = vector.broadcast %17 : vector<1x32xf32> to vector<24x32xf32>
    %19 = arith.addf %16, %18 : vector<24x32xf32>
    %cst_22 = arith.constant 5.000000e-01 : f32
    %20 = vector.broadcast %cst_22 : f32 to vector<24x32xf32>
    %21 = arith.mulf %20, %19 : vector<24x32xf32>
    %cst_23 = arith.constant 2.000000e+00 : f32
    %22 = math.sqrt %cst_23 : f32
    %23 = vector.broadcast %22 : f32 to vector<24x32xf32>
    %24 = arith.divf %19, %23 : vector<24x32xf32>
    %25 = math.erf %24 : vector<24x32xf32>
    %cst_24 = arith.constant 1.000000e+00 : f32
    %26 = vector.broadcast %cst_24 : f32 to vector<24x32xf32>
    %27 = arith.addf %26, %25 : vector<24x32xf32>
    %28 = arith.mulf %21, %27 : vector<24x32xf32>
    %29 = arith.truncf %28 : vector<24x32xf32> to vector<24x32xbf16>
    %c0_25 = arith.constant 0 : index
    %c0_26 = arith.constant 0 : index
    %c0_27 = arith.constant 0 : index
    %30 = vector.load %arg5[%c0_25, %c0_26, %c0_27] : memref<1x24x32xbf16, #tpu.memory_space<vmem>>, vector<1x24x32xbf16>
    %31 = vector.shape_cast %30 : vector<1x24x32xbf16> to vector<24x32xbf16>
    %32 = vector.shape_cast %29 : vector<24x32xbf16> to vector<1x24x32xbf16>
    tpu.vector_store %arg5[%c0_25, %c0_26, %c0_27], %32 {strides = array<i32>} : memref<1x24x32xbf16, #tpu.memory_space<vmem>>, vector<1x24x32xbf16>,
    return
  }
  func.func @transform_0(%arg0: i32, %arg1: i32) -> (i32, i32, i32, i32) {
    %c0_i32 = arith.constant 0 : i32
    %c0_i32_0 = arith.constant 0 : i32
    %c0_i32_1 = arith.constant 0 : i32
    return %arg1, %c0_i32, %arg0, %c0_i32_0 : i32, i32, i32, i32
  }
  func.func @transform_1(%arg0: i32, %arg1: i32) -> (i32, i32, i32) {
    %c0_i32 = arith.constant 0 : i32
    %c0_i32_0 = arith.constant 0 : i32
    %c0_i32_1 = arith.constant 0 : i32
    %c0_i32_2 = arith.constant 0 : i32
    return %c0_i32, %c0_i32_0, %c0_i32_1 : i32, i32, i32
  }
  func.func @transform_2(%arg0: i32, %arg1: i32) -> (i32, i32) {
    %c0_i32 = arith.constant 0 : i32
    %c0_i32_0 = arith.constant 0 : i32
    %c0_i32_1 = arith.constant 0 : i32
    return %c0_i32, %c0_i32_0 : i32, i32
  }
  func.func @transform_3(%arg0: i32, %arg1: i32) -> (i32, i32, i32) {
    %c0_i32 = arith.constant 0 : i32
    %c0_i32_0 = arith.constant 0 : i32
    return %arg1, %arg0, %c0_i32 : i32, i32, i32
  }
}

module attributes {stable_mosaic.version = 11 : i64} {
  func.func @_qkv_proj_kernel(%arg0: i32, %arg1: i32, %arg2: memref<1x16x32xf32, #tpu.memory_space<vmem>>, %arg3: memref<1x32xf32, #tpu.memory_space<vmem>>, %arg4: memref<1x32xf32, #tpu.memory_space<vmem>>, %arg5: memref<32x32xbf16, #tpu.memory_space<vmem>>, %arg6: memref<1x32xf32, #tpu.memory_space<vmem>>, %arg7: memref<32x32xbf16, #tpu.memory_space<vmem>>, %arg8: memref<32x32xbf16, #tpu.memory_space<vmem>>, %arg9: memref<1x32xf32, #tpu.memory_space<vmem>>, %arg10: memref<1x16x32xbf16, #tpu.memory_space<vmem>>, %arg11: memref<1x16x32xbf16, #tpu.memory_space<vmem>>, %arg12: memref<1x16x32xbf16, #tpu.memory_space<vmem>>) attributes {dimension_semantics = [#tpu.dimension_semantics<parallel>, #tpu.dimension_semantics<parallel>], iteration_bounds = array<i64: 1, 2>, scalar_prefetch = 0 : i64, scratch_operands = 0 : i64, tpu.core_type = #tpu.core_type<tc>, window_params = [{transform_indices = @transform_0, window_bounds = array<i64: 1, 16, 32>}, {pipeline_mode = #tpu.pipeline_mode<synchronous>, transform_indices = @transform_1, window_bounds = array<i64: 1, 32>}, {pipeline_mode = #tpu.pipeline_mode<synchronous>, transform_indices = @transform_2, window_bounds = array<i64: 1, 32>}, {pipeline_mode = #tpu.pipeline_mode<synchronous>, transform_indices = @transform_3, window_bounds = array<i64: 32, 32>}, {pipeline_mode = #tpu.pipeline_mode<synchronous>, transform_indices = @transform_4, window_bounds = array<i64: 1, 32>}, {pipeline_mode = #tpu.pipeline_mode<synchronous>, transform_indices = @transform_5, window_bounds = array<i64: 32, 32>}, {pipeline_mode = #tpu.pipeline_mode<synchronous>, transform_indices = @transform_6, window_bounds = array<i64: 32, 32>}, {pipeline_mode = #tpu.pipeline_mode<synchronous>, transform_indices = @transform_7, window_bounds = array<i64: 1, 32>}, {transform_indices = @transform_8, window_bounds = array<i64: 1, 16, 32>}, {transform_indices = @transform_9, window_bounds = array<i64: 1, 16, 32>}, {transform_indices = @transform_10, window_bounds = array<i64: 1, 16, 32>}]} {
    %c0 = arith.constant 0 : index
    %c0_0 = arith.constant 0 : index
    %c0_1 = arith.constant 0 : index
    %0 = vector.load %arg2[%c0, %c0_0, %c0_1] : memref<1x16x32xf32, #tpu.memory_space<vmem>>, vector<1x16x32xf32>
    %1 = vector.shape_cast %0 : vector<1x16x32xf32> to vector<16x32xf32>
    %c0_2 = arith.constant 0 : index
    %c0_3 = arith.constant 0 : index
    %2 = vector.load %arg3[%c0_2, %c0_3] : memref<1x32xf32, #tpu.memory_space<vmem>>, vector<1x32xf32>
    %c0_4 = arith.constant 0 : index
    %c0_5 = arith.constant 0 : index
    %3 = vector.load %arg4[%c0_4, %c0_5] : memref<1x32xf32, #tpu.memory_space<vmem>>, vector<1x32xf32>
    %cst = arith.constant dense<0.000000e+00> : vector<16xf32>
    %4 = vector.multi_reduction <add>, %1, %cst [1] : vector<16x32xf32> to vector<16xf32>
    %5 = vector.shape_cast %4 : vector<16xf32> to vector<16x1xf32>
    %cst_6 = arith.constant 3.200000e+01 : f32
    %6 = vector.broadcast %cst_6 : f32 to vector<16x1xf32>
    %7 = arith.divf %5, %6 : vector<16x1xf32>
    %8 = vector.broadcast %7 : vector<16x1xf32> to vector<16x32xf32>
    %9 = arith.subf %1, %8 : vector<16x32xf32>
    %10 = arith.mulf %9, %9 : vector<16x32xf32>
    %cst_7 = arith.constant dense<0.000000e+00> : vector<16xf32>
    %11 = vector.multi_reduction <add>, %10, %cst_7 [1] : vector<16x32xf32> to vector<16xf32>
    %12 = vector.shape_cast %11 : vector<16xf32> to vector<16x1xf32>
    %cst_8 = arith.constant 3.200000e+01 : f32
    %13 = vector.broadcast %cst_8 : f32 to vector<16x1xf32>
    %14 = arith.divf %12, %13 : vector<16x1xf32>
    %15 = vector.broadcast %7 : vector<16x1xf32> to vector<16x32xf32>
    %16 = arith.subf %1, %15 : vector<16x32xf32>
    %cst_9 = arith.constant 9.99999974E-6 : f32
    %17 = vector.broadcast %cst_9 : f32 to vector<16x1xf32>
    %18 = arith.addf %14, %17 : vector<16x1xf32>
    %19 = math.rsqrt %18 : vector<16x1xf32>
    %20 = vector.broadcast %19 : vector<16x1xf32> to vector<16x32xf32>
    %21 = arith.mulf %16, %20 : vector<16x32xf32>
    %22 = vector.broadcast %2 : vector<1x32xf32> to vector<16x32xf32>
    %23 = arith.mulf %21, %22 : vector<16x32xf32>
    %24 = vector.broadcast %3 : vector<1x32xf32> to vector<16x32xf32>
    %25 = arith.addf %23, %24 : vector<16x32xf32>
    %26 = arith.truncf %25 : vector<16x32xf32> to vector<16x32xbf16>
    %c0_10 = arith.constant 0 : index
    %c0_11 = arith.constant 0 : index
    %27 = vector.load %arg5[%c0_10, %c0_11] : memref<32x32xbf16, #tpu.memory_space<vmem>>, vector<32x32xbf16>
    %cst_12 = arith.constant dense<0.000000e+00> : vector<16x32xf32>
    %28 = tpu.matmul %26, %27, %cst_12 {dimension_numbers = #tpu.dot_dimension_numbers<[1], [0], [0], [1], [0, 0, 1, 1], [], []>} : vector<16x32xbf16>, vector<32x32xbf16>, vector<16x32xf32> -> vector<16x32xf32>
    %c0_13 = arith.constant 0 : index
    %c0_14 = arith.constant 0 : index
    %29 = vector.load %arg6[%c0_13, %c0_14] : memref<1x32xf32, #tpu.memory_space<vmem>>, vector<1x32xf32>
    %30 = vector.broadcast %29 : vector<1x32xf32> to vector<16x32xf32>
    %31 = arith.addf %28, %30 : vector<16x32xf32>
    %32 = arith.truncf %31 : vector<16x32xf32> to vector<16x32xbf16>
    %c0_15 = arith.constant 0 : index
    %c0_16 = arith.constant 0 : index
    %c0_17 = arith.constant 0 : index
    %33 = vector.load %arg10[%c0_15, %c0_16, %c0_17] : memref<1x16x32xbf16, #tpu.memory_space<vmem>>, vector<1x16x32xbf16>
    %34 = vector.shape_cast %33 : vector<1x16x32xbf16> to vector<16x32xbf16>
    %35 = vector.shape_cast %32 : vector<16x32xbf16> to vector<1x16x32xbf16>
    tpu.vector_store %arg10[%c0_15, %c0_16, %c0_17], %35 {strides = array<i32>} : memref<1x16x32xbf16, #tpu.memory_space<vmem>>, vector<1x16x32xbf16>,
    %c0_18 = arith.constant 0 : index
    %c0_19 = arith.constant 0 : index
    %36 = vector.load %arg7[%c0_18, %c0_19] : memref<32x32xbf16, #tpu.memory_space<vmem>>, vector<32x32xbf16>
    %cst_20 = arith.constant dense<0.000000e+00> : vector<16x32xf32>
    %37 = tpu.matmul %26, %36, %cst_20 {dimension_numbers = #tpu.dot_dimension_numbers<[1], [0], [0], [1], [0, 0, 1, 1], [], []>} : vector<16x32xbf16>, vector<32x32xbf16>, vector<16x32xf32> -> vector<16x32xf32>
    %38 = arith.truncf %37 : vector<16x32xf32> to vector<16x32xbf16>
    %c0_21 = arith.constant 0 : index
    %c0_22 = arith.constant 0 : index
    %c0_23 = arith.constant 0 : index
    %39 = vector.load %arg11[%c0_21, %c0_22, %c0_23] : memref<1x16x32xbf16, #tpu.memory_space<vmem>>, vector<1x16x32xbf16>
    %40 = vector.shape_cast %39 : vector<1x16x32xbf16> to vector<16x32xbf16>
    %41 = vector.shape_cast %38 : vector<16x32xbf16> to vector<1x16x32xbf16>
    tpu.vector_store %arg11[%c0_21, %c0_22, %c0_23], %41 {strides = array<i32>} : memref<1x16x32xbf16, #tpu.memory_space<vmem>>, vector<1x16x32xbf16>,
    %c0_24 = arith.constant 0 : index
    %c0_25 = arith.constant 0 : index
    %42 = vector.load %arg8[%c0_24, %c0_25] : memref<32x32xbf16, #tpu.memory_space<vmem>>, vector<32x32xbf16>
    %cst_26 = arith.constant dense<0.000000e+00> : vector<16x32xf32>
    %43 = tpu.matmul %26, %42, %cst_26 {dimension_numbers = #tpu.dot_dimension_numbers<[1], [0], [0], [1], [0, 0, 1, 1], [], []>} : vector<16x32xbf16>, vector<32x32xbf16>, vector<16x32xf32> -> vector<16x32xf32>
    %c0_27 = arith.constant 0 : index
    %c0_28 = arith.constant 0 : index
    %44 = vector.load %arg9[%c0_27, %c0_28] : memref<1x32xf32, #tpu.memory_space<vmem>>, vector<1x32xf32>
    %45 = vector.broadcast %44 : vector<1x32xf32> to vector<16x32xf32>
    %46 = arith.addf %43, %45 : vector<16x32xf32>
    %47 = arith.truncf %46 : vector<16x32xf32> to vector<16x32xbf16>
    %c0_29 = arith.constant 0 : index
    %c0_30 = arith.constant 0 : index
    %c0_31 = arith.constant 0 : index
    %48 = vector.load %arg12[%c0_29, %c0_30, %c0_31] : memref<1x16x32xbf16, #tpu.memory_space<vmem>>, vector<1x16x32xbf16>
    %49 = vector.shape_cast %48 : vector<1x16x32xbf16> to vector<16x32xbf16>
    %50 = vector.shape_cast %47 : vector<16x32xbf16> to vector<1x16x32xbf16>
    tpu.vector_store %arg12[%c0_29, %c0_30, %c0_31], %50 {strides = array<i32>} : memref<1x16x32xbf16, #tpu.memory_space<vmem>>, vector<1x16x32xbf16>,
    return
  }
  func.func @transform_0(%arg0: i32, %arg1: i32) -> (i32, i32, i32) {
    %c0_i32 = arith.constant 0 : i32
    %c0_i32_0 = arith.constant 0 : i32
    return %arg1, %arg0, %c0_i32 : i32, i32, i32
  }
  func.func @transform_1(%arg0: i32, %arg1: i32) -> (i32, i32) {
    %c0_i32 = arith.constant 0 : i32
    %c0_i32_0 = arith.constant 0 : i32
    %c0_i32_1 = arith.constant 0 : i32
    return %c0_i32, %c0_i32_0 : i32, i32
  }
  func.func @transform_2(%arg0: i32, %arg1: i32) -> (i32, i32) {
    %c0_i32 = arith.constant 0 : i32
    %c0_i32_0 = arith.constant 0 : i32
    %c0_i32_1 = arith.constant 0 : i32
    return %c0_i32, %c0_i32_0 : i32, i32
  }
  func.func @transform_3(%arg0: i32, %arg1: i32) -> (i32, i32) {
    %c0_i32 = arith.constant 0 : i32
    %c0_i32_0 = arith.constant 0 : i32
    %c0_i32_1 = arith.constant 0 : i32
    return %c0_i32, %c0_i32_0 : i32, i32
  }
  func.func @transform_4(%arg0: i32, %arg1: i32) -> (i32, i32) {
    %c0_i32 = arith.constant 0 : i32
    %c0_i32_0 = arith.constant 0 : i32
    %c0_i32_1 = arith.constant 0 : i32
    return %c0_i32, %c0_i32_0 : i32, i32
  }
  func.func @transform_5(%arg0: i32, %arg1: i32) -> (i32, i32) {
    %c0_i32 = arith.constant 0 : i32
    %c0_i32_0 = arith.constant 0 : i32
    %c0_i32_1 = arith.constant 0 : i32
    return %c0_i32, %c0_i32_0 : i32, i32
  }
  func.func @transform_6(%arg0: i32, %arg1: i32) -> (i32, i32) {
    %c0_i32 = arith.constant 0 : i32
    %c0_i32_0 = arith.constant 0 : i32
    %c0_i32_1 = arith.constant 0 : i32
    return %c0_i32, %c0_i32_0 : i32, i32
  }
  func.func @transform_7(%arg0: i32, %arg1: i32) -> (i32, i32) {
    %c0_i32 = arith.constant 0 : i32
    %c0_i32_0 = arith.constant 0 : i32
    %c0_i32_1 = arith.constant 0 : i32
    return %c0_i32, %c0_i32_0 : i32, i32
  }
  func.func @transform_8(%arg0: i32, %arg1: i32) -> (i32, i32, i32) {
    %c0_i32 = arith.constant 0 : i32
    %c0_i32_0 = arith.constant 0 : i32
    return %arg1, %arg0, %c0_i32 : i32, i32, i32
  }
  func.func @transform_9(%arg0: i32, %arg1: i32) -> (i32, i32, i32) {
    %c0_i32 = arith.constant 0 : i32
    %c0_i32_0 = arith.constant 0 : i32
    return %arg1, %arg0, %c0_i32 : i32, i32, i32
  }
  func.func @transform_10(%arg0: i32, %arg1: i32) -> (i32, i32, i32) {
    %c0_i32 = arith.constant 0 : i32
    %c0_i32_0 = arith.constant 0 : i32
    return %arg1, %arg0, %c0_i32 : i32, i32, i32
  }
}

module attributes {stable_mosaic.version = 11 : i64} {
  func.func @_flash_attn_kernel(%arg0: i32, %arg1: i32, %arg2: i32, %arg3: memref<1x16x32xbf16, #tpu.memory_space<vmem>>, %arg4: memref<1x16x32xbf16, #tpu.memory_space<vmem>>, %arg5: memref<1x16x32xbf16, #tpu.memory_space<vmem>>, %arg6: memref<1x16x32xbf16, #tpu.memory_space<vmem>>, %arg7: memref<4x16x8xbf16, #tpu.memory_space<vmem>>, %arg8: memref<4x16x8xbf16, #tpu.memory_space<vmem>>, %arg9: memref<4x16x1xf32, #tpu.memory_space<vmem>>, %arg10: memref<4x16x1xf32, #tpu.memory_space<vmem>>, %arg11: memref<4x16x8xf32, #tpu.memory_space<vmem>>) attributes {dimension_semantics = [#tpu.dimension_semantics<parallel>, #tpu.dimension_semantics<parallel>, #tpu.dimension_semantics<arbitrary>], iteration_bounds = array<i64: 2, 1, 1>, scalar_prefetch = 0 : i64, scratch_operands = 5 : i64, tpu.core_type = #tpu.core_type<tc>, window_params = [{transform_indices = @transform_0, window_bounds = array<i64: 1, 16, 32>}, {transform_indices = @transform_1, window_bounds = array<i64: 1, 16, 32>}, {transform_indices = @transform_2, window_bounds = array<i64: 1, 16, 32>}, {transform_indices = @transform_3, window_bounds = array<i64: 1, 16, 32>}]} {
    %c0_i32 = arith.constant 0 : i32
    %0 = arith.cmpi eq, %arg2, %c0_i32 : i32
    %1 = arith.extui %0 : i1 to i32
    %c0_i32_0 = arith.constant 0 : i32
    %2 = arith.cmpi ne, %1, %c0_i32_0 : i32
    scf.if %2 {
      %c0_54 = arith.constant 0 : index
      %c0_55 = arith.constant 0 : index
      %c0_56 = arith.constant 0 : index
      %77 = vector.load %arg4[%c0_54, %c0_55, %c0_56] : memref<1x16x32xbf16, #tpu.memory_space<vmem>>, vector<1x16x8xbf16>
      %78 = vector.shape_cast %77 : vector<1x16x8xbf16> to vector<16x8xbf16>
      %c0_57 = arith.constant 0 : index
      %c0_58 = arith.constant 0 : index
      %c0_59 = arith.constant 0 : index
      %79 = vector.load %arg7[%c0_57, %c0_58, %c0_59] : memref<4x16x8xbf16, #tpu.memory_space<vmem>>, vector<1x16x8xbf16>
      %80 = vector.shape_cast %79 : vector<1x16x8xbf16> to vector<16x8xbf16>
      %81 = vector.shape_cast %78 : vector<16x8xbf16> to vector<1x16x8xbf16>
      tpu.vector_store %arg7[%c0_57, %c0_58, %c0_59], %81 {strides = array<i32>} : memref<4x16x8xbf16, #tpu.memory_space<vmem>>, vector<1x16x8xbf16>,
      %c0_60 = arith.constant 0 : index
      %c0_61 = arith.constant 0 : index
      %c0_62 = arith.constant 0 : index
      %82 = vector.load %arg5[%c0_60, %c0_61, %c0_62] : memref<1x16x32xbf16, #tpu.memory_space<vmem>>, vector<1x16x8xbf16>
      %83 = vector.shape_cast %82 : vector<1x16x8xbf16> to vector<16x8xbf16>
      %c0_63 = arith.constant 0 : index
      %c0_64 = arith.constant 0 : index
      %c0_65 = arith.constant 0 : index
      %84 = vector.load %arg8[%c0_63, %c0_64, %c0_65] : memref<4x16x8xbf16, #tpu.memory_space<vmem>>, vector<1x16x8xbf16>
      %85 = vector.shape_cast %84 : vector<1x16x8xbf16> to vector<16x8xbf16>
      %86 = vector.shape_cast %83 : vector<16x8xbf16> to vector<1x16x8xbf16>
      tpu.vector_store %arg8[%c0_63, %c0_64, %c0_65], %86 {strides = array<i32>} : memref<4x16x8xbf16, #tpu.memory_space<vmem>>, vector<1x16x8xbf16>,
      %c0_66 = arith.constant 0 : index
      %c0_67 = arith.constant 0 : index
      %c8 = arith.constant 8 : index
      %87 = vector.load %arg4[%c0_66, %c0_67, %c8] : memref<1x16x32xbf16, #tpu.memory_space<vmem>>, vector<1x16x8xbf16>
      %88 = vector.shape_cast %87 : vector<1x16x8xbf16> to vector<16x8xbf16>
      %c1 = arith.constant 1 : index
      %c0_68 = arith.constant 0 : index
      %c0_69 = arith.constant 0 : index
      %89 = vector.load %arg7[%c1, %c0_68, %c0_69] : memref<4x16x8xbf16, #tpu.memory_space<vmem>>, vector<1x16x8xbf16>
      %90 = vector.shape_cast %89 : vector<1x16x8xbf16> to vector<16x8xbf16>
      %91 = vector.shape_cast %88 : vector<16x8xbf16> to vector<1x16x8xbf16>
      tpu.vector_store %arg7[%c1, %c0_68, %c0_69], %91 {strides = array<i32>} : memref<4x16x8xbf16, #tpu.memory_space<vmem>>, vector<1x16x8xbf16>,
      %c0_70 = arith.constant 0 : index
      %c0_71 = arith.constant 0 : index
      %c8_72 = arith.constant 8 : index
      %92 = vector.load %arg5[%c0_70, %c0_71, %c8_72] : memref<1x16x32xbf16, #tpu.memory_space<vmem>>, vector<1x16x8xbf16>
      %93 = vector.shape_cast %92 : vector<1x16x8xbf16> to vector<16x8xbf16>
      %c1_73 = arith.constant 1 : index
      %c0_74 = arith.constant 0 : index
      %c0_75 = arith.constant 0 : index
      %94 = vector.load %arg8[%c1_73, %c0_74, %c0_75] : memref<4x16x8xbf16, #tpu.memory_space<vmem>>, vector<1x16x8xbf16>
      %95 = vector.shape_cast %94 : vector<1x16x8xbf16> to vector<16x8xbf16>
      %96 = vector.shape_cast %93 : vector<16x8xbf16> to vector<1x16x8xbf16>
      tpu.vector_store %arg8[%c1_73, %c0_74, %c0_75], %96 {strides = array<i32>} : memref<4x16x8xbf16, #tpu.memory_space<vmem>>, vector<1x16x8xbf16>,
      %c0_76 = arith.constant 0 : index
      %c0_77 = arith.constant 0 : index
      %c16 = arith.constant 16 : index
      %97 = vector.load %arg4[%c0_76, %c0_77, %c16] : memref<1x16x32xbf16, #tpu.memory_space<vmem>>, vector<1x16x8xbf16>
      %98 = vector.shape_cast %97 : vector<1x16x8xbf16> to vector<16x8xbf16>
      %c2 = arith.constant 2 : index
      %c0_78 = arith.constant 0 : index
      %c0_79 = arith.constant 0 : index
      %99 = vector.load %arg7[%c2, %c0_78, %c0_79] : memref<4x16x8xbf16, #tpu.memory_space<vmem>>, vector<1x16x8xbf16>
      %100 = vector.shape_cast %99 : vector<1x16x8xbf16> to vector<16x8xbf16>
      %101 = vector.shape_cast %98 : vector<16x8xbf16> to vector<1x16x8xbf16>
      tpu.vector_store %arg7[%c2, %c0_78, %c0_79], %101 {strides = array<i32>} : memref<4x16x8xbf16, #tpu.memory_space<vmem>>, vector<1x16x8xbf16>,
      %c0_80 = arith.constant 0 : index
      %c0_81 = arith.constant 0 : index
      %c16_82 = arith.constant 16 : index
      %102 = vector.load %arg5[%c0_80, %c0_81, %c16_82] : memref<1x16x32xbf16, #tpu.memory_space<vmem>>, vector<1x16x8xbf16>
      %103 = vector.shape_cast %102 : vector<1x16x8xbf16> to vector<16x8xbf16>
      %c2_83 = arith.constant 2 : index
      %c0_84 = arith.constant 0 : index
      %c0_85 = arith.constant 0 : index
      %104 = vector.load %arg8[%c2_83, %c0_84, %c0_85] : memref<4x16x8xbf16, #tpu.memory_space<vmem>>, vector<1x16x8xbf16>
      %105 = vector.shape_cast %104 : vector<1x16x8xbf16> to vector<16x8xbf16>
      %106 = vector.shape_cast %103 : vector<16x8xbf16> to vector<1x16x8xbf16>
      tpu.vector_store %arg8[%c2_83, %c0_84, %c0_85], %106 {strides = array<i32>} : memref<4x16x8xbf16, #tpu.memory_space<vmem>>, vector<1x16x8xbf16>,
      %c0_86 = arith.constant 0 : index
      %c0_87 = arith.constant 0 : index
      %c24 = arith.constant 24 : index
      %107 = vector.load %arg4[%c0_86, %c0_87, %c24] : memref<1x16x32xbf16, #tpu.memory_space<vmem>>, vector<1x16x8xbf16>
      %108 = vector.shape_cast %107 : vector<1x16x8xbf16> to vector<16x8xbf16>
      %c3 = arith.constant 3 : index
      %c0_88 = arith.constant 0 : index
      %c0_89 = arith.constant 0 : index
      %109 = vector.load %arg7[%c3, %c0_88, %c0_89] : memref<4x16x8xbf16, #tpu.memory_space<vmem>>, vector<1x16x8xbf16>
      %110 = vector.shape_cast %109 : vector<1x16x8xbf16> to vector<16x8xbf16>
      %111 = vector.shape_cast %108 : vector<16x8xbf16> to vector<1x16x8xbf16>
      tpu.vector_store %arg7[%c3, %c0_88, %c0_89], %111 {strides = array<i32>} : memref<4x16x8xbf16, #tpu.memory_space<vmem>>, vector<1x16x8xbf16>,
      %c0_90 = arith.constant 0 : index
      %c0_91 = arith.constant 0 : index
      %c24_92 = arith.constant 24 : index
      %112 = vector.load %arg5[%c0_90, %c0_91, %c24_92] : memref<1x16x32xbf16, #tpu.memory_space<vmem>>, vector<1x16x8xbf16>
      %113 = vector.shape_cast %112 : vector<1x16x8xbf16> to vector<16x8xbf16>
      %c3_93 = arith.constant 3 : index
      %c0_94 = arith.constant 0 : index
      %c0_95 = arith.constant 0 : index
      %114 = vector.load %arg8[%c3_93, %c0_94, %c0_95] : memref<4x16x8xbf16, #tpu.memory_space<vmem>>, vector<1x16x8xbf16>
      %115 = vector.shape_cast %114 : vector<1x16x8xbf16> to vector<16x8xbf16>
      %116 = vector.shape_cast %113 : vector<16x8xbf16> to vector<1x16x8xbf16>
      tpu.vector_store %arg8[%c3_93, %c0_94, %c0_95], %116 {strides = array<i32>} : memref<4x16x8xbf16, #tpu.memory_space<vmem>>, vector<1x16x8xbf16>,
    } else {
    }
    %c0 = arith.constant 0 : index
    %c0_1 = arith.constant 0 : index
    %c0_2 = arith.constant 0 : index
    %3 = vector.load %arg3[%c0, %c0_1, %c0_2] : memref<1x16x32xbf16, #tpu.memory_space<vmem>>, vector<1x16x32xbf16>
    %4 = vector.shape_cast %3 : vector<1x16x32xbf16> to vector<16x32xbf16>
    %5 = vector.extract_strided_slice %4 {offsets = [0, 0], sizes = [16, 8], strides = [1, 1]} : vector<16x32xbf16> to vector<16x8xbf16>
    %6 = vector.extract_strided_slice %4 {offsets = [0, 8], sizes = [16, 8], strides = [1, 1]} : vector<16x32xbf16> to vector<16x8xbf16>
    %7 = vector.extract_strided_slice %4 {offsets = [0, 16], sizes = [16, 8], strides = [1, 1]} : vector<16x32xbf16> to vector<16x8xbf16>
    %8 = vector.extract_strided_slice %4 {offsets = [0, 24], sizes = [16, 8], strides = [1, 1]} : vector<16x32xbf16> to vector<16x8xbf16>
    %9 = vector.shape_cast %5 : vector<16x8xbf16> to vector<1x16x8xbf16>
    %10 = vector.shape_cast %6 : vector<16x8xbf16> to vector<1x16x8xbf16>
    %11 = vector.shape_cast %7 : vector<16x8xbf16> to vector<1x16x8xbf16>
    %12 = vector.shape_cast %8 : vector<16x8xbf16> to vector<1x16x8xbf16>
    %13 = tpu.concatenate %9, %10, %11, %12 in 0 : vector<1x16x8xbf16>, vector<1x16x8xbf16>, vector<1x16x8xbf16>, vector<1x16x8xbf16> -> vector<4x16x8xbf16>
    %cst = arith.constant 0xFF800000 : f32
    %14 = vector.broadcast %cst : f32 to vector<4x16x1xf32>
    %c0_3 = arith.constant 0 : index
    %c0_4 = arith.constant 0 : index
    %c0_5 = arith.constant 0 : index
    %15 = vector.load %arg9[%c0_3, %c0_4, %c0_5] : memref<4x16x1xf32, #tpu.memory_space<vmem>>, vector<4x16x1xf32>
    tpu.vector_store %arg9[%c0_3, %c0_4, %c0_5], %14 {strides = array<i32>} : memref<4x16x1xf32, #tpu.memory_space<vmem>>, vector<4x16x1xf32>,
    %cst_6 = arith.constant 0.000000e+00 : f32
    %16 = vector.broadcast %cst_6 : f32 to vector<4x16x1xf32>
    %c0_7 = arith.constant 0 : index
    %c0_8 = arith.constant 0 : index
    %c0_9 = arith.constant 0 : index
    %17 = vector.load %arg10[%c0_7, %c0_8, %c0_9] : memref<4x16x1xf32, #tpu.memory_space<vmem>>, vector<4x16x1xf32>
    tpu.vector_store %arg10[%c0_7, %c0_8, %c0_9], %16 {strides = array<i32>} : memref<4x16x1xf32, #tpu.memory_space<vmem>>, vector<4x16x1xf32>,
    %cst_10 = arith.constant 0.000000e+00 : f32
    %18 = vector.broadcast %cst_10 : f32 to vector<4x16x8xf32>
    %c0_11 = arith.constant 0 : index
    %c0_12 = arith.constant 0 : index
    %c0_13 = arith.constant 0 : index
    %19 = vector.load %arg11[%c0_11, %c0_12, %c0_13] : memref<4x16x8xf32, #tpu.memory_space<vmem>>, vector<4x16x8xf32>
    tpu.vector_store %arg11[%c0_11, %c0_12, %c0_13], %18 {strides = array<i32>} : memref<4x16x8xf32, #tpu.memory_space<vmem>>, vector<4x16x8xf32>,
    %c0_i32_14 = arith.constant 0 : i32
    %c1_i32 = arith.constant 1 : i32
    %20 = arith.muli %c0_i32_14, %c1_i32 : i32
    %c0_i32_15 = arith.constant 0 : i32
    %21 = arith.addi %c0_i32_15, %20 : i32
    %c16_i32 = arith.constant 16 : i32
    %22 = arith.muli %21, %c16_i32 : i32
    %23 = tpu.assume_multiple %22, 16 : i32
    %c0_16 = arith.constant 0 : index
    %24 = arith.index_cast %23 : i32 to index
    %c0_17 = arith.constant 0 : index
    %25 = vector.load %arg7[%c0_16, %24, %c0_17] : memref<4x16x8xbf16, #tpu.memory_space<vmem>>, vector<4x16x8xbf16>
    %c0_18 = arith.constant 0 : index
    %26 = arith.index_cast %23 : i32 to index
    %c0_19 = arith.constant 0 : index
    %27 = vector.load %arg8[%c0_18, %26, %c0_19] : memref<4x16x8xbf16, #tpu.memory_space<vmem>>, vector<4x16x8xbf16>
    %cst_20 = arith.constant dense<0.000000e+00> : vector<4x16x16xf32>
    %28 = tpu.matmul %13, %25, %cst_20 {dimension_numbers = #tpu.dot_dimension_numbers<[2], [2], [1], [1], [0, 0, 0, 1, 1, 1], [0], [0]>} : vector<4x16x8xbf16>, vector<4x16x8xbf16>, vector<4x16x16xf32> -> vector<4x16x16xf32>
    %29 = tpu.iota {dimensions = array<i32: 2>} : vector<4x16x16xi32>
    %c16_i32_21 = arith.constant 16 : i32
    %30 = arith.muli %21, %c16_i32_21 : i32
    %c12_i32 = arith.constant 12 : i32
    %31 = arith.subi %c12_i32, %30 : i32
    %32 = vector.broadcast %31 : i32 to vector<4x16x16xi32>
    %33 = arith.cmpi slt, %29, %32 : vector<4x16x16xi32>
    %cst_22 = arith.constant 0xFF800000 : f32
    %34 = vector.broadcast %cst_22 : f32 to vector<4x16x16xf32>
    %35 = arith.select %33, %28, %34 : vector<4x16x16xi1>, vector<4x16x16xf32>
    %c0_23 = arith.constant 0 : index
    %c0_24 = arith.constant 0 : index
    %c0_25 = arith.constant 0 : index
    %36 = vector.load %arg9[%c0_23, %c0_24, %c0_25] : memref<4x16x1xf32, #tpu.memory_space<vmem>>, vector<4x16x1xf32>
    %cst_26 = arith.constant dense<0xFF800000> : vector<4x16xf32>
    %37 = vector.multi_reduction <maximumf>, %35, %cst_26 [2] : vector<4x16x16xf32> to vector<4x16xf32>
    %38 = vector.shape_cast %37 : vector<4x16xf32> to vector<4x16x1xf32>
    %39 = arith.maximumf %36, %38 : vector<4x16x1xf32>
    %40 = arith.subf %36, %39 : vector<4x16x1xf32>
    %41 = math.exp %40 : vector<4x16x1xf32>
    %42 = vector.broadcast %39 : vector<4x16x1xf32> to vector<4x16x16xf32>
    %43 = arith.subf %35, %42 : vector<4x16x16xf32>
    %44 = arith.truncf %43 : vector<4x16x16xf32> to vector<4x16x16xbf16>
    %45 = math.exp %44 : vector<4x16x16xbf16>
    %c0_27 = arith.constant 0 : index
    %c0_28 = arith.constant 0 : index
    %c0_29 = arith.constant 0 : index
    %46 = vector.load %arg10[%c0_27, %c0_28, %c0_29] : memref<4x16x1xf32, #tpu.memory_space<vmem>>, vector<4x16x1xf32>
    %47 = arith.mulf %41, %46 : vector<4x16x1xf32>
    %48 = arith.extf %45 : vector<4x16x16xbf16> to vector<4x16x16xf32>
    %cst_30 = arith.constant dense<0.000000e+00> : vector<4x16xf32>
    %49 = vector.multi_reduction <add>, %48, %cst_30 [2] : vector<4x16x16xf32> to vector<4x16xf32>
    %50 = vector.shape_cast %49 : vector<4x16xf32> to vector<4x16x1xf32>
    %51 = arith.addf %47, %50 : vector<4x16x1xf32>
    %c0_31 = arith.constant 0 : index
    %c0_32 = arith.constant 0 : index
    %c0_33 = arith.constant 0 : index
    %52 = vector.load %arg10[%c0_31, %c0_32, %c0_33] : memref<4x16x1xf32, #tpu.memory_space<vmem>>, vector<4x16x1xf32>
    tpu.vector_store %arg10[%c0_31, %c0_32, %c0_33], %51 {strides = array<i32>} : memref<4x16x1xf32, #tpu.memory_space<vmem>>, vector<4x16x1xf32>,
    %cst_34 = arith.constant dense<0.000000e+00> : vector<4x16x8xf32>
    %53 = tpu.matmul %45, %27, %cst_34 {dimension_numbers = #tpu.dot_dimension_numbers<[2], [1], [1], [2], [0, 0, 0, 1, 1, 2], [0], [0]>} : vector<4x16x16xbf16>, vector<4x16x8xbf16>, vector<4x16x8xf32> -> vector<4x16x8xf32>
    %c0_35 = arith.constant 0 : index
    %c0_36 = arith.constant 0 : index
    %c0_37 = arith.constant 0 : index
    %54 = vector.load %arg11[%c0_35, %c0_36, %c0_37] : memref<4x16x8xf32, #tpu.memory_space<vmem>>, vector<4x16x8xf32>
    %55 = vector.broadcast %41 : vector<4x16x1xf32> to vector<4x16x8xf32>
    %56 = arith.mulf %55, %54 : vector<4x16x8xf32>
    %57 = arith.addf %56, %53 : vector<4x16x8xf32>
    %c0_38 = arith.constant 0 : index
    %c0_39 = arith.constant 0 : index
    %c0_40 = arith.constant 0 : index
    %58 = vector.load %arg11[%c0_38, %c0_39, %c0_40] : memref<4x16x8xf32, #tpu.memory_space<vmem>>, vector<4x16x8xf32>
    tpu.vector_store %arg11[%c0_38, %c0_39, %c0_40], %57 {strides = array<i32>} : memref<4x16x8xf32, #tpu.memory_space<vmem>>, vector<4x16x8xf32>,
    %c0_41 = arith.constant 0 : index
    %c0_42 = arith.constant 0 : index
    %c0_43 = arith.constant 0 : index
    %59 = vector.load %arg9[%c0_41, %c0_42, %c0_43] : memref<4x16x1xf32, #tpu.memory_space<vmem>>, vector<4x16x1xf32>
    tpu.vector_store %arg9[%c0_41, %c0_42, %c0_43], %39 {strides = array<i32>} : memref<4x16x1xf32, #tpu.memory_space<vmem>>, vector<4x16x1xf32>,
    %c1_i32_44 = arith.constant 1 : i32
    %c0_45 = arith.constant 0 : index
    %c0_46 = arith.constant 0 : index
    %c0_47 = arith.constant 0 : index
    %60 = vector.load %arg11[%c0_45, %c0_46, %c0_47] : memref<4x16x8xf32, #tpu.memory_space<vmem>>, vector<4x16x8xf32>
    %c0_48 = arith.constant 0 : index
    %c0_49 = arith.constant 0 : index
    %c0_50 = arith.constant 0 : index
    %61 = vector.load %arg10[%c0_48, %c0_49, %c0_50] : memref<4x16x1xf32, #tpu.memory_space<vmem>>, vector<4x16x1xf32>
    %62 = vector.broadcast %61 : vector<4x16x1xf32> to vector<4x16x8xf32>
    %63 = arith.divf %60, %62 : vector<4x16x8xf32>
    %64 = vector.extract_strided_slice %63 {offsets = [0, 0, 0], sizes = [1, 16, 8], strides = [1, 1, 1]} : vector<4x16x8xf32> to vector<1x16x8xf32>
    %65 = vector.shape_cast %64 : vector<1x16x8xf32> to vector<16x8xf32>
    %66 = vector.extract_strided_slice %63 {offsets = [1, 0, 0], sizes = [1, 16, 8], strides = [1, 1, 1]} : vector<4x16x8xf32> to vector<1x16x8xf32>
    %67 = vector.shape_cast %66 : vector<1x16x8xf32> to vector<16x8xf32>
    %68 = vector.extract_strided_slice %63 {offsets = [2, 0, 0], sizes = [1, 16, 8], strides = [1, 1, 1]} : vector<4x16x8xf32> to vector<1x16x8xf32>
    %69 = vector.shape_cast %68 : vector<1x16x8xf32> to vector<16x8xf32>
    %70 = vector.extract_strided_slice %63 {offsets = [3, 0, 0], sizes = [1, 16, 8], strides = [1, 1, 1]} : vector<4x16x8xf32> to vector<1x16x8xf32>
    %71 = vector.shape_cast %70 : vector<1x16x8xf32> to vector<16x8xf32>
    %72 = tpu.concatenate %65, %67, %69, %71 in 1 : vector<16x8xf32>, vector<16x8xf32>, vector<16x8xf32>, vector<16x8xf32> -> vector<16x32xf32>
    %73 = arith.truncf %72 : vector<16x32xf32> to vector<16x32xbf16>
    %c0_51 = arith.constant 0 : index
    %c0_52 = arith.constant 0 : index
    %c0_53 = arith.constant 0 : index
    %74 = vector.load %arg6[%c0_51, %c0_52, %c0_53] : memref<1x16x32xbf16, #tpu.memory_space<vmem>>, vector<1x16x32xbf16>
    %75 = vector.shape_cast %74 : vector<1x16x32xbf16> to vector<16x32xbf16>
    %76 = vector.shape_cast %73 : vector<16x32xbf16> to vector<1x16x32xbf16>
    tpu.vector_store %arg6[%c0_51, %c0_52, %c0_53], %76 {strides = array<i32>} : memref<1x16x32xbf16, #tpu.memory_space<vmem>>, vector<1x16x32xbf16>,
    return
  }
  func.func @transform_0(%arg0: i32, %arg1: i32, %arg2: i32) -> (i32, i32, i32) {
    %c0_i32 = arith.constant 0 : i32
    return %arg0, %arg2, %arg1 : i32, i32, i32
  }
  func.func @transform_1(%arg0: i32, %arg1: i32, %arg2: i32) -> (i32, i32, i32) {
    %c0_i32 = arith.constant 0 : i32
    %c0_i32_0 = arith.constant 0 : i32
    return %arg0, %c0_i32, %arg1 : i32, i32, i32
  }
  func.func @transform_2(%arg0: i32, %arg1: i32, %arg2: i32) -> (i32, i32, i32) {
    %c0_i32 = arith.constant 0 : i32
    %c0_i32_0 = arith.constant 0 : i32
    return %arg0, %c0_i32, %arg1 : i32, i32, i32
  }
  func.func @transform_3(%arg0: i32, %arg1: i32, %arg2: i32) -> (i32, i32, i32) {
    %c0_i32 = arith.constant 0 : i32
    return %arg0, %arg2, %arg1 : i32, i32, i32
  }
}

module attributes {stable_mosaic.version = 11 : i64} {
  func.func @_conv_gelu_pos_kernel(%arg0: i32, %arg1: i32, %arg2: memref<1x3x16x32xbf16, #tpu.memory_space<vmem>>, %arg3: memref<3x32x32xbf16, #tpu.memory_space<vmem>>, %arg4: memref<1x32xf32, #tpu.memory_space<vmem>>, %arg5: memref<16x32xf32, #tpu.memory_space<vmem>>, %arg6: memref<1x16x32xf32, #tpu.memory_space<vmem>>) attributes {dimension_semantics = [#tpu.dimension_semantics<parallel>, #tpu.dimension_semantics<parallel>], iteration_bounds = array<i64: 1, 2>, scalar_prefetch = 0 : i64, scratch_operands = 0 : i64, tpu.core_type = #tpu.core_type<tc>, window_params = [{transform_indices = @transform_0, window_bounds = array<i64: 1, 3, 16, 32>}, {pipeline_mode = #tpu.pipeline_mode<synchronous>, transform_indices = @transform_1, window_bounds = array<i64: 3, 32, 32>}, {pipeline_mode = #tpu.pipeline_mode<synchronous>, transform_indices = @transform_2, window_bounds = array<i64: 1, 32>}, {transform_indices = @transform_3, window_bounds = array<i64: 16, 32>}, {transform_indices = @transform_4, window_bounds = array<i64: 1, 16, 32>}]} {
    %c0 = arith.constant 0 : index
    %c0_0 = arith.constant 0 : index
    %c0_1 = arith.constant 0 : index
    %c0_2 = arith.constant 0 : index
    %0 = vector.load %arg2[%c0, %c0_0, %c0_1, %c0_2] : memref<1x3x16x32xbf16, #tpu.memory_space<vmem>>, vector<1x1x16x32xbf16>
    %1 = vector.shape_cast %0 : vector<1x1x16x32xbf16> to vector<16x32xbf16>
    %c0_3 = arith.constant 0 : index
    %c0_4 = arith.constant 0 : index
    %c0_5 = arith.constant 0 : index
    %2 = vector.load %arg3[%c0_3, %c0_4, %c0_5] : memref<3x32x32xbf16, #tpu.memory_space<vmem>>, vector<1x32x32xbf16>
    %3 = vector.shape_cast %2 : vector<1x32x32xbf16> to vector<32x32xbf16>
    %cst = arith.constant dense<0.000000e+00> : vector<16x32xf32>
    %4 = tpu.matmul %1, %3, %cst {dimension_numbers = #tpu.dot_dimension_numbers<[1], [0], [0], [1], [0, 0, 1, 1], [], []>} : vector<16x32xbf16>, vector<32x32xbf16>, vector<16x32xf32> -> vector<16x32xf32>
    %c0_6 = arith.constant 0 : index
    %c1 = arith.constant 1 : index
    %c0_7 = arith.constant 0 : index
    %c0_8 = arith.constant 0 : index
    %5 = vector.load %arg2[%c0_6, %c1, %c0_7, %c0_8] : memref<1x3x16x32xbf16, #tpu.memory_space<vmem>>, vector<1x1x16x32xbf16>
    %6 = vector.shape_cast %5 : vector<1x1x16x32xbf16> to vector<16x32xbf16>
    %c1_9 = arith.constant 1 : index
    %c0_10 = arith.constant 0 : index
    %c0_11 = arith.constant 0 : index
    %7 = vector.load %arg3[%c1_9, %c0_10, %c0_11] : memref<3x32x32xbf16, #tpu.memory_space<vmem>>, vector<1x32x32xbf16>
    %8 = vector.shape_cast %7 : vector<1x32x32xbf16> to vector<32x32xbf16>
    %cst_12 = arith.constant dense<0.000000e+00> : vector<16x32xf32>
    %9 = tpu.matmul %6, %8, %cst_12 {dimension_numbers = #tpu.dot_dimension_numbers<[1], [0], [0], [1], [0, 0, 1, 1], [], []>} : vector<16x32xbf16>, vector<32x32xbf16>, vector<16x32xf32> -> vector<16x32xf32>
    %10 = arith.addf %4, %9 : vector<16x32xf32>
    %c0_13 = arith.constant 0 : index
    %c2 = arith.constant 2 : index
    %c0_14 = arith.constant 0 : index
    %c0_15 = arith.constant 0 : index
    %11 = vector.load %arg2[%c0_13, %c2, %c0_14, %c0_15] : memref<1x3x16x32xbf16, #tpu.memory_space<vmem>>, vector<1x1x16x32xbf16>
    %12 = vector.shape_cast %11 : vector<1x1x16x32xbf16> to vector<16x32xbf16>
    %c2_16 = arith.constant 2 : index
    %c0_17 = arith.constant 0 : index
    %c0_18 = arith.constant 0 : index
    %13 = vector.load %arg3[%c2_16, %c0_17, %c0_18] : memref<3x32x32xbf16, #tpu.memory_space<vmem>>, vector<1x32x32xbf16>
    %14 = vector.shape_cast %13 : vector<1x32x32xbf16> to vector<32x32xbf16>
    %cst_19 = arith.constant dense<0.000000e+00> : vector<16x32xf32>
    %15 = tpu.matmul %12, %14, %cst_19 {dimension_numbers = #tpu.dot_dimension_numbers<[1], [0], [0], [1], [0, 0, 1, 1], [], []>} : vector<16x32xbf16>, vector<32x32xbf16>, vector<16x32xf32> -> vector<16x32xf32>
    %16 = arith.addf %10, %15 : vector<16x32xf32>
    %c0_20 = arith.constant 0 : index
    %c0_21 = arith.constant 0 : index
    %17 = vector.load %arg4[%c0_20, %c0_21] : memref<1x32xf32, #tpu.memory_space<vmem>>, vector<1x32xf32>
    %18 = vector.broadcast %17 : vector<1x32xf32> to vector<16x32xf32>
    %19 = arith.addf %16, %18 : vector<16x32xf32>
    %cst_22 = arith.constant 5.000000e-01 : f32
    %20 = vector.broadcast %cst_22 : f32 to vector<16x32xf32>
    %21 = arith.mulf %20, %19 : vector<16x32xf32>
    %cst_23 = arith.constant 2.000000e+00 : f32
    %22 = math.sqrt %cst_23 : f32
    %23 = vector.broadcast %22 : f32 to vector<16x32xf32>
    %24 = arith.divf %19, %23 : vector<16x32xf32>
    %25 = math.erf %24 : vector<16x32xf32>
    %cst_24 = arith.constant 1.000000e+00 : f32
    %26 = vector.broadcast %cst_24 : f32 to vector<16x32xf32>
    %27 = arith.addf %26, %25 : vector<16x32xf32>
    %28 = arith.mulf %21, %27 : vector<16x32xf32>
    %c0_25 = arith.constant 0 : index
    %c0_26 = arith.constant 0 : index
    %29 = vector.load %arg5[%c0_25, %c0_26] : memref<16x32xf32, #tpu.memory_space<vmem>>, vector<16x32xf32>
    %30 = arith.addf %28, %29 : vector<16x32xf32>
    %c0_27 = arith.constant 0 : index
    %c0_28 = arith.constant 0 : index
    %c0_29 = arith.constant 0 : index
    %31 = vector.load %arg6[%c0_27, %c0_28, %c0_29] : memref<1x16x32xf32, #tpu.memory_space<vmem>>, vector<1x16x32xf32>
    %32 = vector.shape_cast %31 : vector<1x16x32xf32> to vector<16x32xf32>
    %33 = vector.shape_cast %30 : vector<16x32xf32> to vector<1x16x32xf32>
    tpu.vector_store %arg6[%c0_27, %c0_28, %c0_29], %33 {strides = array<i32>} : memref<1x16x32xf32, #tpu.memory_space<vmem>>, vector<1x16x32xf32>,
    return
  }
  func.func @transform_0(%arg0: i32, %arg1: i32) -> (i32, i32, i32, i32) {
    %c0_i32 = arith.constant 0 : i32
    %c0_i32_0 = arith.constant 0 : i32
    %c0_i32_1 = arith.constant 0 : i32
    return %arg1, %c0_i32, %arg0, %c0_i32_0 : i32, i32, i32, i32
  }
  func.func @transform_1(%arg0: i32, %arg1: i32) -> (i32, i32, i32) {
    %c0_i32 = arith.constant 0 : i32
    %c0_i32_0 = arith.constant 0 : i32
    %c0_i32_1 = arith.constant 0 : i32
    %c0_i32_2 = arith.constant 0 : i32
    return %c0_i32, %c0_i32_0, %c0_i32_1 : i32, i32, i32
  }
  func.func @transform_2(%arg0: i32, %arg1: i32) -> (i32, i32) {
    %c0_i32 = arith.constant 0 : i32
    %c0_i32_0 = arith.constant 0 : i32
    %c0_i32_1 = arith.constant 0 : i32
    return %c0_i32, %c0_i32_0 : i32, i32
  }
  func.func @transform_3(%arg0: i32, %arg1: i32) -> (i32, i32) {
    %c0_i32 = arith.constant 0 : i32
    %c0_i32_0 = arith.constant 0 : i32
    return %arg0, %c0_i32 : i32, i32
  }
  func.func @transform_4(%arg0: i32, %arg1: i32) -> (i32, i32, i32) {
    %c0_i32 = arith.constant 0 : i32
    %c0_i32_0 = arith.constant 0 : i32
    return %arg1, %arg0, %c0_i32 : i32, i32, i32
  }
}

module attributes {stable_mosaic.version = 11 : i64} {
  func.func @_layernorm_kernel(%arg0: i32, %arg1: i32, %arg2: memref<1x16x32xf32, #tpu.memory_space<vmem>>, %arg3: memref<1x32xf32, #tpu.memory_space<vmem>>, %arg4: memref<1x32xf32, #tpu.memory_space<vmem>>, %arg5: memref<1x16x32xf32, #tpu.memory_space<vmem>>) attributes {dimension_semantics = [#tpu.dimension_semantics<parallel>, #tpu.dimension_semantics<parallel>], iteration_bounds = array<i64: 1, 2>, scalar_prefetch = 0 : i64, scratch_operands = 0 : i64, tpu.core_type = #tpu.core_type<tc>, window_params = [{transform_indices = @transform_0, window_bounds = array<i64: 1, 16, 32>}, {pipeline_mode = #tpu.pipeline_mode<synchronous>, transform_indices = @transform_1, window_bounds = array<i64: 1, 32>}, {pipeline_mode = #tpu.pipeline_mode<synchronous>, transform_indices = @transform_2, window_bounds = array<i64: 1, 32>}, {transform_indices = @transform_3, window_bounds = array<i64: 1, 16, 32>}]} {
    %c0 = arith.constant 0 : index
    %c0_0 = arith.constant 0 : index
    %c0_1 = arith.constant 0 : index
    %0 = vector.load %arg2[%c0, %c0_0, %c0_1] : memref<1x16x32xf32, #tpu.memory_space<vmem>>, vector<1x16x32xf32>
    %1 = vector.shape_cast %0 : vector<1x16x32xf32> to vector<16x32xf32>
    %c0_2 = arith.constant 0 : index
    %c0_3 = arith.constant 0 : index
    %2 = vector.load %arg3[%c0_2, %c0_3] : memref<1x32xf32, #tpu.memory_space<vmem>>, vector<1x32xf32>
    %c0_4 = arith.constant 0 : index
    %c0_5 = arith.constant 0 : index
    %3 = vector.load %arg4[%c0_4, %c0_5] : memref<1x32xf32, #tpu.memory_space<vmem>>, vector<1x32xf32>
    %cst = arith.constant dense<0.000000e+00> : vector<16xf32>
    %4 = vector.multi_reduction <add>, %1, %cst [1] : vector<16x32xf32> to vector<16xf32>
    %5 = vector.shape_cast %4 : vector<16xf32> to vector<16x1xf32>
    %cst_6 = arith.constant 3.200000e+01 : f32
    %6 = vector.broadcast %cst_6 : f32 to vector<16x1xf32>
    %7 = arith.divf %5, %6 : vector<16x1xf32>
    %8 = vector.broadcast %7 : vector<16x1xf32> to vector<16x32xf32>
    %9 = arith.subf %1, %8 : vector<16x32xf32>
    %10 = arith.mulf %9, %9 : vector<16x32xf32>
    %cst_7 = arith.constant dense<0.000000e+00> : vector<16xf32>
    %11 = vector.multi_reduction <add>, %10, %cst_7 [1] : vector<16x32xf32> to vector<16xf32>
    %12 = vector.shape_cast %11 : vector<16xf32> to vector<16x1xf32>
    %cst_8 = arith.constant 3.200000e+01 : f32
    %13 = vector.broadcast %cst_8 : f32 to vector<16x1xf32>
    %14 = arith.divf %12, %13 : vector<16x1xf32>
    %15 = vector.broadcast %7 : vector<16x1xf32> to vector<16x32xf32>
    %16 = arith.subf %1, %15 : vector<16x32xf32>
    %cst_9 = arith.constant 9.99999974E-6 : f32
    %17 = vector.broadcast %cst_9 : f32 to vector<16x1xf32>
    %18 = arith.addf %14, %17 : vector<16x1xf32>
    %19 = math.rsqrt %18 : vector<16x1xf32>
    %20 = vector.broadcast %19 : vector<16x1xf32> to vector<16x32xf32>
    %21 = arith.mulf %16, %20 : vector<16x32xf32>
    %22 = vector.broadcast %2 : vector<1x32xf32> to vector<16x32xf32>
    %23 = arith.mulf %21, %22 : vector<16x32xf32>
    %24 = vector.broadcast %3 : vector<1x32xf32> to vector<16x32xf32>
    %25 = arith.addf %23, %24 : vector<16x32xf32>
    %c0_10 = arith.constant 0 : index
    %c0_11 = arith.constant 0 : index
    %c0_12 = arith.constant 0 : index
    %26 = vector.load %arg5[%c0_10, %c0_11, %c0_12] : memref<1x16x32xf32, #tpu.memory_space<vmem>>, vector<1x16x32xf32>
    %27 = vector.shape_cast %26 : vector<1x16x32xf32> to vector<16x32xf32>
    %28 = vector.shape_cast %25 : vector<16x32xf32> to vector<1x16x32xf32>
    tpu.vector_store %arg5[%c0_10, %c0_11, %c0_12], %28 {strides = array<i32>} : memref<1x16x32xf32, #tpu.memory_space<vmem>>, vector<1x16x32xf32>,
    return
  }
  func.func @transform_0(%arg0: i32, %arg1: i32) -> (i32, i32, i32) {
    %c0_i32 = arith.constant 0 : i32
    %c0_i32_0 = arith.constant 0 : i32
    return %arg1, %arg0, %c0_i32 : i32, i32, i32
  }
  func.func @transform_1(%arg0: i32, %arg1: i32) -> (i32, i32) {
    %c0_i32 = arith.constant 0 : i32
    %c0_i32_0 = arith.constant 0 : i32
    %c0_i32_1 = arith.constant 0 : i32
    return %c0_i32, %c0_i32_0 : i32, i32
  }
  func.func @transform_2(%arg0: i32, %arg1: i32) -> (i32, i32) {
    %c0_i32 = arith.constant 0 : i32
    %c0_i32_0 = arith.constant 0 : i32
    %c0_i32_1 = arith.constant 0 : i32
    return %c0_i32, %c0_i32_0 : i32, i32
  }
  func.func @transform_3(%arg0: i32, %arg1: i32) -> (i32, i32, i32) {
    %c0_i32 = arith.constant 0 : i32
    %c0_i32_0 = arith.constant 0 : i32
    return %arg1, %arg0, %c0_i32 : i32, i32, i32
  }
}

module attributes {stable_mosaic.version = 11 : i64} {
  func.func @_attn_out_mlp_kernel(%arg0: i32, %arg1: i32, %arg2: i32, %arg3: memref<1x16x32xf32, #tpu.memory_space<vmem>>, %arg4: memref<1x16x32xbf16, #tpu.memory_space<vmem>>, %arg5: memref<32x32xbf16, #tpu.memory_space<vmem>>, %arg6: memref<1x32xf32, #tpu.memory_space<vmem>>, %arg7: memref<1x32xf32, #tpu.memory_space<vmem>>, %arg8: memref<1x32xf32, #tpu.memory_space<vmem>>, %arg9: memref<32x128xbf16, #tpu.memory_space<vmem>>, %arg10: memref<1x128xf32, #tpu.memory_space<vmem>>, %arg11: memref<128x32xbf16, #tpu.memory_space<vmem>>, %arg12: memref<1x32xf32, #tpu.memory_space<vmem>>, %arg13: memref<1x16x32xf32, #tpu.memory_space<vmem>>, %arg14: memref<16x32xf32, #tpu.memory_space<vmem>>, %arg15: memref<16x32xbf16, #tpu.memory_space<vmem>>, %arg16: memref<16x32xf32, #tpu.memory_space<vmem>>) attributes {dimension_semantics = [#tpu.dimension_semantics<parallel>, #tpu.dimension_semantics<parallel>, #tpu.dimension_semantics<arbitrary>], iteration_bounds = array<i64: 1, 2, 1>, scalar_prefetch = 0 : i64, scratch_operands = 3 : i64, tpu.core_type = #tpu.core_type<tc>, window_params = [{transform_indices = @transform_0, window_bounds = array<i64: 1, 16, 32>}, {transform_indices = @transform_1, window_bounds = array<i64: 1, 16, 32>}, {pipeline_mode = #tpu.pipeline_mode<synchronous>, transform_indices = @transform_2, window_bounds = array<i64: 32, 32>}, {pipeline_mode = #tpu.pipeline_mode<synchronous>, transform_indices = @transform_3, window_bounds = array<i64: 1, 32>}, {pipeline_mode = #tpu.pipeline_mode<synchronous>, transform_indices = @transform_4, window_bounds = array<i64: 1, 32>}, {pipeline_mode = #tpu.pipeline_mode<synchronous>, transform_indices = @transform_5, window_bounds = array<i64: 1, 32>}, {transform_indices = @transform_6, window_bounds = array<i64: 32, 128>}, {transform_indices = @transform_7, window_bounds = array<i64: 1, 128>}, {transform_indices = @transform_8, window_bounds = array<i64: 128, 32>}, {pipeline_mode = #tpu.pipeline_mode<synchronous>, transform_indices = @transform_9, window_bounds = array<i64: 1, 32>}, {transform_indices = @transform_10, window_bounds = array<i64: 1, 16, 32>}]} {
    %c0_i32 = arith.constant 0 : i32
    %0 = arith.cmpi eq, %arg2, %c0_i32 : i32
    %1 = arith.extui %0 : i1 to i32
    %c0_i32_0 = arith.constant 0 : i32
    %2 = arith.cmpi ne, %1, %c0_i32_0 : i32
    scf.if %2 {
      %c0_18 = arith.constant 0 : index
      %c0_19 = arith.constant 0 : index
      %c0_20 = arith.constant 0 : index
      %27 = vector.load %arg4[%c0_18, %c0_19, %c0_20] : memref<1x16x32xbf16, #tpu.memory_space<vmem>>, vector<1x16x32xbf16>
      %28 = vector.shape_cast %27 : vector<1x16x32xbf16> to vector<16x32xbf16>
      %c0_21 = arith.constant 0 : index
      %c0_22 = arith.constant 0 : index
      %29 = vector.load %arg5[%c0_21, %c0_22] : memref<32x32xbf16, #tpu.memory_space<vmem>>, vector<32x32xbf16>
      %cst_23 = arith.constant dense<0.000000e+00> : vector<16x32xf32>
      %30 = tpu.matmul %28, %29, %cst_23 {dimension_numbers = #tpu.dot_dimension_numbers<[1], [0], [0], [1], [0, 0, 1, 1], [], []>} : vector<16x32xbf16>, vector<32x32xbf16>, vector<16x32xf32> -> vector<16x32xf32>
      %c0_24 = arith.constant 0 : index
      %c0_25 = arith.constant 0 : index
      %31 = vector.load %arg6[%c0_24, %c0_25] : memref<1x32xf32, #tpu.memory_space<vmem>>, vector<1x32xf32>
      %32 = vector.broadcast %31 : vector<1x32xf32> to vector<16x32xf32>
      %33 = arith.addf %30, %32 : vector<16x32xf32>
      %c0_26 = arith.constant 0 : index
      %c0_27 = arith.constant 0 : index
      %c0_28 = arith.constant 0 : index
      %34 = vector.load %arg3[%c0_26, %c0_27, %c0_28] : memref<1x16x32xf32, #tpu.memory_space<vmem>>, vector<1x16x32xf32>
      %35 = vector.shape_cast %34 : vector<1x16x32xf32> to vector<16x32xf32>
      %36 = arith.addf %35, %33 : vector<16x32xf32>
      %c0_29 = arith.constant 0 : index
      %c0_30 = arith.constant 0 : index
      %37 = vector.load %arg14[%c0_29, %c0_30] : memref<16x32xf32, #tpu.memory_space<vmem>>, vector<16x32xf32>
      tpu.vector_store %arg14[%c0_29, %c0_30], %36 {strides = array<i32>} : memref<16x32xf32, #tpu.memory_space<vmem>>, vector<16x32xf32>,
      %c0_31 = arith.constant 0 : index
      %c0_32 = arith.constant 0 : index
      %38 = vector.load %arg7[%c0_31, %c0_32] : memref<1x32xf32, #tpu.memory_space<vmem>>, vector<1x32xf32>
      %c0_33 = arith.constant 0 : index
      %c0_34 = arith.constant 0 : index
      %39 = vector.load %arg8[%c0_33, %c0_34] : memref<1x32xf32, #tpu.memory_space<vmem>>, vector<1x32xf32>
      %cst_35 = arith.constant dense<0.000000e+00> : vector<16xf32>
      %40 = vector.multi_reduction <add>, %36, %cst_35 [1] : vector<16x32xf32> to vector<16xf32>
      %41 = vector.shape_cast %40 : vector<16xf32> to vector<16x1xf32>
      %cst_36 = arith.constant 3.200000e+01 : f32
      %42 = vector.broadcast %cst_36 : f32 to vector<16x1xf32>
      %43 = arith.divf %41, %42 : vector<16x1xf32>
      %44 = vector.broadcast %43 : vector<16x1xf32> to vector<16x32xf32>
      %45 = arith.subf %36, %44 : vector<16x32xf32>
      %46 = arith.mulf %45, %45 : vector<16x32xf32>
      %cst_37 = arith.constant dense<0.000000e+00> : vector<16xf32>
      %47 = vector.multi_reduction <add>, %46, %cst_37 [1] : vector<16x32xf32> to vector<16xf32>
      %48 = vector.shape_cast %47 : vector<16xf32> to vector<16x1xf32>
      %cst_38 = arith.constant 3.200000e+01 : f32
      %49 = vector.broadcast %cst_38 : f32 to vector<16x1xf32>
      %50 = arith.divf %48, %49 : vector<16x1xf32>
      %51 = vector.broadcast %43 : vector<16x1xf32> to vector<16x32xf32>
      %52 = arith.subf %36, %51 : vector<16x32xf32>
      %cst_39 = arith.constant 9.99999974E-6 : f32
      %53 = vector.broadcast %cst_39 : f32 to vector<16x1xf32>
      %54 = arith.addf %50, %53 : vector<16x1xf32>
      %55 = math.rsqrt %54 : vector<16x1xf32>
      %56 = vector.broadcast %55 : vector<16x1xf32> to vector<16x32xf32>
      %57 = arith.mulf %52, %56 : vector<16x32xf32>
      %58 = vector.broadcast %38 : vector<1x32xf32> to vector<16x32xf32>
      %59 = arith.mulf %57, %58 : vector<16x32xf32>
      %60 = vector.broadcast %39 : vector<1x32xf32> to vector<16x32xf32>
      %61 = arith.addf %59, %60 : vector<16x32xf32>
      %62 = arith.truncf %61 : vector<16x32xf32> to vector<16x32xbf16>
      %c0_40 = arith.constant 0 : index
      %c0_41 = arith.constant 0 : index
      %63 = vector.load %arg15[%c0_40, %c0_41] : memref<16x32xbf16, #tpu.memory_space<vmem>>, vector<16x32xbf16>
      tpu.vector_store %arg15[%c0_40, %c0_41], %62 {strides = array<i32>} : memref<16x32xbf16, #tpu.memory_space<vmem>>, vector<16x32xbf16>,
      %cst_42 = arith.constant 0.000000e+00 : f32
      %64 = vector.broadcast %cst_42 : f32 to vector<16x32xf32>
      %c0_43 = arith.constant 0 : index
      %c0_44 = arith.constant 0 : index
      %65 = vector.load %arg16[%c0_43, %c0_44] : memref<16x32xf32, #tpu.memory_space<vmem>>, vector<16x32xf32>
      tpu.vector_store %arg16[%c0_43, %c0_44], %64 {strides = array<i32>} : memref<16x32xf32, #tpu.memory_space<vmem>>, vector<16x32xf32>,
    } else {
    }
    %c0 = arith.constant 0 : index
    %c0_1 = arith.constant 0 : index
    %3 = vector.load %arg15[%c0, %c0_1] : memref<16x32xbf16, #tpu.memory_space<vmem>>, vector<16x32xbf16>
    %c0_2 = arith.constant 0 : index
    %c0_3 = arith.constant 0 : index
    %4 = vector.load %arg9[%c0_2, %c0_3] : memref<32x128xbf16, #tpu.memory_space<vmem>>, vector<32x128xbf16>
    %cst = arith.constant dense<0.000000e+00> : vector<16x128xf32>
    %5 = tpu.matmul %3, %4, %cst {dimension_numbers = #tpu.dot_dimension_numbers<[1], [0], [0], [1], [0, 0, 1, 1], [], []>} : vector<16x32xbf16>, vector<32x128xbf16>, vector<16x128xf32> -> vector<16x128xf32>
    %c0_4 = arith.constant 0 : index
    %c0_5 = arith.constant 0 : index
    %6 = vector.load %arg10[%c0_4, %c0_5] : memref<1x128xf32, #tpu.memory_space<vmem>>, vector<1x128xf32>
    %7 = vector.broadcast %6 : vector<1x128xf32> to vector<16x128xf32>
    %8 = arith.addf %5, %7 : vector<16x128xf32>
    %cst_6 = arith.constant 5.000000e-01 : f32
    %9 = vector.broadcast %cst_6 : f32 to vector<16x128xf32>
    %10 = arith.mulf %9, %8 : vector<16x128xf32>
    %cst_7 = arith.constant 2.000000e+00 : f32
    %11 = math.sqrt %cst_7 : f32
    %12 = vector.broadcast %11 : f32 to vector<16x128xf32>
    %13 = arith.divf %8, %12 : vector<16x128xf32>
    %14 = math.erf %13 : vector<16x128xf32>
    %cst_8 = arith.constant 1.000000e+00 : f32
    %15 = vector.broadcast %cst_8 : f32 to vector<16x128xf32>
    %16 = arith.addf %15, %14 : vector<16x128xf32>
    %17 = arith.mulf %10, %16 : vector<16x128xf32>
    %c0_9 = arith.constant 0 : index
    %c0_10 = arith.constant 0 : index
    %18 = vector.load %arg16[%c0_9, %c0_10] : memref<16x32xf32, #tpu.memory_space<vmem>>, vector<16x32xf32>
    %19 = arith.truncf %17 : vector<16x128xf32> to vector<16x128xbf16>
    %c0_11 = arith.constant 0 : index
    %c0_12 = arith.constant 0 : index
    %20 = vector.load %arg11[%c0_11, %c0_12] : memref<128x32xbf16, #tpu.memory_space<vmem>>, vector<128x32xbf16>
    %cst_13 = arith.constant dense<0.000000e+00> : vector<16x32xf32>
    %21 = tpu.matmul %19, %20, %cst_13 {dimension_numbers = #tpu.dot_dimension_numbers<[1], [0], [0], [1], [0, 0, 1, 1], [], []>} : vector<16x128xbf16>, vector<128x32xbf16>, vector<16x32xf32> -> vector<16x32xf32>
    %22 = arith.addf %18, %21 : vector<16x32xf32>
    %c0_14 = arith.constant 0 : index
    %c0_15 = arith.constant 0 : index
    %23 = vector.load %arg16[%c0_14, %c0_15] : memref<16x32xf32, #tpu.memory_space<vmem>>, vector<16x32xf32>
    tpu.vector_store %arg16[%c0_14, %c0_15], %22 {strides = array<i32>} : memref<16x32xf32, #tpu.memory_space<vmem>>, vector<16x32xf32>,
    %c0_i32_16 = arith.constant 0 : i32
    %24 = arith.cmpi eq, %arg2, %c0_i32_16 : i32
    %25 = arith.extui %24 : i1 to i32
    %c0_i32_17 = arith.constant 0 : i32
    %26 = arith.cmpi ne, %25, %c0_i32_17 : i32
    scf.if %26 {
      %c0_18 = arith.constant 0 : index
      %c0_19 = arith.constant 0 : index
      %27 = vector.load %arg14[%c0_18, %c0_19] : memref<16x32xf32, #tpu.memory_space<vmem>>, vector<16x32xf32>
      %c0_20 = arith.constant 0 : index
      %c0_21 = arith.constant 0 : index
      %28 = vector.load %arg16[%c0_20, %c0_21] : memref<16x32xf32, #tpu.memory_space<vmem>>, vector<16x32xf32>
      %29 = arith.addf %27, %28 : vector<16x32xf32>
      %c0_22 = arith.constant 0 : index
      %c0_23 = arith.constant 0 : index
      %30 = vector.load %arg12[%c0_22, %c0_23] : memref<1x32xf32, #tpu.memory_space<vmem>>, vector<1x32xf32>
      %31 = vector.broadcast %30 : vector<1x32xf32> to vector<16x32xf32>
      %32 = arith.addf %29, %31 : vector<16x32xf32>
      %c0_24 = arith.constant 0 : index
      %c0_25 = arith.constant 0 : index
      %c0_26 = arith.constant 0 : index
      %33 = vector.load %arg13[%c0_24, %c0_25, %c0_26] : memref<1x16x32xf32, #tpu.memory_space<vmem>>, vector<1x16x32xf32>
      %34 = vector.shape_cast %33 : vector<1x16x32xf32> to vector<16x32xf32>
      %35 = vector.shape_cast %32 : vector<16x32xf32> to vector<1x16x32xf32>
      tpu.vector_store %arg13[%c0_24, %c0_25, %c0_26], %35 {strides = array<i32>} : memref<1x16x32xf32, #tpu.memory_space<vmem>>, vector<1x16x32xf32>,
    } else {
    }
    return
  }
  func.func @transform_0(%arg0: i32, %arg1: i32, %arg2: i32) -> (i32, i32, i32) {
    %c0_i32 = arith.constant 0 : i32
    %c0_i32_0 = arith.constant 0 : i32
    return %arg1, %arg0, %c0_i32 : i32, i32, i32
  }
  func.func @transform_1(%arg0: i32, %arg1: i32, %arg2: i32) -> (i32, i32, i32) {
    %c0_i32 = arith.constant 0 : i32
    %c0_i32_0 = arith.constant 0 : i32
    return %arg1, %arg0, %c0_i32 : i32, i32, i32
  }
  func.func @transform_2(%arg0: i32, %arg1: i32, %arg2: i32) -> (i32, i32) {
    %c0_i32 = arith.constant 0 : i32
    %c0_i32_0 = arith.constant 0 : i32
    %c0_i32_1 = arith.constant 0 : i32
    return %c0_i32, %c0_i32_0 : i32, i32
  }
  func.func @transform_3(%arg0: i32, %arg1: i32, %arg2: i32) -> (i32, i32) {
    %c0_i32 = arith.constant 0 : i32
    %c0_i32_0 = arith.constant 0 : i32
    %c0_i32_1 = arith.constant 0 : i32
    return %c0_i32, %c0_i32_0 : i32, i32
  }
  func.func @transform_4(%arg0: i32, %arg1: i32, %arg2: i32) -> (i32, i32) {
    %c0_i32 = arith.constant 0 : i32
    %c0_i32_0 = arith.constant 0 : i32
    %c0_i32_1 = arith.constant 0 : i32
    return %c0_i32, %c0_i32_0 : i32, i32
  }
  func.func @transform_5(%arg0: i32, %arg1: i32, %arg2: i32) -> (i32, i32) {
    %c0_i32 = arith.constant 0 : i32
    %c0_i32_0 = arith.constant 0 : i32
    %c0_i32_1 = arith.constant 0 : i32
    return %c0_i32, %c0_i32_0 : i32, i32
  }
  func.func @transform_6(%arg0: i32, %arg1: i32, %arg2: i32) -> (i32, i32) {
    %c0_i32 = arith.constant 0 : i32
    %c0_i32_0 = arith.constant 0 : i32
    return %c0_i32, %arg2 : i32, i32
  }
  func.func @transform_7(%arg0: i32, %arg1: i32, %arg2: i32) -> (i32, i32) {
    %c0_i32 = arith.constant 0 : i32
    %c0_i32_0 = arith.constant 0 : i32
    return %c0_i32, %arg2 : i32, i32
  }
  func.func @transform_8(%arg0: i32, %arg1: i32, %arg2: i32) -> (i32, i32) {
    %c0_i32 = arith.constant 0 : i32
    %c0_i32_0 = arith.constant 0 : i32
    return %arg2, %c0_i32 : i32, i32
  }
  func.func @transform_9(%arg0: i32, %arg1: i32, %arg2: i32) -> (i32, i32) {
    %c0_i32 = arith.constant 0 : i32
    %c0_i32_0 = arith.constant 0 : i32
    %c0_i32_1 = arith.constant 0 : i32
    return %c0_i32, %c0_i32_0 : i32, i32
  }
  func.func @transform_10(%arg0: i32, %arg1: i32, %arg2: i32) -> (i32, i32, i32) {
    %c0_i32 = arith.constant 0 : i32
    %c0_i32_0 = arith.constant 0 : i32
    return %arg1, %arg0, %c0_i32 : i32, i32, i32
  }
}

</mosaic_0001>

<llo_original>
// kernel: audio_encoder_forward.11
$region0: #{audio_encoder_forward.11}
  #allocation0 [shape = 'u32[]', space=smem, size = 0x4, offset = 0x4, fixed_abs, tag = 'smem constant byte address 0x4 - core index']
  #allocation1 [shape = 'u32[144,128]{1,0:T(1,128)}', space=vmem, size = 0x12000, scoped, tag = 'internal scratch']
  %s0 = inlined_call_operand.vmem [shape: f32[2,16,32], index: 0, kind: input, shape index: {}]
  %s1 = inlined_call_operand.vmem [shape: f32[1,32], index: 1, kind: input, shape index: {}]
  %s2 = inlined_call_operand.vmem [shape: f32[1,32], index: 2, kind: input, shape index: {}]
  %s3 = inlined_call_operand.vmem [shape: bf16[32,32], index: 3, kind: input, shape index: {}]
  %s4 = inlined_call_operand.vmem [shape: f32[1,32], index: 4, kind: input, shape index: {}]
  %s5 = inlined_call_operand.vmem [shape: bf16[32,32], index: 5, kind: input, shape index: {}]
  %s6 = inlined_call_operand.vmem [shape: bf16[32,32], index: 6, kind: input, shape index: {}]
  %s7 = inlined_call_operand.vmem [shape: f32[1,32], index: 7, kind: input, shape index: {}]
  %s8 = inlined_call_operand.vmem [shape: bf16[2,16,32], index: 8, kind: output, shape index: {0}]
  %s9 = inlined_call_operand.vmem [shape: bf16[2,16,32], index: 9, kind: output, shape index: {1}]
  %s10 = inlined_call_operand.vmem [shape: bf16[2,16,32], index: 10, kind: output, shape index: {2}]
  %11 = xla_tuple %s8, %s9, %s10
  %s12 = sld [smem:[#allocation0]]
  $region81: #{audio_encoder_forward.11} parent=0
    _
  %s14 = ssub.s32 1, %s12
  %s15 = scalar_select 0, %s14, %s12
  loop: start=0, step=1, limit=4
  $region2: #{audio_encoder_forward.11} parent=0 // loop_pre_header
    _
  $region3: #{audio_encoder_forward.11} parent=0 // loop_header
    %s17 = sphi 0, %s21
    %p18 = scmp.ge.s32.totalorder %s17, 4
    %s24 = sphi 0, %s36
    %s25 = sphi 0, %s32
    %s26 = sphi 0, %s24
    %s27 = sphi 0, %s25
    %s28 = sphi 0, %s26
    %s29 = sphi 0, %s27
    %s41 = sphi 0, %s43
    %s44 = sphi 0, %s41
    %s45 = sphi 0, %s44
    %s61 = sphi 0, %s45
    %s65 = sphi 0, %s65
    %s67 = sphi 0, %s65
    %s68 = sphi 0, %s67
    %s82 = sphi 0, %s68
    %s86 = sphi 0, %s86
    %s88 = sphi 0, %s86
    %s89 = sphi 0, %s88
    %s103 = sphi 0, %s89
    %s107 = sphi 0, %s107
    %s109 = sphi 0, %s107
    %s110 = sphi 0, %s109
    %s124 = sphi 0, %s110
    %s128 = sphi 0, %s128
    %s130 = sphi 0, %s128
    %s131 = sphi 0, %s130
    %s145 = sphi 0, %s131
    %s149 = sphi 0, %s149
    %s151 = sphi 0, %s149
    %s152 = sphi 0, %s151
    %s166 = sphi 0, %s152
    %s170 = sphi 0, %s170
    %s172 = sphi 0, %s170
    %s173 = sphi 0, %s172
    %s187 = sphi 0, %s173
    %s191 = sphi 0, %s191
    %s193 = sphi 0, %s191
    %s194 = sphi 0, %s193
    %s208 = sphi 0, %s194
    %s216 = sphi 0, %s218
    %s219 = sphi 0, %s216
    %s220 = sphi 0, %s219
    %s236 = sphi 0, %s220
    %s244 = sphi 0, %s246
    %s247 = sphi 0, %s244
    %s248 = sphi 0, %s247
    %s264 = sphi 0, %s248
    %s272 = sphi 0, %s274
    %s275 = sphi 0, %s272
    %s276 = sphi 0, %s275
    %s292 = sphi 0, %s276
  $region4: #{audio_encoder_forward.11} parent=0 // loop_header_branch
    %20 = sbr.rel (%p18) target = $region8
  $region5: #{audio_encoder_forward.11} parent=0 // loop_body
    %s22 = ssub.s32 %s17, 1
    %s23 = ssub.s32 %s17, 2
    %s30 = sadd.s32 1, %s25
    %p31 = scmp.ge.s32.totalorder %s30, 2
    %s32 = scalar_select %p31, 0, %s30
    %s33 = sadd.s32 1, %s24
    %s34 = scalar_select %p31, %s33, %s24
    %p35 = scmp.ge.s32.totalorder %s34, 1
    %s36 = scalar_select %p35, 0, %s34
    %s37 = ssub.s32 %s25, %s32
    %s38 = ssub.s32 %s24, %s36
    %s39 = sor.u32 %s37, %s38
    %p40 = scmp.eq.s32.totalorder %s39, 0
    %s42 = sadd.s32 %s41, 1
    %s43 = scalar_select %p40, %s41, %s42
    %p46 = pneg %p40
    %p47 = scmp.eq.s32.totalorder %s17, 1
    %p48 = por %p46, %p47
    %p49 = scmp.ne.s32.totalorder %s41, %s44
    %p50 = scmp.eq.s32.totalorder %s17, 0
    %p51 = por %p49, %p50
    %p52 = scmp.ne.s32.totalorder %s41, %s44
    %p53 = scmp.eq.s32.totalorder %s22, 1
    %p54 = por %p52, %p53
    %p55 = scmp.ne.s32.totalorder %s44, %s45
    %p56 = scmp.eq.s32.totalorder %s22, 0
    %p57 = por %p55, %p56
    %p58 = scmp.ne.s32.totalorder %s44, %s45
    %p59 = scmp.eq.s32.totalorder %s23, 1
    %p60 = por %p58, %p59
    %p62 = scmp.ne.s32.totalorder %s45, %s61
    %p63 = scmp.eq.s32.totalorder %s23, 0
    %p64 = por %p62, %p63
    %s66 = sadd.s32 %s65, 1
    %p69 = scmp.eq.s32.totalorder %s17, 1
    %p70 = scmp.ne.s32.totalorder %s65, %s67
    %p71 = scmp.eq.s32.totalorder %s17, 0
    %p72 = por %p70, %p71
    %p73 = scmp.ne.s32.totalorder %s65, %s67
    %p74 = scmp.eq.s32.totalorder %s22, 1
    %p75 = por %p73, %p74
    %p76 = scmp.ne.s32.totalorder %s67, %s68
    %p77 = scmp.eq.s32.totalorder %s22, 0
    %p78 = por %p76, %p77
    %p79 = scmp.ne.s32.totalorder %s67, %s68
    %p80 = scmp.eq.s32.totalorder %s23, 1
    %p81 = por %p79, %p80
    %p83 = scmp.ne.s32.totalorder %s68, %s82
    %p84 = scmp.eq.s32.totalorder %s23, 0
    %p85 = por %p83, %p84
    %s87 = sadd.s32 %s86, 1
    %p90 = scmp.eq.s32.totalorder %s17, 1
    %p91 = scmp.ne.s32.totalorder %s86, %s88
    %p92 = scmp.eq.s32.totalorder %s17, 0
    %p93 = por %p91, %p92
    %p94 = scmp.ne.s32.totalorder %s86, %s88
    %p95 = scmp.eq.s32.totalorder %s22, 1
    %p96 = por %p94, %p95
    %p97 = scmp.ne.s32.totalorder %s88, %s89
    %p98 = scmp.eq.s32.totalorder %s22, 0
    %p99 = por %p97, %p98
    %p100 = scmp.ne.s32.totalorder %s88, %s89
    %p101 = scmp.eq.s32.totalorder %s23, 1
    %p102 = por %p100, %p101
    %p104 = scmp.ne.s32.totalorder %s89, %s103
    %p105 = scmp.eq.s32.totalorder %s23, 0
    %p106 = por %p104, %p105
    %s108 = sadd.s32 %s107, 1
    %p111 = scmp.eq.s32.totalorder %s17, 1
    %p112 = scmp.ne.s32.totalorder %s107, %s109
    %p113 = scmp.eq.s32.totalorder %s17, 0
    %p114 = por %p112, %p113
    %p115 = scmp.ne.s32.totalorder %s107, %s109
    %p116 = scmp.eq.s32.totalorder %s22, 1
    %p117 = por %p115, %p116
    %p118 = scmp.ne.s32.totalorder %s109, %s110
    %p119 = scmp.eq.s32.totalorder %s22, 0
    %p120 = por %p118, %p119
    %p121 = scmp.ne.s32.totalorder %s109, %s110
    %p122 = scmp.eq.s32.totalorder %s23, 1
    %p123 = por %p121, %p122
    %p125 = scmp.ne.s32.totalorder %s110, %s124
    %p126 = scmp.eq.s32.totalorder %s23, 0
    %p127 = por %p125, %p126
    %s129 = sadd.s32 %s128, 1
    %p132 = scmp.eq.s32.totalorder %s17, 1
    %p133 = scmp.ne.s32.totalorder %s128, %s130
    %p134 = scmp.eq.s32.totalorder %s17, 0
    %p135 = por %p133, %p134
    %p136 = scmp.ne.s32.totalorder %s128, %s130
    %p137 = scmp.eq.s32.totalorder %s22, 1
    %p138 = por %p136, %p137
    %p139 = scmp.ne.s32.totalorder %s130, %s131
    %p140 = scmp.eq.s32.totalorder %s22, 0
    %p141 = por %p139, %p140
    %p142 = scmp.ne.s32.totalorder %s130, %s131
    %p143 = scmp.eq.s32.totalorder %s23, 1
    %p144 = por %p142, %p143
    %p146 = scmp.ne.s32.totalorder %s131, %s145
    %p147 = scmp.eq.s32.totalorder %s23, 0
    %p148 = por %p146, %p147
    %s150 = sadd.s32 %s149, 1
    %p153 = scmp.eq.s32.totalorder %s17, 1
    %p154 = scmp.ne.s32.totalorder %s149, %s151
    %p155 = scmp.eq.s32.totalorder %s17, 0
    %p156 = por %p154, %p155
    %p157 = scmp.ne.s32.totalorder %s149, %s151
    %p158 = scmp.eq.s32.totalorder %s22, 1
    %p159 = por %p157, %p158
    %p160 = scmp.ne.s32.totalorder %s151, %s152
    %p161 = scmp.eq.s32.totalorder %s22, 0
    %p162 = por %p160, %p161
    %p163 = scmp.ne.s32.totalorder %s151, %s152
    %p164 = scmp.eq.s32.totalorder %s23, 1
    %p165 = por %p163, %p164
    %p167 = scmp.ne.s32.totalorder %s152, %s166
    %p168 = scmp.eq.s32.totalorder %s23, 0
    %p169 = por %p167, %p168
    %s171 = sadd.s32 %s170, 1
    %p174 = scmp.eq.s32.totalorder %s17, 1
    %p175 = scmp.ne.s32.totalorder %s170, %s172
    %p176 = scmp.eq.s32.totalorder %s17, 0
    %p177 = por %p175, %p176
    %p178 = scmp.ne.s32.totalorder %s170, %s172
    %p179 = scmp.eq.s32.totalorder %s22, 1
    %p180 = por %p178, %p179
    %p181 = scmp.ne.s32.totalorder %s172, %s173
    %p182 = scmp.eq.s32.totalorder %s22, 0
    %p183 = por %p181, %p182
    %p184 = scmp.ne.s32.totalorder %s172, %s173
    %p185 = scmp.eq.s32.totalorder %s23, 1
    %p186 = por %p184, %p185
    %p188 = scmp.ne.s32.totalorder %s173, %s187
    %p189 = scmp.eq.s32.totalorder %s23, 0
    %p190 = por %p188, %p189
    %s192 = sadd.s32 %s191, 1
    %p195 = scmp.eq.s32.totalorder %s17, 1
    %p196 = scmp.ne.s32.totalorder %s191, %s193
    %p197 = scmp.eq.s32.totalorder %s17, 0
    %p198 = por %p196, %p197
    %p199 = scmp.ne.s32.totalorder %s191, %s193
    %p200 = scmp.eq.s32.totalorder %s22, 1
    %p201 = por %p199, %p200
    %p202 = scmp.ne.s32.totalorder %s193, %s194
    %p203 = scmp.eq.s32.totalorder %s22, 0
    %p204 = por %p202, %p203
    %p205 = scmp.ne.s32.totalorder %s193, %s194
    %p206 = scmp.eq.s32.totalorder %s23, 1
    %p207 = por %p205, %p206
    %p209 = scmp.ne.s32.totalorder %s194, %s208
    %p210 = scmp.eq.s32.totalorder %s23, 0
    %p211 = por %p209, %p210
    %s212 = ssub.s32 %s25, %s32
    %s213 = ssub.s32 %s24, %s36
    %s214 = sor.u32 %s212, %s213
    %p215 = scmp.eq.s32.totalorder %s214, 0
    %s217 = sadd.s32 %s216, 1
    %s218 = scalar_select %p215, %s216, %s217
    %p221 = pneg %p215
    %p222 = scmp.eq.s32.totalorder %s17, 1
    %p223 = por %p221, %p222
    %p224 = scmp.ne.s32.totalorder %s216, %s219
    %p225 = scmp.eq.s32.totalorder %s17, 0
    %p226 = por %p224, %p225
    %p227 = scmp.ne.s32.totalorder %s216, %s219
    %p228 = scmp.eq.s32.totalorder %s22, 1
    %p229 = por %p227, %p228
    %p230 = scmp.ne.s32.totalorder %s219, %s220
    %p231 = scmp.eq.s32.totalorder %s22, 0
    %p232 = por %p230, %p231
    %p233 = scmp.ne.s32.totalorder %s219, %s220
    %p234 = scmp.eq.s32.totalorder %s23, 1
    %p235 = por %p233, %p234
    %p237 = scmp.ne.s32.totalorder %s220, %s236
    %p238 = scmp.eq.s32.totalorder %s23, 0
    %p239 = por %p237, %p238
    %s240 = ssub.s32 %s25, %s32
    %s241 = ssub.s32 %s24, %s36
    %s242 = sor.u32 %s240, %s241
    %p243 = scmp.eq.s32.totalorder %s242, 0
    %s245 = sadd.s32 %s244, 1
    %s246 = scalar_select %p243, %s244, %s245
    %p249 = pneg %p243
    %p250 = scmp.eq.s32.totalorder %s17, 1
    %p251 = por %p249, %p250
    %p252 = scmp.ne.s32.totalorder %s244, %s247
    %p253 = scmp.eq.s32.totalorder %s17, 0
    %p254 = por %p252, %p253
    %p255 = scmp.ne.s32.totalorder %s244, %s247
    %p256 = scmp.eq.s32.totalorder %s22, 1
    %p257 = por %p255, %p256
    %p258 = scmp.ne.s32.totalorder %s247, %s248
    %p259 = scmp.eq.s32.totalorder %s22, 0
    %p260 = por %p258, %p259
    %p261 = scmp.ne.s32.totalorder %s247, %s248
    %p262 = scmp.eq.s32.totalorder %s23, 1
    %p263 = por %p261, %p262
    %p265 = scmp.ne.s32.totalorder %s248, %s264
    %p266 = scmp.eq.s32.totalorder %s23, 0
    %p267 = por %p265, %p266
    %s268 = ssub.s32 %s25, %s32
    %s269 = ssub.s32 %s24, %s36
    %s270 = sor.u32 %s268, %s269
    %p271 = scmp.eq.s32.totalorder %s270, 0
    %s273 = sadd.s32 %s272, 1
    %s274 = scalar_select %p271, %s272, %s273
    %p277 = pneg %p271
    %p278 = scmp.eq.s32.totalorder %s17, 1
    %p279 = por %p277, %p278
    %p280 = scmp.ne.s32.totalorder %s272, %s275
    %p281 = scmp.eq.s32.totalorder %s17, 0
    %p282 = por %p280, %p281
    %p283 = scmp.ne.s32.totalorder %s272, %s275
    %p284 = scmp.eq.s32.totalorder %s22, 1
    %p285 = por %p283, %p284
    %p286 = scmp.ne.s32.totalorder %s275, %s276
    %p287 = scmp.eq.s32.totalorder %s22, 0
    %p288 = por %p286, %p287
    %p289 = scmp.ne.s32.totalorder %s275, %s276
    %p290 = scmp.eq.s32.totalorder %s23, 1
    %p291 = por %p289, %p290
    %p293 = scmp.ne.s32.totalorder %s276, %s292
    %p294 = scmp.eq.s32.totalorder %s23, 0
    %p295 = por %p293, %p294
    %p296 = scmp.le.s32.totalorder 1, %s17
    %p297 = scmp.lt.s32.totalorder %s17, 3
    %p298 = pnand %p296, %p297
    %p299 = pneg %p298
    // Predicated region
    $region9: #{audio_encoder_forward.11} parent=5 // pred_check
      _
    $region10: #{audio_encoder_forward.11} parent=5 // pred_check_branch
      %301 = sbr.rel (%p298) target = $region12
    $region11: #{audio_encoder_forward.11} parent=5 // pred_region
      %s302 = ssub.s32 %s17, 1
      // Predicated region
      $region13: #{audio_encoder_forward.11} parent=11 // pred_check
        %p303 = pneg %p78
      $region14: #{audio_encoder_forward.11} parent=11 // pred_check_branch
        %305 = sbr.rel (%p303) target = $region16
      $region15: #{audio_encoder_forward.11} parent=11 // pred_region
        _
      $region16: #{audio_encoder_forward.11} parent=11 // pred_fallthru
        _
      // Predicated region
      $region17: #{audio_encoder_forward.11} parent=11 // pred_check
        %p306 = pneg %p99
      $region18: #{audio_encoder_forward.11} parent=11 // pred_check_branch
        %308 = sbr.rel (%p306) target = $region20
      $region19: #{audio_encoder_forward.11} parent=11 // pred_region
        _
      $region20: #{audio_encoder_forward.11} parent=11 // pred_fallthru
        _
      // Predicated region
      $region21: #{audio_encoder_forward.11} parent=11 // pred_check
        %p309 = pneg %p120
      $region22: #{audio_encoder_forward.11} parent=11 // pred_check_branch
        %311 = sbr.rel (%p309) target = $region24
      $region23: #{audio_encoder_forward.11} parent=11 // pred_region
        _
      $region24: #{audio_encoder_forward.11} parent=11 // pred_fallthru
        _
      // Predicated region
      $region25: #{audio_encoder_forward.11} parent=11 // pred_check
        %p312 = pneg %p141
      $region26: #{audio_encoder_forward.11} parent=11 // pred_check_branch
        %314 = sbr.rel (%p312) target = $region28
      $region27: #{audio_encoder_forward.11} parent=11 // pred_region
        _
      $region28: #{audio_encoder_forward.11} parent=11 // pred_fallthru
        _
      // Predicated region
      $region29: #{audio_encoder_forward.11} parent=11 // pred_check
        %p315 = pneg %p162
      $region30: #{audio_encoder_forward.11} parent=11 // pred_check_branch
        %317 = sbr.rel (%p315) target = $region32
      $region31: #{audio_encoder_forward.11} parent=11 // pred_region
        _
      $region32: #{audio_encoder_forward.11} parent=11 // pred_fallthru
        _
      // Predicated region
      $region33: #{audio_encoder_forward.11} parent=11 // pred_check
        %p318 = pneg %p183
      $region34: #{audio_encoder_forward.11} parent=11 // pred_check_branch
        %320 = sbr.rel (%p318) target = $region36
      $region35: #{audio_encoder_forward.11} parent=11 // pred_region
        _
      $region36: #{audio_encoder_forward.11} parent=11 // pred_fallthru
        _
      // Predicated region
      $region37: #{audio_encoder_forward.11} parent=11 // pred_check
        %p321 = pneg %p204
      $region38: #{audio_encoder_forward.11} parent=11 // pred_check_branch
        %323 = sbr.rel (%p321) target = $region40
      $region39: #{audio_encoder_forward.11} parent=11 // pred_region
        _
      $region40: #{audio_encoder_forward.11} parent=11 // pred_fallthru
        _
    $region12: #{audio_encoder_forward.11} parent=5 // pred_fallthru
      _
    %p324 = scmp.lt.s32.totalorder %s17, 2
    // Predicated region
    $region41: #{audio_encoder_forward.11} parent=5 // pred_check
      %p325 = pneg %p324
    $region42: #{audio_encoder_forward.11} parent=5 // pred_check_branch
      %327 = sbr.rel (%p325) target = $region44
    $region43: #{audio_encoder_forward.11} parent=5 // pred_region
      // Predicated region
      $region45: #{audio_encoder_forward.11} parent=43 // pred_check
        %p328 = pneg %p51
      $region46: #{audio_encoder_forward.11} parent=43 // pred_check_branch
        %330 = sbr.rel (%p328) target = $region48
      $region47: #{audio_encoder_forward.11} parent=43 // pred_region
        %s331 = smul.u32 2, %s24
        %p332 = scmp.lt.s32.totalorder %s25, 1
        %s333 = scalar_select %p332, %s25, 1
        %p334 = scmp.lt.s32.totalorder %s331, 1
        %s335 = scalar_select %p334, %s331, 1
        %s336 = smul.addr %s333, 2
        %s337 = sadd.s32 %s335, %s336
        %s338 = smul.addr %s337, 8
        %s339 = scalar_lea.vmem %s0, %s338
        %s340 = smul.u32 2, %s24
      $region48: #{audio_encoder_forward.11} parent=43 // pred_fallthru
        _
    $region44: #{audio_encoder_forward.11} parent=5 // pred_fallthru
      _
    %p341 = scmp.le.s32.totalorder 1, %s17
    %p342 = scmp.lt.s32.totalorder %s17, 3
    %p343 = pnand %p341, %p342
    %p344 = pneg %p343
    // Predicated region
    $region49: #{audio_encoder_forward.11} parent=5 // pred_check
      _
    $region50: #{audio_encoder_forward.11} parent=5 // pred_check_branch
      %346 = sbr.rel (%p343) target = $region52
    $region51: #{audio_encoder_forward.11} parent=5 // pred_region
      %s347 = ssub.s32 %s17, 1
      %s348 = smul.u32 2, %s26
      %p349 = scmp.lt.s32.totalorder %s27, 1
      %s350 = scalar_select %p349, %s27, 1
      %p351 = scmp.lt.s32.totalorder %s348, 1
      %s352 = scalar_select %p351, %s348, 1
      %s353 = smul.addr %s350, 2
      %s354 = sadd.s32 %s352, %s353
      %s355 = smul.addr %s354, 8
      %s356 = scalar_lea.vmem %s0, %s355
      %p357 = pneg %p57
      %p358 = pneg %p54
      %p359 = pneg %p78
      %p360 = pneg %p75
      %p361 = pneg %p99
      %p362 = pneg %p96
      %p363 = pneg %p120
      %p364 = pneg %p117
      %p365 = pneg %p141
      %p366 = pneg %p138
      %p367 = pneg %p162
      %p368 = pneg %p159
      %p369 = pneg %p183
      %p370 = pneg %p180
      %p371 = pneg %p204
      %p372 = pneg %p201
      %p373 = pneg %p232
      %p374 = pneg %p229
      %s375 = smul.u32 2, %s26
      %p376 = scmp.lt.s32.totalorder %s27, 1
      %s377 = scalar_select %p376, %s27, 1
      %p378 = scmp.lt.s32.totalorder %s375, 1
      %s379 = scalar_select %p378, %s375, 1
      %s380 = smul.addr %s377, 2
      %s381 = sadd.s32 %s379, %s380
      %s382 = smul.addr %s381, 4
      %s383 = scalar_lea.vmem %s8, %s382
      %p384 = pneg %p260
      %p385 = pneg %p257
      %s386 = smul.u32 2, %s26
      %p387 = scmp.lt.s32.totalorder %s27, 1
      %s388 = scalar_select %p387, %s27, 1
      %p389 = scmp.lt.s32.totalorder %s386, 1
      %s390 = scalar_select %p389, %s386, 1
      %s391 = smul.addr %s388, 2
      %s392 = sadd.s32 %s390, %s391
      %s393 = smul.addr %s392, 4
      %s394 = scalar_lea.vmem %s9, %s393
      %p395 = pneg %p288
      %p396 = pneg %p285
      %s397 = smul.u32 2, %s26
      %p398 = scmp.lt.s32.totalorder %s27, 1
      %s399 = scalar_select %p398, %s27, 1
      %p400 = scmp.lt.s32.totalorder %s397, 1
      %s401 = scalar_select %p400, %s397, 1
      %s402 = smul.addr %s399, 2
      %s403 = sadd.s32 %s401, %s402
      %s404 = smul.addr %s403, 4
      %s405 = scalar_lea.vmem %s10, %s404
      %s406 = smul.u32 2, %s26
      %p407 = scmp.lt.s32.totalorder %s27, 1
      %s408 = scalar_select %p407, %s27, 1
      %p409 = scmp.lt.s32.totalorder %s406, 1
      %s410 = scalar_select %p409, %s406, 1
      %s411 = smul.addr %s408, 2
      %s412 = sadd.s32 %s410, %s411
      %s413 = smul.addr %s412, 8
      %s414 = scalar_lea.vmem %s0, %s413
      %s415 = smul.u32 2, %s26
      %s416 = smul.u32 2, %s26
      %p417 = scmp.lt.s32.totalorder %s27, 1
      %s418 = scalar_select %p417, %s27, 1
      %p419 = scmp.lt.s32.totalorder %s416, 1
      %s420 = scalar_select %p419, %s416, 1
      %s421 = smul.addr %s418, 2
      %s422 = sadd.s32 %s420, %s421
      %s423 = smul.addr %s422, 4
      %s424 = scalar_lea.vmem %s8, %s423
      %s425 = smul.u32 2, %s26
      %s426 = smul.u32 2, %s26
      %p427 = scmp.lt.s32.totalorder %s27, 1
      %s428 = scalar_select %p427, %s27, 1
      %p429 = scmp.lt.s32.totalorder %s426, 1
      %s430 = scalar_select %p429, %s426, 1
      %s431 = smul.addr %s428, 2
      %s432 = sadd.s32 %s430, %s431
      %s433 = smul.addr %s432, 4
      %s434 = scalar_lea.vmem %s9, %s433
      %s435 = smul.u32 2, %s26
      %s436 = smul.u32 2, %s26
      %p437 = scmp.lt.s32.totalorder %s27, 1
      %s438 = scalar_select %p437, %s27, 1
      %p439 = scmp.lt.s32.totalorder %s436, 1
      %s440 = scalar_select %p439, %s436, 1
      %s441 = smul.addr %s438, 2
      %s442 = sadd.s32 %s440, %s441
      %s443 = smul.addr %s442, 4
      %s444 = scalar_lea.vmem %s10, %s443
      %s445 = smul.u32 2, %s26
      %v447 = vld [vmem:[%s414] sm:$0xff]
      %v448 = vld [vmem:[%s414 + $0x8] sm:$0xff]
      %v449 = vld [vmem:[%s1] sm:$0x1]
      %v450 = vld [vmem:[%s2] sm:$0x1]
      %vm451 = vcmask 261120
      %v452 = vsel %vm451, %v447, 0.0
      %453 = vadd.xlane.f32.xlu0 %v452
      %v454 = vpop.xlane.xlu0 %453
      %v455 = vsel %vm451, %v448, 0.0
      %456 = vadd.xlane.f32.xlu0 %v455
      %v457 = vpop.xlane.xlu0 %456
      %v458 = vrcp.pop 32.0
      %v459 = vmul.f32 %v454, %v458
      %v460 = vmul.f32 %v457, %v458
      %v461 = vsub.f32 %v447, %v459
      %v462 = vsub.f32 %v448, %v460
      %v463 = vmul.f32 %v461, %v461
      %v464 = vmul.f32 %v462, %v462
      %v465 = vsel %vm451, %v463, 0.0
      %466 = vadd.xlane.f32.xlu0 %v465
      %v467 = vpop.xlane.xlu0 %466
      %v468 = vsel %vm451, %v464, 0.0
      %469 = vadd.xlane.f32.xlu0 %v468
      %v470 = vpop.xlane.xlu0 %469
      %v471 = vmul.f32 %v467, %v458
      %v472 = vmul.f32 %v470, %v458
      %v473 = vadd.f32 %v471, 1e-05
      %v474 = vadd.f32 %v472, 1e-05
      %v475 = vrsqrt.pop %v473
      %v476 = vrsqrt.pop %v474
      %v477 = vmul.f32 %v461, %v475
      %v478 = vmul.f32 %v462, %v476
      %v480 = vlaneseq
      %v481 = vshrl.u32 %v480, 7
      %v482 = vsub.s32 0, %v481
      %v483 = vrot.slane %v449, %v482
      %v485 = vmul.f32 %v477, %v483
      %v486 = vmul.f32 %v478, %v483
      %v488 = vlaneseq
      %v489 = vshrl.u32 %v488, 7
      %v490 = vsub.s32 0, %v489
      %v491 = vrot.slane %v450, %v490
      %v493 = vadd.f32 %v485, %v491
      %v494 = vadd.f32 %v486, %v491
      %v495 = vpack.c.bf16 %v494, %v493
      %v496 = vld [vmem:[%s3] sm:$0xf]
      %v497 = vld [vmem:[%s3 + $0x4] sm:$0xf]
      %v498 = vld [vmem:[%s3 + $0x8] sm:$0xf]
      %v499 = vld [vmem:[%s3 + $0xc] sm:$0xf]
      %v500 = vld [vmem:[%s4] sm:$0x1]
      %v502 = vlaneseq
      %v503 = vshrl.u32 %v502, 7
      %v504 = vsub.s32 0, %v503
      %v505 = vrot.slane %v500, %v504
      %v511 = vunpack.c.l.b16 %v496
      %v512 = vunpack.c.l.b16 %v497
      %v513 = vunpack.c.l.b16 %v498
      %v514 = vunpack.c.l.b16 %v499
      %v515 = vpack.c.b16 %v512, %v511
      %v516 = vpack.c.b16 %v514, %v513
      %v520 = vsel %vm451, %v495, 0
      %522 = vmatprep.subr.bf16.mxu0 0
      %523 = vmatpush1.bf16.msra.mxu0 %v515
      %524 = vmatprep.subr.bf16.mxu0 0
      %525 = vmatpush1.bf16.msra.mxu0 %v516
      %526 = vmatprep.subr.bf16.mxu0 0
      %527 = vmatpush1.bf16.msra.mxu0 0
      %528 = vmatprep.subr.bf16.mxu0 0
      %529 = vmatpush1.bf16.msra.mxu0 0
      %530 = vmatprep.subr.bf16.mxu0 0
      %531 = vmatpush1.bf16.msra.mxu0 0
      %532 = vmatprep.subr.bf16.mxu0 0
      %533 = vmatpush1.bf16.msra.mxu0 0
      %534 = vmatprep.subr.bf16.mxu0 0
      %535 = vmatpush1.bf16.msra.mxu0 0
      %536 = vmatprep.subr.bf16.mxu0 0
      %537 = vmatpush1.bf16.msra.mxu0 0
      %538 = vmatprep.subr.bf16.mxu0 0
      %539 = vmatpush1.bf16.msra.mxu0 0
      %540 = vmatprep.subr.bf16.mxu0 0
      %541 = vmatpush1.bf16.msra.mxu0 0
      %542 = vmatprep.subr.bf16.mxu0 0
      %543 = vmatpush1.bf16.msra.mxu0 0
      %544 = vmatprep.subr.bf16.mxu0 0
      %545 = vmatpush1.bf16.msra.mxu0 0
      %546 = vmatprep.subr.bf16.mxu0 0
      %547 = vmatpush1.bf16.msra.mxu0 0
      %548 = vmatprep.subr.bf16.mxu0 0
      %549 = vmatpush1.bf16.msra.mxu0 0
      %550 = vmatprep.subr.bf16.mxu0 0
      %551 = vmatpush1.bf16.msra.mxu0 0
      %552 = vmatprep.subr.bf16.mxu0 0
      %553 = vmatpush1.bf16.msra.mxu0 0
      %554 = vmatprep.mubr.bf16.mxu0 0
      %555 = vmatmul.mubr.bf16.gmra.mrb[0].mxu0 %v520
      %v556 = vpop.f32.mrb[0].mxu0
      %v557 = vadd.f32 %v505, %v556
      %v558 = vpop.f32.mrb[0].mxu0
      %v559 = vpop.f32.mrb[0].mxu0
      %v560 = vadd.f32 %v505, %v559
      %v561 = vpop.f32.mrb[0].mxu0
      %562 = vdwg.mxu0
      %v563 = vpack.c.bf16 %v560, %v557
      %v565 = vunpack.c.l.b16 %v563
      %v566 = vunpack.c.h.b16 %v563
      %v567 = vpack.c.b16 %v565, %v565
      %v568 = vpack.c.b16 %v566, %v566
      %vm571 = vcmask 257024
      %572 = vst.msk [vmem:[%s424] sm:$0xf] %vm571, %v567
      %573 = vst.msk [vmem:[%s424 + $0x4] sm:$0xf] %vm571, %v568
      %v574 = vld [vmem:[%s5] sm:$0xf]
      %v575 = vld [vmem:[%s5 + $0x4] sm:$0xf]
      %v576 = vld [vmem:[%s5 + $0x8] sm:$0xf]
      %v577 = vld [vmem:[%s5 + $0xc] sm:$0xf]
      %v582 = vunpack.c.l.b16 %v574
      %v583 = vunpack.c.l.b16 %v575
      %v584 = vunpack.c.l.b16 %v576
      %v585 = vunpack.c.l.b16 %v577
      %v586 = vpack.c.b16 %v583, %v582
      %v587 = vpack.c.b16 %v585, %v584
      %590 = vmatprep.subr.bf16.mxu0 0
      %591 = vmatpush1.bf16.msra.mxu0 %v586
      %592 = vmatprep.subr.bf16.mxu0 0
      %593 = vmatpush1.bf16.msra.mxu0 %v587
      %594 = vmatprep.subr.bf16.mxu0 0
      %595 = vmatpush1.bf16.msra.mxu0 0
      %596 = vmatprep.subr.bf16.mxu0 0
      %597 = vmatpush1.bf16.msra.mxu0 0
      %598 = vmatprep.subr.bf16.mxu0 0
      %599 = vmatpush1.bf16.msra.mxu0 0
      %600 = vmatprep.subr.bf16.mxu0 0
      %601 = vmatpush1.bf16.msra.mxu0 0
      %602 = vmatprep.subr.bf16.mxu0 0
      %603 = vmatpush1.bf16.msra.mxu0 0
      %604 = vmatprep.subr.bf16.mxu0 0
      %605 = vmatpush1.bf16.msra.mxu0 0
      %606 = vmatprep.subr.bf16.mxu0 0
      %607 = vmatpush1.bf16.msra.mxu0 0
      %608 = vmatprep.subr.bf16.mxu0 0
      %609 = vmatpush1.bf16.msra.mxu0 0
      %610 = vmatprep.subr.bf16.mxu0 0
      %611 = vmatpush1.bf16.msra.mxu0 0
      %612 = vmatprep.subr.bf16.mxu0 0
      %613 = vmatpush1.bf16.msra.mxu0 0
      %614 = vmatprep.subr.bf16.mxu0 0
      %615 = vmatpush1.bf16.msra.mxu0 0
      %616 = vmatprep.subr.bf16.mxu0 0
      %617 = vmatpush1.bf16.msra.mxu0 0
      %618 = vmatprep.subr.bf16.mxu0 0
      %619 = vmatpush1.bf16.msra.mxu0 0
      %620 = vmatprep.subr.bf16.mxu0 0
      %621 = vmatpush1.bf16.msra.mxu0 0
      %622 = vmatprep.mubr.bf16.mxu0 0
      %623 = vmatmul.mubr.bf16.gmra.mrb[0].mxu0 %v520
      %v624 = vpop.f32.mrb[0].mxu0
      %v625 = vadd.f32 0.0, %v624
      %v626 = vpop.f32.mrb[0].mxu0
      %v627 = vpop.f32.mrb[0].mxu0
      %v628 = vadd.f32 0.0, %v627
      %v629 = vpop.f32.mrb[0].mxu0
      %630 = vdwg.mxu0
      %v631 = vpack.c.bf16 %v628, %v625
      %v633 = vunpack.c.l.b16 %v631
      %v634 = vunpack.c.h.b16 %v631
      %v635 = vpack.c.b16 %v633, %v633
      %v636 = vpack.c.b16 %v634, %v634
      %639 = vst.msk [vmem:[%s434] sm:$0xf] %vm571, %v635
      %640 = vst.msk [vmem:[%s434 + $0x4] sm:$0xf] %vm571, %v636
      %v641 = vld [vmem:[%s6] sm:$0xf]
      %v642 = vld [vmem:[%s6 + $0x4] sm:$0xf]
      %v643 = vld [vmem:[%s6 + $0x8] sm:$0xf]
      %v644 = vld [vmem:[%s6 + $0xc] sm:$0xf]
      %v645 = vld [vmem:[%s7] sm:$0x1]
      %v647 = vlaneseq
      %v648 = vshrl.u32 %v647, 7
      %v649 = vsub.s32 0, %v648
      %v650 = vrot.slane %v645, %v649
      %v656 = vunpack.c.l.b16 %v641
      %v657 = vunpack.c.l.b16 %v642
      %v658 = vunpack.c.l.b16 %v643
      %v659 = vunpack.c.l.b16 %v644
      %v660 = vpack.c.b16 %v657, %v656
      %v661 = vpack.c.b16 %v659, %v658
      %664 = vmatprep.subr.bf16.mxu0 0
      %665 = vmatpush1.bf16.msra.mxu0 %v660
      %666 = vmatprep.subr.bf16.mxu0 0
      %667 = vmatpush1.bf16.msra.mxu0 %v661
      %668 = vmatprep.subr.bf16.mxu0 0
      %669 = vmatpush1.bf16.msra.mxu0 0
      %670 = vmatprep.subr.bf16.mxu0 0
      %671 = vmatpush1.bf16.msra.mxu0 0
      %672 = vmatprep.subr.bf16.mxu0 0
      %673 = vmatpush1.bf16.msra.mxu0 0
      %674 = vmatprep.subr.bf16.mxu0 0
      %675 = vmatpush1.bf16.msra.mxu0 0
      %676 = vmatprep.subr.bf16.mxu0 0
      %677 = vmatpush1.bf16.msra.mxu0 0
      %678 = vmatprep.subr.bf16.mxu0 0
      %679 = vmatpush1.bf16.msra.mxu0 0
      %680 = vmatprep.subr.bf16.mxu0 0
      %681 = vmatpush1.bf16.msra.mxu0 0
      %682 = vmatprep.subr.bf16.mxu0 0
      %683 = vmatpush1.bf16.msra.mxu0 0
      %684 = vmatprep.subr.bf16.mxu0 0
      %685 = vmatpush1.bf16.msra.mxu0 0
      %686 = vmatprep.subr.bf16.mxu0 0
      %687 = vmatpush1.bf16.msra.mxu0 0
      %688 = vmatprep.subr.bf16.mxu0 0
      %689 = vmatpush1.bf16.msra.mxu0 0
      %690 = vmatprep.subr.bf16.mxu0 0
      %691 = vmatpush1.bf16.msra.mxu0 0
      %692 = vmatprep.subr.bf16.mxu0 0
      %693 = vmatpush1.bf16.msra.mxu0 0
      %694 = vmatprep.subr.bf16.mxu0 0
      %695 = vmatpush1.bf16.msra.mxu0 0
      %696 = vmatprep.mubr.bf16.mxu0 0
      %697 = vmatmul.mubr.bf16.gmra.mrb[0].mxu0 %v520
      %v698 = vpop.f32.mrb[0].mxu0
      %v699 = vadd.f32 %v650, %v698
      %v700 = vpop.f32.mrb[0].mxu0
      %v701 = vpop.f32.mrb[0].mxu0
      %v702 = vadd.f32 %v650, %v701
      %v703 = vpop.f32.mrb[0].mxu0
      %704 = vdwg.mxu0
      %v705 = vpack.c.bf16 %v702, %v699
      %v707 = vunpack.c.l.b16 %v705
      %v708 = vunpack.c.h.b16 %v705
      %v709 = vpack.c.b16 %v707, %v707
      %v710 = vpack.c.b16 %v708, %v708
      %713 = vst.msk [vmem:[%s444] sm:$0xf] %vm571, %v709
      %714 = vst.msk [vmem:[%s444 + $0x4] sm:$0xf] %vm571, %v710
      %s715 = smul.u32 2, %s26
      %p716 = scmp.lt.s32.totalorder %s27, 1
      %s717 = scalar_select %p716, %s27, 1
      %p718 = scmp.lt.s32.totalorder %s715, 1
      %s719 = scalar_select %p718, %s715, 1
      %s720 = smul.addr %s717, 2
      %s721 = sadd.s32 %s719, %s720
      %s722 = smul.addr %s721, 4
      %s723 = scalar_lea.vmem %s8, %s722
      %s724 = smul.u32 2, %s26
      %p725 = scmp.lt.s32.totalorder %s27, 1
      %s726 = scalar_select %p725, %s27, 1
      %p727 = scmp.lt.s32.totalorder %s724, 1
      %s728 = scalar_select %p727, %s724, 1
      %s729 = smul.addr %s726, 2
      %s730 = sadd.s32 %s728, %s729
      %s731 = smul.addr %s730, 4
      %s732 = scalar_lea.vmem %s9, %s731
      %s733 = smul.u32 2, %s26
      %p734 = scmp.lt.s32.totalorder %s27, 1
      %s735 = scalar_select %p734, %s27, 1
      %p736 = scmp.lt.s32.totalorder %s733, 1
      %s737 = scalar_select %p736, %s733, 1
      %s738 = smul.addr %s735, 2
      %s739 = sadd.s32 %s737, %s738
      %s740 = smul.addr %s739, 4
      %s741 = scalar_lea.vmem %s10, %s740
      // Predicated region
      $region53: #{audio_encoder_forward.11} parent=51 // pred_check
        %p742 = pneg %p229
      $region54: #{audio_encoder_forward.11} parent=51 // pred_check_branch
        %744 = sbr.rel (%p742) target = $region56
      $region55: #{audio_encoder_forward.11} parent=51 // pred_region
        %s745 = smul.u32 2, %s26
      $region56: #{audio_encoder_forward.11} parent=51 // pred_fallthru
        _
      // Predicated region
      $region57: #{audio_encoder_forward.11} parent=51 // pred_check
        %p746 = pneg %p257
      $region58: #{audio_encoder_forward.11} parent=51 // pred_check_branch
        %748 = sbr.rel (%p746) target = $region60
      $region59: #{audio_encoder_forward.11} parent=51 // pred_region
        %s749 = smul.u32 2, %s26
      $region60: #{audio_encoder_forward.11} parent=51 // pred_fallthru
        _
      // Predicated region
      $region61: #{audio_encoder_forward.11} parent=51 // pred_check
        %p750 = pneg %p285
      $region62: #{audio_encoder_forward.11} parent=51 // pred_check_branch
        %752 = sbr.rel (%p750) target = $region64
      $region63: #{audio_encoder_forward.11} parent=51 // pred_region
        %s753 = smul.u32 2, %s26
      $region64: #{audio_encoder_forward.11} parent=51 // pred_fallthru
        _
    $region52: #{audio_encoder_forward.11} parent=5 // pred_fallthru
      _
    %p754 = scmp.le.s32.totalorder 2, %s17
    // Predicated region
    $region65: #{audio_encoder_forward.11} parent=5 // pred_check
      %p755 = pneg %p754
    $region66: #{audio_encoder_forward.11} parent=5 // pred_check_branch
      %757 = sbr.rel (%p755) target = $region68
    $region67: #{audio_encoder_forward.11} parent=5 // pred_region
      %s758 = ssub.s32 %s17, 2
      // Predicated region
      $region69: #{audio_encoder_forward.11} parent=67 // pred_check
        %p759 = pneg %p235
      $region70: #{audio_encoder_forward.11} parent=67 // pred_check_branch
        %761 = sbr.rel (%p759) target = $region72
      $region71: #{audio_encoder_forward.11} parent=67 // pred_region
        %s762 = smul.u32 2, %s28
        %p763 = scmp.lt.s32.totalorder %s29, 1
        %s764 = scalar_select %p763, %s29, 1
        %p765 = scmp.lt.s32.totalorder %s762, 1
        %s766 = scalar_select %p765, %s762, 1
        %s767 = smul.addr %s764, 2
        %s768 = sadd.s32 %s766, %s767
        %s769 = smul.addr %s768, 4
        %s770 = scalar_lea.vmem %s8, %s769
      $region72: #{audio_encoder_forward.11} parent=67 // pred_fallthru
        _
      // Predicated region
      $region73: #{audio_encoder_forward.11} parent=67 // pred_check
        %p771 = pneg %p263
      $region74: #{audio_encoder_forward.11} parent=67 // pred_check_branch
        %773 = sbr.rel (%p771) target = $region76
      $region75: #{audio_encoder_forward.11} parent=67 // pred_region
        %s774 = smul.u32 2, %s28
        %p775 = scmp.lt.s32.totalorder %s29, 1
        %s776 = scalar_select %p775, %s29, 1
        %p777 = scmp.lt.s32.totalorder %s774, 1
        %s778 = scalar_select %p777, %s774, 1
        %s779 = smul.addr %s776, 2
        %s780 = sadd.s32 %s778, %s779
        %s781 = smul.addr %s780, 4
        %s782 = scalar_lea.vmem %s9, %s781
      $region76: #{audio_encoder_forward.11} parent=67 // pred_fallthru
        _
      // Predicated region
      $region77: #{audio_encoder_forward.11} parent=67 // pred_check
        %p783 = pneg %p291
      $region78: #{audio_encoder_forward.11} parent=67 // pred_check_branch
        %785 = sbr.rel (%p783) target = $region80
      $region79: #{audio_encoder_forward.11} parent=67 // pred_region
        %s786 = smul.u32 2, %s28
        %p787 = scmp.lt.s32.totalorder %s29, 1
        %s788 = scalar_select %p787, %s29, 1
        %p789 = scmp.lt.s32.totalorder %s786, 1
        %s790 = scalar_select %p789, %s786, 1
        %s791 = smul.addr %s788, 2
        %s792 = sadd.s32 %s790, %s791
        %s793 = smul.addr %s792, 4
        %s794 = scalar_lea.vmem %s10, %s793
      $region80: #{audio_encoder_forward.11} parent=67 // pred_fallthru
        _
    $region68: #{audio_encoder_forward.11} parent=5 // pred_fallthru
      _
  $region6: #{audio_encoder_forward.11} parent=0 // loop_footer
    %s21 = sadd.s32 1, %s17
  $region7: #{audio_encoder_forward.11} parent=0 // loop_footer_branch
    %16 = sbr.rel target = $region3
  $region8: #{audio_encoder_forward.11} parent=0 // loop_exit
    _

// kernel: audio_encoder_forward.10
$region0: #{audio_encoder_forward.10}
  #allocation0 [shape = 'u32[]', space=smem, size = 0x4, offset = 0x4, fixed_abs, tag = 'smem constant byte address 0x4 - core index']
  #allocation1 [shape = 'u32[144,128]{1,0:T(1,128)}', space=vmem, size = 0x12000, scoped, tag = 'internal scratch']
  %s0 = inlined_call_operand.vmem [shape: bf16[2,3,16,32], index: 0, kind: input, shape index: {}]
  %s1 = inlined_call_operand.vmem [shape: bf16[3,32,32], index: 1, kind: input, shape index: {}]
  %s2 = inlined_call_operand.vmem [shape: f32[1,32], index: 2, kind: input, shape index: {}]
  %s3 = inlined_call_operand.vmem [shape: f32[16,32], index: 3, kind: input, shape index: {}]
  %s4 = inlined_call_operand.vmem [shape: f32[2,16,32], index: 4, kind: output, shape index: {}]
  %s5 = sld [smem:[#allocation0]]
  $region49: #{audio_encoder_forward.10} parent=0
    _
  %s7 = ssub.s32 1, %s5
  %s8 = scalar_select 0, %s7, %s5
  loop: start=0, step=1, limit=4
  $region2: #{audio_encoder_forward.10} parent=0 // loop_pre_header
    _
  $region3: #{audio_encoder_forward.10} parent=0 // loop_header
    %s10 = sphi 0, %s14
    %p11 = scmp.ge.s32.totalorder %s10, 4
    %s17 = sphi 0, %s29
    %s18 = sphi 0, %s25
    %s19 = sphi 0, %s17
    %s20 = sphi 0, %s18
    %s21 = sphi 0, %s19
    %s22 = sphi 0, %s20
    %s34 = sphi 0, %s36
    %s37 = sphi 0, %s34
    %s38 = sphi 0, %s37
    %s54 = sphi 0, %s38
    %s58 = sphi 0, %s58
    %s60 = sphi 0, %s58
    %s61 = sphi 0, %s60
    %s75 = sphi 0, %s61
    %s79 = sphi 0, %s79
    %s81 = sphi 0, %s79
    %s82 = sphi 0, %s81
    %s96 = sphi 0, %s82
    %s102 = sphi 0, %s104
    %s105 = sphi 0, %s102
    %s106 = sphi 0, %s105
    %s122 = sphi 0, %s106
    %s130 = sphi 0, %s132
    %s133 = sphi 0, %s130
    %s134 = sphi 0, %s133
    %s150 = sphi 0, %s134
  $region4: #{audio_encoder_forward.10} parent=0 // loop_header_branch
    %13 = sbr.rel (%p11) target = $region8
  $region5: #{audio_encoder_forward.10} parent=0 // loop_body
    %s15 = ssub.s32 %s10, 1
    %s16 = ssub.s32 %s10, 2
    %s23 = sadd.s32 1, %s18
    %p24 = scmp.ge.s32.totalorder %s23, 2
    %s25 = scalar_select %p24, 0, %s23
    %s26 = sadd.s32 1, %s17
    %s27 = scalar_select %p24, %s26, %s17
    %p28 = scmp.ge.s32.totalorder %s27, 1
    %s29 = scalar_select %p28, 0, %s27
    %s30 = ssub.s32 %s18, %s25
    %s31 = ssub.s32 %s17, %s29
    %s32 = sor.u32 %s30, %s31
    %p33 = scmp.eq.s32.totalorder %s32, 0
    %s35 = sadd.s32 %s34, 1
    %s36 = scalar_select %p33, %s34, %s35
    %p39 = pneg %p33
    %p40 = scmp.eq.s32.totalorder %s10, 1
    %p41 = por %p39, %p40
    %p42 = scmp.ne.s32.totalorder %s34, %s37
    %p43 = scmp.eq.s32.totalorder %s10, 0
    %p44 = por %p42, %p43
    %p45 = scmp.ne.s32.totalorder %s34, %s37
    %p46 = scmp.eq.s32.totalorder %s15, 1
    %p47 = por %p45, %p46
    %p48 = scmp.ne.s32.totalorder %s37, %s38
    %p49 = scmp.eq.s32.totalorder %s15, 0
    %p50 = por %p48, %p49
    %p51 = scmp.ne.s32.totalorder %s37, %s38
    %p52 = scmp.eq.s32.totalorder %s16, 1
    %p53 = por %p51, %p52
    %p55 = scmp.ne.s32.totalorder %s38, %s54
    %p56 = scmp.eq.s32.totalorder %s16, 0
    %p57 = por %p55, %p56
    %s59 = sadd.s32 %s58, 1
    %p62 = scmp.eq.s32.totalorder %s10, 1
    %p63 = scmp.ne.s32.totalorder %s58, %s60
    %p64 = scmp.eq.s32.totalorder %s10, 0
    %p65 = por %p63, %p64
    %p66 = scmp.ne.s32.totalorder %s58, %s60
    %p67 = scmp.eq.s32.totalorder %s15, 1
    %p68 = por %p66, %p67
    %p69 = scmp.ne.s32.totalorder %s60, %s61
    %p70 = scmp.eq.s32.totalorder %s15, 0
    %p71 = por %p69, %p70
    %p72 = scmp.ne.s32.totalorder %s60, %s61
    %p73 = scmp.eq.s32.totalorder %s16, 1
    %p74 = por %p72, %p73
    %p76 = scmp.ne.s32.totalorder %s61, %s75
    %p77 = scmp.eq.s32.totalorder %s16, 0
    %p78 = por %p76, %p77
    %s80 = sadd.s32 %s79, 1
    %p83 = scmp.eq.s32.totalorder %s10, 1
    %p84 = scmp.ne.s32.totalorder %s79, %s81
    %p85 = scmp.eq.s32.totalorder %s10, 0
    %p86 = por %p84, %p85
    %p87 = scmp.ne.s32.totalorder %s79, %s81
    %p88 = scmp.eq.s32.totalorder %s15, 1
    %p89 = por %p87, %p88
    %p90 = scmp.ne.s32.totalorder %s81, %s82
    %p91 = scmp.eq.s32.totalorder %s15, 0
    %p92 = por %p90, %p91
    %p93 = scmp.ne.s32.totalorder %s81, %s82
    %p94 = scmp.eq.s32.totalorder %s16, 1
    %p95 = por %p93, %p94
    %p97 = scmp.ne.s32.totalorder %s82, %s96
    %p98 = scmp.eq.s32.totalorder %s16, 0
    %p99 = por %p97, %p98
    %s100 = ssub.s32 %s17, %s29
    %p101 = scmp.eq.s32.totalorder %s100, 0
    %s103 = sadd.s32 %s102, 1
    %s104 = scalar_select %p101, %s102, %s103
    %p107 = pneg %p101
    %p108 = scmp.eq.s32.totalorder %s10, 1
    %p109 = por %p107, %p108
    %p110 = scmp.ne.s32.totalorder %s102, %s105
    %p111 = scmp.eq.s32.totalorder %s10, 0
    %p112 = por %p110, %p111
    %p113 = scmp.ne.s32.totalorder %s102, %s105
    %p114 = scmp.eq.s32.totalorder %s15, 1
    %p115 = por %p113, %p114
    %p116 = scmp.ne.s32.totalorder %s105, %s106
    %p117 = scmp.eq.s32.totalorder %s15, 0
    %p118 = por %p116, %p117
    %p119 = scmp.ne.s32.totalorder %s105, %s106
    %p120 = scmp.eq.s32.totalorder %s16, 1
    %p121 = por %p119, %p120
    %p123 = scmp.ne.s32.totalorder %s106, %s122
    %p124 = scmp.eq.s32.totalorder %s16, 0
    %p125 = por %p123, %p124
    %s126 = ssub.s32 %s18, %s25
    %s127 = ssub.s32 %s17, %s29
    %s128 = sor.u32 %s126, %s127
    %p129 = scmp.eq.s32.totalorder %s128, 0
    %s131 = sadd.s32 %s130, 1
    %s132 = scalar_select %p129, %s130, %s131
    %p135 = pneg %p129
    %p136 = scmp.eq.s32.totalorder %s10, 1
    %p137 = por %p135, %p136
    %p138 = scmp.ne.s32.totalorder %s130, %s133
    %p139 = scmp.eq.s32.totalorder %s10, 0
    %p140 = por %p138, %p139
    %p141 = scmp.ne.s32.totalorder %s130, %s133
    %p142 = scmp.eq.s32.totalorder %s15, 1
    %p143 = por %p141, %p142
    %p144 = scmp.ne.s32.totalorder %s133, %s134
    %p145 = scmp.eq.s32.totalorder %s15, 0
    %p146 = por %p144, %p145
    %p147 = scmp.ne.s32.totalorder %s133, %s134
    %p148 = scmp.eq.s32.totalorder %s16, 1
    %p149 = por %p147, %p148
    %p151 = scmp.ne.s32.totalorder %s134, %s150
    %p152 = scmp.eq.s32.totalorder %s16, 0
    %p153 = por %p151, %p152
    %p154 = scmp.le.s32.totalorder 1, %s10
    %p155 = scmp.lt.s32.totalorder %s10, 3
    %p156 = pnand %p154, %p155
    %p157 = pneg %p156
    // Predicated region
    $region9: #{audio_encoder_forward.10} parent=5 // pred_check
      _
    $region10: #{audio_encoder_forward.10} parent=5 // pred_check_branch
      %159 = sbr.rel (%p156) target = $region12
    $region11: #{audio_encoder_forward.10} parent=5 // pred_region
      %s160 = ssub.s32 %s10, 1
      // Predicated region
      $region13: #{audio_encoder_forward.10} parent=11 // pred_check
        %p161 = pneg %p71
      $region14: #{audio_encoder_forward.10} parent=11 // pred_check_branch
        %163 = sbr.rel (%p161) target = $region16
      $region15: #{audio_encoder_forward.10} parent=11 // pred_region
        _
      $region16: #{audio_encoder_forward.10} parent=11 // pred_fallthru
        _
      // Predicated region
      $region17: #{audio_encoder_forward.10} parent=11 // pred_check
        %p164 = pneg %p92
      $region18: #{audio_encoder_forward.10} parent=11 // pred_check_branch
        %166 = sbr.rel (%p164) target = $region20
      $region19: #{audio_encoder_forward.10} parent=11 // pred_region
        _
      $region20: #{audio_encoder_forward.10} parent=11 // pred_fallthru
        _
      // Predicated region
      $region21: #{audio_encoder_forward.10} parent=11 // pred_check
        %p167 = pneg %p118
      $region22: #{audio_encoder_forward.10} parent=11 // pred_check_branch
        %169 = sbr.rel (%p167) target = $region24
      $region23: #{audio_encoder_forward.10} parent=11 // pred_region
        %s170 = smul.u32 2, %s19
        %p171 = scmp.lt.s32.totalorder %s170, 1
        %s172 = scalar_select %p171, %s170, 1
        %s173 = smul.addr %s172, 8
        %s174 = scalar_lea.vmem %s3, %s173
        %s175 = smul.u32 2, %s19
      $region24: #{audio_encoder_forward.10} parent=11 // pred_fallthru
        _
    $region12: #{audio_encoder_forward.10} parent=5 // pred_fallthru
      _
    %p176 = scmp.lt.s32.totalorder %s10, 2
    // Predicated region
    $region25: #{audio_encoder_forward.10} parent=5 // pred_check
      %p177 = pneg %p176
    $region26: #{audio_encoder_forward.10} parent=5 // pred_check_branch
      %179 = sbr.rel (%p177) target = $region28
    $region27: #{audio_encoder_forward.10} parent=5 // pred_region
      // Predicated region
      $region29: #{audio_encoder_forward.10} parent=27 // pred_check
        %p180 = pneg %p44
      $region30: #{audio_encoder_forward.10} parent=27 // pred_check_branch
        %182 = sbr.rel (%p180) target = $region32
      $region31: #{audio_encoder_forward.10} parent=27 // pred_region
        %s183 = smul.u32 2, %s17
        %p184 = scmp.lt.s32.totalorder %s18, 1
        %s185 = scalar_select %p184, %s18, 1
        %p186 = scmp.lt.s32.totalorder %s183, 1
        %s187 = scalar_select %p186, %s183, 1
        %s188 = smul.addr %s185, 6
        %s189 = sadd.s32 %s187, %s188
        %s190 = smul.addr %s189, 4
        %s191 = scalar_lea.vmem %s0, %s190
        %s192 = smul.u32 2, %s17
      $region32: #{audio_encoder_forward.10} parent=27 // pred_fallthru
        _
    $region28: #{audio_encoder_forward.10} parent=5 // pred_fallthru
      _
    %p193 = scmp.le.s32.totalorder 1, %s10
    %p194 = scmp.lt.s32.totalorder %s10, 3
    %p195 = pnand %p193, %p194
    %p196 = pneg %p195
    // Predicated region
    $region33: #{audio_encoder_forward.10} parent=5 // pred_check
      _
    $region34: #{audio_encoder_forward.10} parent=5 // pred_check_branch
      %198 = sbr.rel (%p195) target = $region36
    $region35: #{audio_encoder_forward.10} parent=5 // pred_region
      %s199 = ssub.s32 %s10, 1
      %s200 = smul.u32 2, %s19
      %p201 = scmp.lt.s32.totalorder %s20, 1
      %s202 = scalar_select %p201, %s20, 1
      %p203 = scmp.lt.s32.totalorder %s200, 1
      %s204 = scalar_select %p203, %s200, 1
      %s205 = smul.addr %s202, 6
      %s206 = sadd.s32 %s204, %s205
      %s207 = smul.addr %s206, 4
      %s208 = scalar_lea.vmem %s0, %s207
      %p209 = pneg %p50
      %p210 = pneg %p47
      %p211 = pneg %p71
      %p212 = pneg %p68
      %p213 = pneg %p92
      %p214 = pneg %p89
      %s215 = smul.u32 2, %s19
      %p216 = scmp.lt.s32.totalorder %s215, 1
      %s217 = scalar_select %p216, %s215, 1
      %s218 = smul.addr %s217, 8
      %s219 = scalar_lea.vmem %s3, %s218
      %p220 = pneg %p118
      %p221 = pneg %p115
      %p222 = pneg %p146
      %p223 = pneg %p143
      %s224 = smul.u32 2, %s19
      %p225 = scmp.lt.s32.totalorder %s20, 1
      %s226 = scalar_select %p225, %s20, 1
      %p227 = scmp.lt.s32.totalorder %s224, 1
      %s228 = scalar_select %p227, %s224, 1
      %s229 = smul.addr %s226, 2
      %s230 = sadd.s32 %s228, %s229
      %s231 = smul.addr %s230, 8
      %s232 = scalar_lea.vmem %s4, %s231
      %s233 = smul.u32 2, %s19
      %p234 = scmp.lt.s32.totalorder %s20, 1
      %s235 = scalar_select %p234, %s20, 1
      %p236 = scmp.lt.s32.totalorder %s233, 1
      %s237 = scalar_select %p236, %s233, 1
      %s238 = smul.addr %s235, 6
      %s239 = sadd.s32 %s237, %s238
      %s240 = smul.addr %s239, 4
      %s241 = scalar_lea.vmem %s0, %s240
      %s242 = smul.u32 2, %s19
      %s243 = smul.u32 2, %s19
      %p244 = scmp.lt.s32.totalorder %s243, 1
      %s245 = scalar_select %p244, %s243, 1
      %s246 = smul.addr %s245, 8
      %s247 = scalar_lea.vmem %s3, %s246
      %s248 = smul.u32 2, %s19
      %s249 = smul.u32 2, %s19
      %p250 = scmp.lt.s32.totalorder %s20, 1
      %s251 = scalar_select %p250, %s20, 1
      %p252 = scmp.lt.s32.totalorder %s249, 1
      %s253 = scalar_select %p252, %s249, 1
      %s254 = smul.addr %s251, 2
      %s255 = sadd.s32 %s253, %s254
      %s256 = smul.addr %s255, 8
      %s257 = scalar_lea.vmem %s4, %s256
      %s258 = smul.u32 2, %s19
      %v260 = vld [vmem:[%s241] sm:$0xf]
      %v261 = vld [vmem:[%s241 + $0x4] sm:$0xf]
      %v262 = vld [vmem:[%s1] sm:$0xf]
      %v263 = vld [vmem:[%s1 + $0x4] sm:$0xf]
      %v264 = vld [vmem:[%s1 + $0x8] sm:$0xf]
      %v265 = vld [vmem:[%s1 + $0xc] sm:$0xf]
      %s266 = scalar_lea.vmem %s241, 8
      %v267 = vld [vmem:[%s266] sm:$0xf]
      %v268 = vld [vmem:[%s266 + $0x4] sm:$0xf]
      %s269 = scalar_lea.vmem %s1, 16
      %v270 = vld [vmem:[%s269] sm:$0xf]
      %v271 = vld [vmem:[%s269 + $0x4] sm:$0xf]
      %v272 = vld [vmem:[%s269 + $0x8] sm:$0xf]
      %v273 = vld [vmem:[%s269 + $0xc] sm:$0xf]
      %v276 = vunpack.c.l.b16 %v267
      %v277 = vunpack.c.l.b16 %v268
      %v278 = vpack.c.b16 %v277, %v276
      %v283 = vunpack.c.l.b16 %v270
      %v284 = vunpack.c.l.b16 %v271
      %v285 = vunpack.c.l.b16 %v272
      %v286 = vunpack.c.l.b16 %v273
      %v287 = vpack.c.b16 %v284, %v283
      %v288 = vpack.c.b16 %v286, %v285
      %vm291 = vcmask 261120
      %v293 = vsel %vm291, %v278, 0
      %295 = vmatprep.subr.bf16.mxu0 0
      %296 = vmatpush1.bf16.msra.mxu0 %v287
      %297 = vmatprep.subr.bf16.mxu0 0
      %298 = vmatpush1.bf16.msra.mxu0 %v288
      %299 = vmatprep.subr.bf16.mxu0 0
      %300 = vmatpush1.bf16.msra.mxu0 0
      %301 = vmatprep.subr.bf16.mxu0 0
      %302 = vmatpush1.bf16.msra.mxu0 0
      %303 = vmatprep.subr.bf16.mxu0 0
      %304 = vmatpush1.bf16.msra.mxu0 0
      %305 = vmatprep.subr.bf16.mxu0 0
      %306 = vmatpush1.bf16.msra.mxu0 0
      %307 = vmatprep.subr.bf16.mxu0 0
      %308 = vmatpush1.bf16.msra.mxu0 0
      %309 = vmatprep.subr.bf16.mxu0 0
      %310 = vmatpush1.bf16.msra.mxu0 0
      %311 = vmatprep.subr.bf16.mxu0 0
      %312 = vmatpush1.bf16.msra.mxu0 0
      %313 = vmatprep.subr.bf16.mxu0 0
      %314 = vmatpush1.bf16.msra.mxu0 0
      %315 = vmatprep.subr.bf16.mxu0 0
      %316 = vmatpush1.bf16.msra.mxu0 0
      %317 = vmatprep.subr.bf16.mxu0 0
      %318 = vmatpush1.bf16.msra.mxu0 0
      %319 = vmatprep.subr.bf16.mxu0 0
      %320 = vmatpush1.bf16.msra.mxu0 0
      %321 = vmatprep.subr.bf16.mxu0 0
      %322 = vmatpush1.bf16.msra.mxu0 0
      %323 = vmatprep.subr.bf16.mxu0 0
      %324 = vmatpush1.bf16.msra.mxu0 0
      %325 = vmatprep.subr.bf16.mxu0 0
      %326 = vmatpush1.bf16.msra.mxu0 0
      %327 = vmatprep.mubr.bf16.mxu0 0
      %328 = vmatmul.mubr.bf16.gmra.mrb[0].mxu0 %v293
      %v329 = vpop.f32.mrb[0].mxu0
      %v330 = vadd.f32 0.0, %v329
      %v331 = vpop.f32.mrb[0].mxu0
      %v332 = vpop.f32.mrb[0].mxu0
      %v333 = vadd.f32 0.0, %v332
      %v334 = vpop.f32.mrb[0].mxu0
      %335 = vdwg.mxu0
      %v338 = vunpack.c.l.b16 %v260
      %v339 = vunpack.c.l.b16 %v261
      %v340 = vpack.c.b16 %v339, %v338
      %v345 = vunpack.c.l.b16 %v262
      %v346 = vunpack.c.l.b16 %v263
      %v347 = vunpack.c.l.b16 %v264
      %v348 = vunpack.c.l.b16 %v265
      %v349 = vpack.c.b16 %v346, %v345
      %v350 = vpack.c.b16 %v348, %v347
      %v354 = vsel %vm291, %v340, 0
      %356 = vmatprep.subr.bf16.mxu0 0
      %357 = vmatpush1.bf16.msra.mxu0 %v349
      %358 = vmatprep.subr.bf16.mxu0 0
      %359 = vmatpush1.bf16.msra.mxu0 %v350
      %360 = vmatprep.subr.bf16.mxu0 0
      %361 = vmatpush1.bf16.msra.mxu0 0
      %362 = vmatprep.subr.bf16.mxu0 0
      %363 = vmatpush1.bf16.msra.mxu0 0
      %364 = vmatprep.subr.bf16.mxu0 0
      %365 = vmatpush1.bf16.msra.mxu0 0
      %366 = vmatprep.subr.bf16.mxu0 0
      %367 = vmatpush1.bf16.msra.mxu0 0
      %368 = vmatprep.subr.bf16.mxu0 0
      %369 = vmatpush1.bf16.msra.mxu0 0
      %370 = vmatprep.subr.bf16.mxu0 0
      %371 = vmatpush1.bf16.msra.mxu0 0
      %372 = vmatprep.subr.bf16.mxu0 0
      %373 = vmatpush1.bf16.msra.mxu0 0
      %374 = vmatprep.subr.bf16.mxu0 0
      %375 = vmatpush1.bf16.msra.mxu0 0
      %376 = vmatprep.subr.bf16.mxu0 0
      %377 = vmatpush1.bf16.msra.mxu0 0
      %378 = vmatprep.subr.bf16.mxu0 0
      %379 = vmatpush1.bf16.msra.mxu0 0
      %380 = vmatprep.subr.bf16.mxu0 0
      %381 = vmatpush1.bf16.msra.mxu0 0
      %382 = vmatprep.subr.bf16.mxu0 0
      %383 = vmatpush1.bf16.msra.mxu0 0
      %384 = vmatprep.subr.bf16.mxu0 0
      %385 = vmatpush1.bf16.msra.mxu0 0
      %386 = vmatprep.subr.bf16.mxu0 0
      %387 = vmatpush1.bf16.msra.mxu0 0
      %388 = vmatprep.mubr.bf16.mxu0 0
      %389 = vmatmul.mubr.bf16.gmra.mrb[0].mxu0 %v354
      %v390 = vpop.f32.mrb[0].mxu0
      %v391 = vadd.f32 %v330, %v390
      %v392 = vpop.f32.mrb[0].mxu0
      %v393 = vpop.f32.mrb[0].mxu0
      %v394 = vadd.f32 %v333, %v393
      %v395 = vpop.f32.mrb[0].mxu0
      %396 = vdwg.mxu0
      %s397 = scalar_lea.vmem %s241, 16
      %v398 = vld [vmem:[%s397] sm:$0xf]
      %v399 = vld [vmem:[%s397 + $0x4] sm:$0xf]
      %s400 = scalar_lea.vmem %s1, 32
      %v401 = vld [vmem:[%s400] sm:$0xf]
      %v402 = vld [vmem:[%s400 + $0x4] sm:$0xf]
      %v403 = vld [vmem:[%s400 + $0x8] sm:$0xf]
      %v404 = vld [vmem:[%s400 + $0xc] sm:$0xf]
      %v407 = vunpack.c.l.b16 %v398
      %v408 = vunpack.c.l.b16 %v399
      %v409 = vpack.c.b16 %v408, %v407
      %v414 = vunpack.c.l.b16 %v401
      %v415 = vunpack.c.l.b16 %v402
      %v416 = vunpack.c.l.b16 %v403
      %v417 = vunpack.c.l.b16 %v404
      %v418 = vpack.c.b16 %v415, %v414
      %v419 = vpack.c.b16 %v417, %v416
      %v423 = vsel %vm291, %v409, 0
      %425 = vmatprep.subr.bf16.mxu0 0
      %426 = vmatpush1.bf16.msra.mxu0 %v418
      %427 = vmatprep.subr.bf16.mxu0 0
      %428 = vmatpush1.bf16.msra.mxu0 %v419
      %429 = vmatprep.subr.bf16.mxu0 0
      %430 = vmatpush1.bf16.msra.mxu0 0
      %431 = vmatprep.subr.bf16.mxu0 0
      %432 = vmatpush1.bf16.msra.mxu0 0
      %433 = vmatprep.subr.bf16.mxu0 0
      %434 = vmatpush1.bf16.msra.mxu0 0
      %435 = vmatprep.subr.bf16.mxu0 0
      %436 = vmatpush1.bf16.msra.mxu0 0
      %437 = vmatprep.subr.bf16.mxu0 0
      %438 = vmatpush1.bf16.msra.mxu0 0
      %439 = vmatprep.subr.bf16.mxu0 0
      %440 = vmatpush1.bf16.msra.mxu0 0
      %441 = vmatprep.subr.bf16.mxu0 0
      %442 = vmatpush1.bf16.msra.mxu0 0
      %443 = vmatprep.subr.bf16.mxu0 0
      %444 = vmatpush1.bf16.msra.mxu0 0
      %445 = vmatprep.subr.bf16.mxu0 0
      %446 = vmatpush1.bf16.msra.mxu0 0
      %447 = vmatprep.subr.bf16.mxu0 0
      %448 = vmatpush1.bf16.msra.mxu0 0
      %449 = vmatprep.subr.bf16.mxu0 0
      %450 = vmatpush1.bf16.msra.mxu0 0
      %451 = vmatprep.subr.bf16.mxu0 0
      %452 = vmatpush1.bf16.msra.mxu0 0
      %453 = vmatprep.subr.bf16.mxu0 0
      %454 = vmatpush1.bf16.msra.mxu0 0
      %455 = vmatprep.subr.bf16.mxu0 0
      %456 = vmatpush1.bf16.msra.mxu0 0
      %457 = vmatprep.mubr.bf16.mxu0 0
      %458 = vmatmul.mubr.bf16.gmra.mrb[0].mxu0 %v423
      %v459 = vpop.f32.mrb[0].mxu0
      %v460 = vadd.f32 0.0, %v459
      %v461 = vpop.f32.mrb[0].mxu0
      %v462 = vpop.f32.mrb[0].mxu0
      %v463 = vadd.f32 0.0, %v462
      %v464 = vpop.f32.mrb[0].mxu0
      %465 = vdwg.mxu0
      %v466 = vadd.f32 %v391, %v460
      %v467 = vadd.f32 %v394, %v463
      %v468 = vld [vmem:[%s2] sm:$0x1]
      %v470 = vlaneseq
      %v471 = vshrl.u32 %v470, 7
      %v472 = vsub.s32 0, %v471
      %v473 = vrot.slane %v468, %v472
      %v475 = vadd.f32 %v466, %v473
      %v476 = vadd.f32 %v467, %v473
      %v477 = vmul.f32 %v475, 0.5
      %v478 = vmul.f32 %v476, 0.5
      %v479 = vrcp.pop 1.4142135
      %v480 = vmul.f32 %v475, %v479
      %v481 = vmul.f32 %v476, %v479
      %v482 = verf.f32.pop %v480
      %v483 = verf.f32.pop %v481
      %v484 = vadd.f32 %v482, 1.0
      %v485 = vadd.f32 %v483, 1.0
      %v486 = vmul.f32 %v477, %v484
      %v487 = vmul.f32 %v478, %v485
      %v488 = vld [vmem:[%s247] sm:$0xff]
      %v489 = vld [vmem:[%s247 + $0x8] sm:$0xff]
      %v490 = vadd.f32 %v486, %v488
      %v491 = vadd.f32 %v487, %v489
      %492 = vst.msk [vmem:[%s257] sm:$0xff] %vm291, %v490
      %493 = vst.msk [vmem:[%s257 + $0x8] sm:$0xff] %vm291, %v491
      %s494 = smul.u32 2, %s19
      %p495 = scmp.lt.s32.totalorder %s20, 1
      %s496 = scalar_select %p495, %s20, 1
      %p497 = scmp.lt.s32.totalorder %s494, 1
      %s498 = scalar_select %p497, %s494, 1
      %s499 = smul.addr %s496, 2
      %s500 = sadd.s32 %s498, %s499
      %s501 = smul.addr %s500, 8
      %s502 = scalar_lea.vmem %s4, %s501
      // Predicated region
      $region37: #{audio_encoder_forward.10} parent=35 // pred_check
        %p503 = pneg %p143
      $region38: #{audio_encoder_forward.10} parent=35 // pred_check_branch
        %505 = sbr.rel (%p503) target = $region40
      $region39: #{audio_encoder_forward.10} parent=35 // pred_region
        %s506 = smul.u32 2, %s19
      $region40: #{audio_encoder_forward.10} parent=35 // pred_fallthru
        _
    $region36: #{audio_encoder_forward.10} parent=5 // pred_fallthru
      _
    %p507 = scmp.le.s32.totalorder 2, %s10
    // Predicated region
    $region41: #{audio_encoder_forward.10} parent=5 // pred_check
      %p508 = pneg %p507
    $region42: #{audio_encoder_forward.10} parent=5 // pred_check_branch
      %510 = sbr.rel (%p508) target = $region44
    $region43: #{audio_encoder_forward.10} parent=5 // pred_region
      %s511 = ssub.s32 %s10, 2
      // Predicated region
      $region45: #{audio_encoder_forward.10} parent=43 // pred_check
        %p512 = pneg %p149
      $region46: #{audio_encoder_forward.10} parent=43 // pred_check_branch
        %514 = sbr.rel (%p512) target = $region48
      $region47: #{audio_encoder_forward.10} parent=43 // pred_region
        %s515 = smul.u32 2, %s21
        %p516 = scmp.lt.s32.totalorder %s22, 1
        %s517 = scalar_select %p516, %s22, 1
        %p518 = scmp.lt.s32.totalorder %s515, 1
        %s519 = scalar_select %p518, %s515, 1
        %s520 = smul.addr %s517, 2
        %s521 = sadd.s32 %s519, %s520
        %s522 = smul.addr %s521, 8
        %s523 = scalar_lea.vmem %s4, %s522
      $region48: #{audio_encoder_forward.10} parent=43 // pred_fallthru
        _
    $region44: #{audio_encoder_forward.10} parent=5 // pred_fallthru
      _
  $region6: #{audio_encoder_forward.10} parent=0 // loop_footer
    %s14 = sadd.s32 1, %s10
  $region7: #{audio_encoder_forward.10} parent=0 // loop_footer_branch
    %9 = sbr.rel target = $region3
  $region8: #{audio_encoder_forward.10} parent=0 // loop_exit
    _

// kernel: audio_encoder_forward.9
$region0: #{audio_encoder_forward.9}
  #allocation0 [shape = 'u32[]', space=smem, size = 0x4, offset = 0x4, fixed_abs, tag = 'smem constant byte address 0x4 - core index']
  #allocation1 [shape = 'u32[144,128]{1,0:T(1,128)}', space=vmem, size = 0x12000, scoped, tag = 'internal scratch']
  %s0 = inlined_call_operand.vmem [shape: bf16[2,3,24,8], index: 0, kind: input, shape index: {}]
  %s1 = inlined_call_operand.vmem [shape: bf16[3,8,32], index: 1, kind: input, shape index: {}]
  %s2 = inlined_call_operand.vmem [shape: f32[1,32], index: 2, kind: input, shape index: {}]
  %s3 = inlined_call_operand.vmem [shape: bf16[2,24,32], index: 3, kind: output, shape index: {}]
  %s4 = sld [smem:[#allocation0]]
  $region45: #{audio_encoder_forward.9} parent=0
    _
  %s6 = ssub.s32 1, %s4
  %s7 = scalar_select 0, %s6, %s4
  loop: start=0, step=1, limit=4
  $region2: #{audio_encoder_forward.9} parent=0 // loop_pre_header
    _
  $region3: #{audio_encoder_forward.9} parent=0 // loop_header
    %s9 = sphi 0, %s13
    %p10 = scmp.ge.s32.totalorder %s9, 4
    %s16 = sphi 0, %s28
    %s17 = sphi 0, %s24
    %s18 = sphi 0, %s16
    %s19 = sphi 0, %s17
    %s20 = sphi 0, %s18
    %s21 = sphi 0, %s19
    %s33 = sphi 0, %s35
    %s36 = sphi 0, %s33
    %s37 = sphi 0, %s36
    %s53 = sphi 0, %s37
    %s57 = sphi 0, %s57
    %s59 = sphi 0, %s57
    %s60 = sphi 0, %s59
    %s74 = sphi 0, %s60
    %s78 = sphi 0, %s78
    %s80 = sphi 0, %s78
    %s81 = sphi 0, %s80
    %s95 = sphi 0, %s81
    %s103 = sphi 0, %s105
    %s106 = sphi 0, %s103
    %s107 = sphi 0, %s106
    %s123 = sphi 0, %s107
  $region4: #{audio_encoder_forward.9} parent=0 // loop_header_branch
    %12 = sbr.rel (%p10) target = $region8
  $region5: #{audio_encoder_forward.9} parent=0 // loop_body
    %s14 = ssub.s32 %s9, 1
    %s15 = ssub.s32 %s9, 2
    %s22 = sadd.s32 1, %s17
    %p23 = scmp.ge.s32.totalorder %s22, 2
    %s24 = scalar_select %p23, 0, %s22
    %s25 = sadd.s32 1, %s16
    %s26 = scalar_select %p23, %s25, %s16
    %p27 = scmp.ge.s32.totalorder %s26, 1
    %s28 = scalar_select %p27, 0, %s26
    %s29 = ssub.s32 %s17, %s24
    %s30 = ssub.s32 %s16, %s28
    %s31 = sor.u32 %s29, %s30
    %p32 = scmp.eq.s32.totalorder %s31, 0
    %s34 = sadd.s32 %s33, 1
    %s35 = scalar_select %p32, %s33, %s34
    %p38 = pneg %p32
    %p39 = scmp.eq.s32.totalorder %s9, 1
    %p40 = por %p38, %p39
    %p41 = scmp.ne.s32.totalorder %s33, %s36
    %p42 = scmp.eq.s32.totalorder %s9, 0
    %p43 = por %p41, %p42
    %p44 = scmp.ne.s32.totalorder %s33, %s36
    %p45 = scmp.eq.s32.totalorder %s14, 1
    %p46 = por %p44, %p45
    %p47 = scmp.ne.s32.totalorder %s36, %s37
    %p48 = scmp.eq.s32.totalorder %s14, 0
    %p49 = por %p47, %p48
    %p50 = scmp.ne.s32.totalorder %s36, %s37
    %p51 = scmp.eq.s32.totalorder %s15, 1
    %p52 = por %p50, %p51
    %p54 = scmp.ne.s32.totalorder %s37, %s53
    %p55 = scmp.eq.s32.totalorder %s15, 0
    %p56 = por %p54, %p55
    %s58 = sadd.s32 %s57, 1
    %p61 = scmp.eq.s32.totalorder %s9, 1
    %p62 = scmp.ne.s32.totalorder %s57, %s59
    %p63 = scmp.eq.s32.totalorder %s9, 0
    %p64 = por %p62, %p63
    %p65 = scmp.ne.s32.totalorder %s57, %s59
    %p66 = scmp.eq.s32.totalorder %s14, 1
    %p67 = por %p65, %p66
    %p68 = scmp.ne.s32.totalorder %s59, %s60
    %p69 = scmp.eq.s32.totalorder %s14, 0
    %p70 = por %p68, %p69
    %p71 = scmp.ne.s32.totalorder %s59, %s60
    %p72 = scmp.eq.s32.totalorder %s15, 1
    %p73 = por %p71, %p72
    %p75 = scmp.ne.s32.totalorder %s60, %s74
    %p76 = scmp.eq.s32.totalorder %s15, 0
    %p77 = por %p75, %p76
    %s79 = sadd.s32 %s78, 1
    %p82 = scmp.eq.s32.totalorder %s9, 1
    %p83 = scmp.ne.s32.totalorder %s78, %s80
    %p84 = scmp.eq.s32.totalorder %s9, 0
    %p85 = por %p83, %p84
    %p86 = scmp.ne.s32.totalorder %s78, %s80
    %p87 = scmp.eq.s32.totalorder %s14, 1
    %p88 = por %p86, %p87
    %p89 = scmp.ne.s32.totalorder %s80, %s81
    %p90 = scmp.eq.s32.totalorder %s14, 0
    %p91 = por %p89, %p90
    %p92 = scmp.ne.s32.totalorder %s80, %s81
    %p93 = scmp.eq.s32.totalorder %s15, 1
    %p94 = por %p92, %p93
    %p96 = scmp.ne.s32.totalorder %s81, %s95
    %p97 = scmp.eq.s32.totalorder %s15, 0
    %p98 = por %p96, %p97
    %s99 = ssub.s32 %s17, %s24
    %s100 = ssub.s32 %s16, %s28
    %s101 = sor.u32 %s99, %s100
    %p102 = scmp.eq.s32.totalorder %s101, 0
    %s104 = sadd.s32 %s103, 1
    %s105 = scalar_select %p102, %s103, %s104
    %p108 = pneg %p102
    %p109 = scmp.eq.s32.totalorder %s9, 1
    %p110 = por %p108, %p109
    %p111 = scmp.ne.s32.totalorder %s103, %s106
    %p112 = scmp.eq.s32.totalorder %s9, 0
    %p113 = por %p111, %p112
    %p114 = scmp.ne.s32.totalorder %s103, %s106
    %p115 = scmp.eq.s32.totalorder %s14, 1
    %p116 = por %p114, %p115
    %p117 = scmp.ne.s32.totalorder %s106, %s107
    %p118 = scmp.eq.s32.totalorder %s14, 0
    %p119 = por %p117, %p118
    %p120 = scmp.ne.s32.totalorder %s106, %s107
    %p121 = scmp.eq.s32.totalorder %s15, 1
    %p122 = por %p120, %p121
    %p124 = scmp.ne.s32.totalorder %s107, %s123
    %p125 = scmp.eq.s32.totalorder %s15, 0
    %p126 = por %p124, %p125
    %p127 = scmp.le.s32.totalorder 1, %s9
    %p128 = scmp.lt.s32.totalorder %s9, 3
    %p129 = pnand %p127, %p128
    %p130 = pneg %p129
    // Predicated region
    $region9: #{audio_encoder_forward.9} parent=5 // pred_check
      _
    $region10: #{audio_encoder_forward.9} parent=5 // pred_check_branch
      %132 = sbr.rel (%p129) target = $region12
    $region11: #{audio_encoder_forward.9} parent=5 // pred_region
      %s133 = ssub.s32 %s9, 1
      // Predicated region
      $region13: #{audio_encoder_forward.9} parent=11 // pred_check
        %p134 = pneg %p70
      $region14: #{audio_encoder_forward.9} parent=11 // pred_check_branch
        %136 = sbr.rel (%p134) target = $region16
      $region15: #{audio_encoder_forward.9} parent=11 // pred_region
        _
      $region16: #{audio_encoder_forward.9} parent=11 // pred_fallthru
        _
      // Predicated region
      $region17: #{audio_encoder_forward.9} parent=11 // pred_check
        %p137 = pneg %p91
      $region18: #{audio_encoder_forward.9} parent=11 // pred_check_branch
        %139 = sbr.rel (%p137) target = $region20
      $region19: #{audio_encoder_forward.9} parent=11 // pred_region
        _
      $region20: #{audio_encoder_forward.9} parent=11 // pred_fallthru
        _
    $region12: #{audio_encoder_forward.9} parent=5 // pred_fallthru
      _
    %p140 = scmp.lt.s32.totalorder %s9, 2
    // Predicated region
    $region21: #{audio_encoder_forward.9} parent=5 // pred_check
      %p141 = pneg %p140
    $region22: #{audio_encoder_forward.9} parent=5 // pred_check_branch
      %143 = sbr.rel (%p141) target = $region24
    $region23: #{audio_encoder_forward.9} parent=5 // pred_region
      // Predicated region
      $region25: #{audio_encoder_forward.9} parent=23 // pred_check
        %p144 = pneg %p43
      $region26: #{audio_encoder_forward.9} parent=23 // pred_check_branch
        %146 = sbr.rel (%p144) target = $region28
      $region27: #{audio_encoder_forward.9} parent=23 // pred_region
        %s147 = smul.u32 3, %s16
        %p148 = scmp.lt.s32.totalorder %s17, 1
        %s149 = scalar_select %p148, %s17, 1
        %p150 = scmp.lt.s32.totalorder %s147, 2
        %s151 = scalar_select %p150, %s147, 2
        %s152 = smul.addr %s149, 9
        %s153 = sadd.s32 %s151, %s152
        %s154 = smul.addr %s153, 4
        %s155 = scalar_lea.vmem %s0, %s154
        %s156 = smul.u32 3, %s16
      $region28: #{audio_encoder_forward.9} parent=23 // pred_fallthru
        _
    $region24: #{audio_encoder_forward.9} parent=5 // pred_fallthru
      _
    %p157 = scmp.le.s32.totalorder 1, %s9
    %p158 = scmp.lt.s32.totalorder %s9, 3
    %p159 = pnand %p157, %p158
    %p160 = pneg %p159
    // Predicated region
    $region29: #{audio_encoder_forward.9} parent=5 // pred_check
      _
    $region30: #{audio_encoder_forward.9} parent=5 // pred_check_branch
      %162 = sbr.rel (%p159) target = $region32
    $region31: #{audio_encoder_forward.9} parent=5 // pred_region
      %s163 = ssub.s32 %s9, 1
      %s164 = smul.u32 3, %s18
      %p165 = scmp.lt.s32.totalorder %s19, 1
      %s166 = scalar_select %p165, %s19, 1
      %p167 = scmp.lt.s32.totalorder %s164, 2
      %s168 = scalar_select %p167, %s164, 2
      %s169 = smul.addr %s166, 9
      %s170 = sadd.s32 %s168, %s169
      %s171 = smul.addr %s170, 4
      %s172 = scalar_lea.vmem %s0, %s171
      %p173 = pneg %p49
      %p174 = pneg %p46
      %p175 = pneg %p70
      %p176 = pneg %p67
      %p177 = pneg %p91
      %p178 = pneg %p88
      %p179 = pneg %p119
      %p180 = pneg %p116
      %s181 = smul.u32 3, %s18
      %p182 = scmp.lt.s32.totalorder %s19, 1
      %s183 = scalar_select %p182, %s19, 1
      %p184 = scmp.lt.s32.totalorder %s181, 2
      %s185 = scalar_select %p184, %s181, 2
      %s186 = smul.addr %s183, 3
      %s187 = sadd.s32 %s185, %s186
      %s188 = smul.addr %s187, 4
      %s189 = scalar_lea.vmem %s3, %s188
      %s190 = smul.u32 3, %s18
      %p191 = scmp.lt.s32.totalorder %s19, 1
      %s192 = scalar_select %p191, %s19, 1
      %p193 = scmp.lt.s32.totalorder %s190, 2
      %s194 = scalar_select %p193, %s190, 2
      %s195 = smul.addr %s192, 9
      %s196 = sadd.s32 %s194, %s195
      %s197 = smul.addr %s196, 4
      %s198 = scalar_lea.vmem %s0, %s197
      %s199 = smul.u32 3, %s18
      %s200 = smul.u32 3, %s18
      %p201 = scmp.lt.s32.totalorder %s19, 1
      %s202 = scalar_select %p201, %s19, 1
      %p203 = scmp.lt.s32.totalorder %s200, 2
      %s204 = scalar_select %p203, %s200, 2
      %s205 = smul.addr %s202, 3
      %s206 = sadd.s32 %s204, %s205
      %s207 = smul.addr %s206, 4
      %s208 = scalar_lea.vmem %s3, %s207
      %s209 = smul.u32 3, %s18
      %v211 = vld [vmem:[%s198] sm:$0xf]
      %v212 = vld [vmem:[%s198 + $0x4] sm:$0xf]
      %v213 = vld [vmem:[%s198 + $0x8] sm:$0xf]
      %v214 = vld [vmem:[%s1] sm:$0xf]
      %s215 = scalar_lea.vmem %s198, 12
      %v216 = vld [vmem:[%s215] sm:$0xf]
      %v217 = vld [vmem:[%s215 + $0x4] sm:$0xf]
      %v218 = vld [vmem:[%s215 + $0x8] sm:$0xf]
      %s219 = scalar_lea.vmem %s1, 4
      %v220 = vld [vmem:[%s219] sm:$0xf]
      %v224 = vunpack.c.l.b16 %v216
      %v225 = vunpack.c.l.b16 %v217
      %v226 = vunpack.c.l.b16 %v218
      %v227 = vpack.c.b16 %v225, %v224
      %v228 = vpack.c.b16 %v226, %v226
      %vm229 = vcmask 64512
      %v231 = vsel %vm229, %v227, 0
      %v234 = vsel %vm229, %v228, 0
      %vm236 = vcmask 1043456
      %v238 = vsel %vm236, %v220, 0
      %240 = vmatprep.subr.bf16.mxu0 0
      %241 = vmatpush1.bf16.msra.mxu0 %v238
      %242 = vmatprep.subr.bf16.mxu0 0
      %243 = vmatpush1.bf16.msra.mxu0 0
      %244 = vmatprep.subr.bf16.mxu0 0
      %245 = vmatpush1.bf16.msra.mxu0 0
      %246 = vmatprep.subr.bf16.mxu0 0
      %247 = vmatpush1.bf16.msra.mxu0 0
      %248 = vmatprep.subr.bf16.mxu0 0
      %249 = vmatpush1.bf16.msra.mxu0 0
      %250 = vmatprep.subr.bf16.mxu0 0
      %251 = vmatpush1.bf16.msra.mxu0 0
      %252 = vmatprep.subr.bf16.mxu0 0
      %253 = vmatpush1.bf16.msra.mxu0 0
      %254 = vmatprep.subr.bf16.mxu0 0
      %255 = vmatpush1.bf16.msra.mxu0 0
      %256 = vmatprep.subr.bf16.mxu0 0
      %257 = vmatpush1.bf16.msra.mxu0 0
      %258 = vmatprep.subr.bf16.mxu0 0
      %259 = vmatpush1.bf16.msra.mxu0 0
      %260 = vmatprep.subr.bf16.mxu0 0
      %261 = vmatpush1.bf16.msra.mxu0 0
      %262 = vmatprep.subr.bf16.mxu0 0
      %263 = vmatpush1.bf16.msra.mxu0 0
      %264 = vmatprep.subr.bf16.mxu0 0
      %265 = vmatpush1.bf16.msra.mxu0 0
      %266 = vmatprep.subr.bf16.mxu0 0
      %267 = vmatpush1.bf16.msra.mxu0 0
      %268 = vmatprep.subr.bf16.mxu0 0
      %269 = vmatpush1.bf16.msra.mxu0 0
      %270 = vmatprep.subr.bf16.mxu0 0
      %271 = vmatpush1.bf16.msra.mxu0 0
      %272 = vmatprep.mubr.bf16.mxu0 0
      %273 = vmatmul.mubr.bf16.gmra.mrb[0].mxu0 %v231
      %v274 = vpop.f32.mrb[0].mxu0
      %v275 = vadd.f32 0.0, %v274
      %v276 = vpop.f32.mrb[0].mxu0
      %v277 = vpop.f32.mrb[0].mxu0
      %v278 = vadd.f32 0.0, %v277
      %v279 = vpop.f32.mrb[0].mxu0
      %280 = vmatprep.mubr.bf16.mxu0 0
      %281 = vmatmul.mubr.bf16.gmra.mrb[0].mxu0 %v234
      %v282 = vpop.f32.mrb[0].mxu0
      %v283 = vadd.f32 0.0, %v282
      %v284 = vpop.f32.mrb[0].mxu0
      %v285 = vpop.f32.mrb[0].mxu0
      %v286 = vpop.f32.mrb[0].mxu0
      %287 = vdwg.mxu0
      %v291 = vunpack.c.l.b16 %v211
      %v292 = vunpack.c.l.b16 %v212
      %v293 = vunpack.c.l.b16 %v213
      %v294 = vpack.c.b16 %v292, %v291
      %v295 = vpack.c.b16 %v293, %v293
      %v297 = vsel %vm229, %v294, 0
      %v300 = vsel %vm229, %v295, 0
      %v303 = vsel %vm236, %v214, 0
      %305 = vmatprep.subr.bf16.mxu0 0
      %306 = vmatpush1.bf16.msra.mxu0 %v303
      %307 = vmatprep.subr.bf16.mxu0 0
      %308 = vmatpush1.bf16.msra.mxu0 0
      %309 = vmatprep.subr.bf16.mxu0 0
      %310 = vmatpush1.bf16.msra.mxu0 0
      %311 = vmatprep.subr.bf16.mxu0 0
      %312 = vmatpush1.bf16.msra.mxu0 0
      %313 = vmatprep.subr.bf16.mxu0 0
      %314 = vmatpush1.bf16.msra.mxu0 0
      %315 = vmatprep.subr.bf16.mxu0 0
      %316 = vmatpush1.bf16.msra.mxu0 0
      %317 = vmatprep.subr.bf16.mxu0 0
      %318 = vmatpush1.bf16.msra.mxu0 0
      %319 = vmatprep.subr.bf16.mxu0 0
      %320 = vmatpush1.bf16.msra.mxu0 0
      %321 = vmatprep.subr.bf16.mxu0 0
      %322 = vmatpush1.bf16.msra.mxu0 0
      %323 = vmatprep.subr.bf16.mxu0 0
      %324 = vmatpush1.bf16.msra.mxu0 0
      %325 = vmatprep.subr.bf16.mxu0 0
      %326 = vmatpush1.bf16.msra.mxu0 0
      %327 = vmatprep.subr.bf16.mxu0 0
      %328 = vmatpush1.bf16.msra.mxu0 0
      %329 = vmatprep.subr.bf16.mxu0 0
      %330 = vmatpush1.bf16.msra.mxu0 0
      %331 = vmatprep.subr.bf16.mxu0 0
      %332 = vmatpush1.bf16.msra.mxu0 0
      %333 = vmatprep.subr.bf16.mxu0 0
      %334 = vmatpush1.bf16.msra.mxu0 0
      %335 = vmatprep.subr.bf16.mxu0 0
      %336 = vmatpush1.bf16.msra.mxu0 0
      %337 = vmatprep.mubr.bf16.mxu0 0
      %338 = vmatmul.mubr.bf16.gmra.mrb[0].mxu0 %v297
      %v339 = vpop.f32.mrb[0].mxu0
      %v340 = vadd.f32 %v275, %v339
      %v341 = vpop.f32.mrb[0].mxu0
      %v342 = vpop.f32.mrb[0].mxu0
      %v343 = vadd.f32 %v278, %v342
      %v344 = vpop.f32.mrb[0].mxu0
      %345 = vmatprep.mubr.bf16.mxu0 0
      %346 = vmatmul.mubr.bf16.gmra.mrb[0].mxu0 %v300
      %v347 = vpop.f32.mrb[0].mxu0
      %v348 = vadd.f32 %v283, %v347
      %v349 = vpop.f32.mrb[0].mxu0
      %v350 = vpop.f32.mrb[0].mxu0
      %v351 = vpop.f32.mrb[0].mxu0
      %352 = vdwg.mxu0
      %s353 = scalar_lea.vmem %s198, 24
      %v354 = vld [vmem:[%s353] sm:$0xf]
      %v355 = vld [vmem:[%s353 + $0x4] sm:$0xf]
      %v356 = vld [vmem:[%s353 + $0x8] sm:$0xf]
      %s357 = scalar_lea.vmem %s1, 8
      %v358 = vld [vmem:[%s357] sm:$0xf]
      %v362 = vunpack.c.l.b16 %v354
      %v363 = vunpack.c.l.b16 %v355
      %v364 = vunpack.c.l.b16 %v356
      %v365 = vpack.c.b16 %v363, %v362
      %v366 = vpack.c.b16 %v364, %v364
      %v368 = vsel %vm229, %v365, 0
      %v371 = vsel %vm229, %v366, 0
      %v374 = vsel %vm236, %v358, 0
      %376 = vmatprep.subr.bf16.mxu0 0
      %377 = vmatpush1.bf16.msra.mxu0 %v374
      %378 = vmatprep.subr.bf16.mxu0 0
      %379 = vmatpush1.bf16.msra.mxu0 0
      %380 = vmatprep.subr.bf16.mxu0 0
      %381 = vmatpush1.bf16.msra.mxu0 0
      %382 = vmatprep.subr.bf16.mxu0 0
      %383 = vmatpush1.bf16.msra.mxu0 0
      %384 = vmatprep.subr.bf16.mxu0 0
      %385 = vmatpush1.bf16.msra.mxu0 0
      %386 = vmatprep.subr.bf16.mxu0 0
      %387 = vmatpush1.bf16.msra.mxu0 0
      %388 = vmatprep.subr.bf16.mxu0 0
      %389 = vmatpush1.bf16.msra.mxu0 0
      %390 = vmatprep.subr.bf16.mxu0 0
      %391 = vmatpush1.bf16.msra.mxu0 0
      %392 = vmatprep.subr.bf16.mxu0 0
      %393 = vmatpush1.bf16.msra.mxu0 0
      %394 = vmatprep.subr.bf16.mxu0 0
      %395 = vmatpush1.bf16.msra.mxu0 0
      %396 = vmatprep.subr.bf16.mxu0 0
      %397 = vmatpush1.bf16.msra.mxu0 0
      %398 = vmatprep.subr.bf16.mxu0 0
      %399 = vmatpush1.bf16.msra.mxu0 0
      %400 = vmatprep.subr.bf16.mxu0 0
      %401 = vmatpush1.bf16.msra.mxu0 0
      %402 = vmatprep.subr.bf16.mxu0 0
      %403 = vmatpush1.bf16.msra.mxu0 0
      %404 = vmatprep.subr.bf16.mxu0 0
      %405 = vmatpush1.bf16.msra.mxu0 0
      %406 = vmatprep.subr.bf16.mxu0 0
      %407 = vmatpush1.bf16.msra.mxu0 0
      %408 = vmatprep.mubr.bf16.mxu0 0
      %409 = vmatmul.mubr.bf16.gmra.mrb[0].mxu0 %v368
      %v410 = vpop.f32.mrb[0].mxu0
      %v411 = vadd.f32 0.0, %v410
      %v412 = vpop.f32.mrb[0].mxu0
      %v413 = vpop.f32.mrb[0].mxu0
      %v414 = vadd.f32 0.0, %v413
      %v415 = vpop.f32.mrb[0].mxu0
      %416 = vmatprep.mubr.bf16.mxu0 0
      %417 = vmatmul.mubr.bf16.gmra.mrb[0].mxu0 %v371
      %v418 = vpop.f32.mrb[0].mxu0
      %v419 = vadd.f32 0.0, %v418
      %v420 = vpop.f32.mrb[0].mxu0
      %v421 = vpop.f32.mrb[0].mxu0
      %v422 = vpop.f32.mrb[0].mxu0
      %423 = vdwg.mxu0
      %v424 = vadd.f32 %v340, %v411
      %v425 = vadd.f32 %v343, %v414
      %v426 = vadd.f32 %v348, %v419
      %v427 = vld [vmem:[%s2] sm:$0x1]
      %v429 = vlaneseq
      %v430 = vshrl.u32 %v429, 7
      %v431 = vsub.s32 0, %v430
      %v432 = vrot.slane %v427, %v431
      %v434 = vadd.f32 %v424, %v432
      %v435 = vadd.f32 %v425, %v432
      %v436 = vadd.f32 %v426, %v432
      %v437 = vmul.f32 %v434, 0.5
      %v438 = vmul.f32 %v435, 0.5
      %v439 = vmul.f32 %v436, 0.5
      %v440 = vrcp.pop 1.4142135
      %v441 = vmul.f32 %v434, %v440
      %v442 = vmul.f32 %v435, %v440
      %v443 = vmul.f32 %v436, %v440
      %v444 = verf.f32.pop %v441
      %v445 = verf.f32.pop %v442
      %v446 = verf.f32.pop %v443
      %v447 = vadd.f32 %v444, 1.0
      %v448 = vadd.f32 %v445, 1.0
      %v449 = vadd.f32 %v446, 1.0
      %v450 = vmul.f32 %v437, %v447
      %v451 = vmul.f32 %v438, %v448
      %v452 = vmul.f32 %v439, %v449
      %v453 = vpack.c.bf16 %v451, %v450
      %v454 = vpack.c.bf16 %v452, %v452
      %v457 = vunpack.c.l.b16 %v453
      %v458 = vunpack.c.h.b16 %v453
      %v459 = vunpack.c.l.b16 %v454
      %v460 = vpack.c.b16 %v457, %v457
      %v461 = vpack.c.b16 %v458, %v458
      %v462 = vpack.c.b16 %v459, %v459
      %vm466 = vcmask 257024
      %467 = vst.msk [vmem:[%s208] sm:$0xf] %vm466, %v460
      %468 = vst.msk [vmem:[%s208 + $0x4] sm:$0xf] %vm466, %v461
      %469 = vst.msk [vmem:[%s208 + $0x8] sm:$0xf] %vm466, %v462
      %s470 = smul.u32 3, %s18
      %p471 = scmp.lt.s32.totalorder %s19, 1
      %s472 = scalar_select %p471, %s19, 1
      %p473 = scmp.lt.s32.totalorder %s470, 2
      %s474 = scalar_select %p473, %s470, 2
      %s475 = smul.addr %s472, 3
      %s476 = sadd.s32 %s474, %s475
      %s477 = smul.addr %s476, 4
      %s478 = scalar_lea.vmem %s3, %s477
      // Predicated region
      $region33: #{audio_encoder_forward.9} parent=31 // pred_check
        %p479 = pneg %p116
      $region34: #{audio_encoder_forward.9} parent=31 // pred_check_branch
        %481 = sbr.rel (%p479) target = $region36
      $region35: #{audio_encoder_forward.9} parent=31 // pred_region
        %s482 = smul.u32 3, %s18
      $region36: #{audio_encoder_forward.9} parent=31 // pred_fallthru
        _
    $region32: #{audio_encoder_forward.9} parent=5 // pred_fallthru
      _
    %p483 = scmp.le.s32.totalorder 2, %s9
    // Predicated region
    $region37: #{audio_encoder_forward.9} parent=5 // pred_check
      %p484 = pneg %p483
    $region38: #{audio_encoder_forward.9} parent=5 // pred_check_branch
      %486 = sbr.rel (%p484) target = $region40
    $region39: #{audio_encoder_forward.9} parent=5 // pred_region
      %s487 = ssub.s32 %s9, 2
      // Predicated region
      $region41: #{audio_encoder_forward.9} parent=39 // pred_check
        %p488 = pneg %p122
      $region42: #{audio_encoder_forward.9} parent=39 // pred_check_branch
        %490 = sbr.rel (%p488) target = $region44
      $region43: #{audio_encoder_forward.9} parent=39 // pred_region
        %s491 = smul.u32 3, %s20
        %p492 = scmp.lt.s32.totalorder %s21, 1
        %s493 = scalar_select %p492, %s21, 1
        %p494 = scmp.lt.s32.totalorder %s491, 2
        %s495 = scalar_select %p494, %s491, 2
        %s496 = smul.addr %s493, 3
        %s497 = sadd.s32 %s495, %s496
        %s498 = smul.addr %s497, 4
        %s499 = scalar_lea.vmem %s3, %s498
      $region44: #{audio_encoder_forward.9} parent=39 // pred_fallthru
        _
    $region40: #{audio_encoder_forward.9} parent=5 // pred_fallthru
      _
  $region6: #{audio_encoder_forward.9} parent=0 // loop_footer
    %s13 = sadd.s32 1, %s9
  $region7: #{audio_encoder_forward.9} parent=0 // loop_footer_branch
    %8 = sbr.rel target = $region3
  $region8: #{audio_encoder_forward.9} parent=0 // loop_exit
    _

// kernel: audio_encoder_forward.12
$region0: #{audio_encoder_forward.12}
  #allocation0 [shape = 'u32[]', space=smem, size = 0x4, offset = 0x4, fixed_abs, tag = 'smem constant byte address 0x4 - core index']
  #allocation1 [shape = 'u32[144,128]{1,0:T(1,128)}', space=vmem, size = 0x12000, scoped, tag = 'internal scratch']
  #allocation2 [shape = 'bf16[4,16,8]{2,1,0:T(16,128)(2,1)}', space=vmem, size = 0x4000, scoped, tag = 'scratch operand']
  #allocation3 [shape = 'bf16[4,16,8]{2,1,0:T(16,128)(2,1)}', space=vmem, size = 0x4000, scoped, tag = 'scratch operand']
  #allocation4 [shape = 'f32[4,16,1]{2,1,0:T(8,128)}', space=vmem, size = 0x8000, scoped, tag = 'scratch operand']
  #allocation5 [shape = 'f32[4,16,1]{2,1,0:T(8,128)}', space=vmem, size = 0x8000, scoped, tag = 'scratch operand']
  #allocation6 [shape = 'f32[4,16,8]{2,1,0:T(8,128)}', space=vmem, size = 0x8000, scoped, tag = 'scratch operand']
  %s0 = inlined_call_operand.vmem [shape: bf16[2,16,32], index: 0, kind: input, shape index: {}]
  %s1 = inlined_call_operand.vmem [shape: bf16[2,16,32], index: 1, kind: input, shape index: {}]
  %s2 = inlined_call_operand.vmem [shape: bf16[2,16,32], index: 2, kind: input, shape index: {}]
  %s3 = inlined_call_operand.vmem [shape: bf16[2,16,32], index: 3, kind: output, shape index: {}]
  %s4 = sld [smem:[#allocation0]]
  $region49: #{audio_encoder_forward.12} parent=0
    _
  %s6 = ssub.s32 1, %s4
  %s7 = scalar_select 0, %s6, %s4
  loop: start=0, step=1, limit=4
  $region2: #{audio_encoder_forward.12} parent=0 // loop_pre_header
    _
  $region3: #{audio_encoder_forward.12} parent=0 // loop_header
    %s9 = sphi 0, %s13
    %p10 = scmp.ge.s32.totalorder %s9, 4
    %s16 = sphi 0, %s35
    %s17 = sphi 0, %s31
    %s18 = sphi 0, %s27
    %s19 = sphi 0, %s16
    %s20 = sphi 0, %s17
    %s21 = sphi 0, %s18
    %s22 = sphi 0, %s19
    %s23 = sphi 0, %s20
    %s24 = sphi 0, %s21
    %s42 = sphi 0, %s44
    %s45 = sphi 0, %s42
    %s46 = sphi 0, %s45
    %s62 = sphi 0, %s46
    %s70 = sphi 0, %s72
    %s73 = sphi 0, %s70
    %s74 = sphi 0, %s73
    %s90 = sphi 0, %s74
    %s98 = sphi 0, %s100
    %s101 = sphi 0, %s98
    %s102 = sphi 0, %s101
    %s118 = sphi 0, %s102
    %s128 = sphi 0, %s130
    %s131 = sphi 0, %s128
    %s132 = sphi 0, %s131
    %s148 = sphi 0, %s132
  $region4: #{audio_encoder_forward.12} parent=0 // loop_header_branch
    %12 = sbr.rel (%p10) target = $region8
  $region5: #{audio_encoder_forward.12} parent=0 // loop_body
    %s14 = ssub.s32 %s9, 1
    %s15 = ssub.s32 %s9, 2
    %s25 = sadd.s32 1, %s18
    %p26 = scmp.ge.s32.totalorder %s25, 1
    %s27 = scalar_select %p26, 0, %s25
    %s28 = sadd.s32 1, %s17
    %s29 = scalar_select %p26, %s28, %s17
    %p30 = scmp.ge.s32.totalorder %s29, 1
    %s31 = scalar_select %p30, 0, %s29
    %s32 = sadd.s32 1, %s16
    %s33 = scalar_select %p30, %s32, %s16
    %p34 = scmp.ge.s32.totalorder %s33, 2
    %s35 = scalar_select %p34, 0, %s33
    %s36 = ssub.s32 %s16, %s35
    %s37 = ssub.s32 %s18, %s27
    %s38 = sor.u32 %s36, %s37
    %s39 = ssub.s32 %s17, %s31
    %s40 = sor.u32 %s38, %s39
    %p41 = scmp.eq.s32.totalorder %s40, 0
    %s43 = sadd.s32 %s42, 1
    %s44 = scalar_select %p41, %s42, %s43
    %p47 = pneg %p41
    %p48 = scmp.eq.s32.totalorder %s9, 1
    %p49 = por %p47, %p48
    %p50 = scmp.ne.s32.totalorder %s42, %s45
    %p51 = scmp.eq.s32.totalorder %s9, 0
    %p52 = por %p50, %p51
    %p53 = scmp.ne.s32.totalorder %s42, %s45
    %p54 = scmp.eq.s32.totalorder %s14, 1
    %p55 = por %p53, %p54
    %p56 = scmp.ne.s32.totalorder %s45, %s46
    %p57 = scmp.eq.s32.totalorder %s14, 0
    %p58 = por %p56, %p57
    %p59 = scmp.ne.s32.totalorder %s45, %s46
    %p60 = scmp.eq.s32.totalorder %s15, 1
    %p61 = por %p59, %p60
    %p63 = scmp.ne.s32.totalorder %s46, %s62
    %p64 = scmp.eq.s32.totalorder %s15, 0
    %p65 = por %p63, %p64
    %s66 = ssub.s32 %s16, %s35
    %s67 = ssub.s32 %s17, %s31
    %s68 = sor.u32 %s66, %s67
    %p69 = scmp.eq.s32.totalorder %s68, 0
    %s71 = sadd.s32 %s70, 1
    %s72 = scalar_select %p69, %s70, %s71
    %p75 = pneg %p69
    %p76 = scmp.eq.s32.totalorder %s9, 1
    %p77 = por %p75, %p76
    %p78 = scmp.ne.s32.totalorder %s70, %s73
    %p79 = scmp.eq.s32.totalorder %s9, 0
    %p80 = por %p78, %p79
    %p81 = scmp.ne.s32.totalorder %s70, %s73
    %p82 = scmp.eq.s32.totalorder %s14, 1
    %p83 = por %p81, %p82
    %p84 = scmp.ne.s32.totalorder %s73, %s74
    %p85 = scmp.eq.s32.totalorder %s14, 0
    %p86 = por %p84, %p85
    %p87 = scmp.ne.s32.totalorder %s73, %s74
    %p88 = scmp.eq.s32.totalorder %s15, 1
    %p89 = por %p87, %p88
    %p91 = scmp.ne.s32.totalorder %s74, %s90
    %p92 = scmp.eq.s32.totalorder %s15, 0
    %p93 = por %p91, %p92
    %s94 = ssub.s32 %s16, %s35
    %s95 = ssub.s32 %s17, %s31
    %s96 = sor.u32 %s94, %s95
    %p97 = scmp.eq.s32.totalorder %s96, 0
    %s99 = sadd.s32 %s98, 1
    %s100 = scalar_select %p97, %s98, %s99
    %p103 = pneg %p97
    %p104 = scmp.eq.s32.totalorder %s9, 1
    %p105 = por %p103, %p104
    %p106 = scmp.ne.s32.totalorder %s98, %s101
    %p107 = scmp.eq.s32.totalorder %s9, 0
    %p108 = por %p106, %p107
    %p109 = scmp.ne.s32.totalorder %s98, %s101
    %p110 = scmp.eq.s32.totalorder %s14, 1
    %p111 = por %p109, %p110
    %p112 = scmp.ne.s32.totalorder %s101, %s102
    %p113 = scmp.eq.s32.totalorder %s14, 0
    %p114 = por %p112, %p113
    %p115 = scmp.ne.s32.totalorder %s101, %s102
    %p116 = scmp.eq.s32.totalorder %s15, 1
    %p117 = por %p115, %p116
    %p119 = scmp.ne.s32.totalorder %s102, %s118
    %p120 = scmp.eq.s32.totalorder %s15, 0
    %p121 = por %p119, %p120
    %s122 = ssub.s32 %s16, %s35
    %s123 = ssub.s32 %s18, %s27
    %s124 = sor.u32 %s122, %s123
    %s125 = ssub.s32 %s17, %s31
    %s126 = sor.u32 %s124, %s125
    %p127 = scmp.eq.s32.totalorder %s126, 0
    %s129 = sadd.s32 %s128, 1
    %s130 = scalar_select %p127, %s128, %s129
    %p133 = pneg %p127
    %p134 = scmp.eq.s32.totalorder %s9, 1
    %p135 = por %p133, %p134
    %p136 = scmp.ne.s32.totalorder %s128, %s131
    %p137 = scmp.eq.s32.totalorder %s9, 0
    %p138 = por %p136, %p137
    %p139 = scmp.ne.s32.totalorder %s128, %s131
    %p140 = scmp.eq.s32.totalorder %s14, 1
    %p141 = por %p139, %p140
    %p142 = scmp.ne.s32.totalorder %s131, %s132
    %p143 = scmp.eq.s32.totalorder %s14, 0
    %p144 = por %p142, %p143
    %p145 = scmp.ne.s32.totalorder %s131, %s132
    %p146 = scmp.eq.s32.totalorder %s15, 1
    %p147 = por %p145, %p146
    %p149 = scmp.ne.s32.totalorder %s132, %s148
    %p150 = scmp.eq.s32.totalorder %s15, 0
    %p151 = por %p149, %p150
    %p152 = scmp.le.s32.totalorder 1, %s9
    %p153 = scmp.lt.s32.totalorder %s9, 3
    %p154 = pnand %p152, %p153
    %p155 = pneg %p154
    // Predicated region
    $region9: #{audio_encoder_forward.12} parent=5 // pred_check
      _
    $region10: #{audio_encoder_forward.12} parent=5 // pred_check_branch
      %157 = sbr.rel (%p154) target = $region12
    $region11: #{audio_encoder_forward.12} parent=5 // pred_region
      %s158 = ssub.s32 %s9, 1
    $region12: #{audio_encoder_forward.12} parent=5 // pred_fallthru
      _
    %p159 = scmp.lt.s32.totalorder %s9, 2
    // Predicated region
    $region13: #{audio_encoder_forward.12} parent=5 // pred_check
      %p160 = pneg %p159
    $region14: #{audio_encoder_forward.12} parent=5 // pred_check_branch
      %162 = sbr.rel (%p160) target = $region16
    $region15: #{audio_encoder_forward.12} parent=5 // pred_region
      // Predicated region
      $region17: #{audio_encoder_forward.12} parent=15 // pred_check
        %p163 = pneg %p52
      $region18: #{audio_encoder_forward.12} parent=15 // pred_check_branch
        %165 = sbr.rel (%p163) target = $region20
      $region19: #{audio_encoder_forward.12} parent=15 // pred_region
        %s166 = smul.u32 2, %s18
        %p167 = scmp.lt.s32.totalorder %s16, 1
        %s168 = scalar_select %p167, %s16, 1
        %p169 = scmp.lt.s32.totalorder %s166, 1
        %s170 = scalar_select %p169, %s166, 1
        %p171 = scmp.lt.s32.totalorder %s17, 0
        %s172 = scalar_select %p171, %s17, 0
        %s173 = sadd.s32 %s172, %s170
        %s174 = smul.addr %s168, 2
        %s175 = sadd.s32 %s173, %s174
        %s176 = smul.addr %s175, 4
        %s177 = scalar_lea.vmem %s0, %s176
        %s178 = smul.u32 2, %s18
      $region20: #{audio_encoder_forward.12} parent=15 // pred_fallthru
        _
      // Predicated region
      $region21: #{audio_encoder_forward.12} parent=15 // pred_check
        %p179 = pneg %p80
      $region22: #{audio_encoder_forward.12} parent=15 // pred_check_branch
        %181 = sbr.rel (%p179) target = $region24
      $region23: #{audio_encoder_forward.12} parent=15 // pred_region
        %p182 = scmp.lt.s32.totalorder %s16, 1
        %s183 = scalar_select %p182, %s16, 1
        %p184 = scmp.lt.s32.totalorder %s17, 0
        %s185 = scalar_select %p184, %s17, 0
        %s186 = smul.addr %s183, 2
        %s187 = sadd.s32 %s185, %s186
        %s188 = smul.addr %s187, 4
        %s189 = scalar_lea.vmem %s1, %s188
      $region24: #{audio_encoder_forward.12} parent=15 // pred_fallthru
        _
      // Predicated region
      $region25: #{audio_encoder_forward.12} parent=15 // pred_check
        %p190 = pneg %p108
      $region26: #{audio_encoder_forward.12} parent=15 // pred_check_branch
        %192 = sbr.rel (%p190) target = $region28
      $region27: #{audio_encoder_forward.12} parent=15 // pred_region
        %p193 = scmp.lt.s32.totalorder %s16, 1
        %s194 = scalar_select %p193, %s16, 1
        %p195 = scmp.lt.s32.totalorder %s17, 0
        %s196 = scalar_select %p195, %s17, 0
        %s197 = smul.addr %s194, 2
        %s198 = sadd.s32 %s196, %s197
        %s199 = smul.addr %s198, 4
        %s200 = scalar_lea.vmem %s2, %s199
      $region28: #{audio_encoder_forward.12} parent=15 // pred_fallthru
        _
    $region16: #{audio_encoder_forward.12} parent=5 // pred_fallthru
      _
    %p201 = scmp.le.s32.totalorder 1, %s9
    %p202 = scmp.lt.s32.totalorder %s9, 3
    %p203 = pnand %p201, %p202
    %p204 = pneg %p203
    // Predicated region
    $region29: #{audio_encoder_forward.12} parent=5 // pred_check
      _
    $region30: #{audio_encoder_forward.12} parent=5 // pred_check_branch
      %206 = sbr.rel (%p203) target = $region32
    $region31: #{audio_encoder_forward.12} parent=5 // pred_region
      %s207 = ssub.s32 %s9, 1
      %s208 = smul.u32 2, %s21
      %p209 = scmp.lt.s32.totalorder %s19, 1
      %s210 = scalar_select %p209, %s19, 1
      %p211 = scmp.lt.s32.totalorder %s208, 1
      %s212 = scalar_select %p211, %s208, 1
      %p213 = scmp.lt.s32.totalorder %s20, 0
      %s214 = scalar_select %p213, %s20, 0
      %s215 = sadd.s32 %s214, %s212
      %s216 = smul.addr %s210, 2
      %s217 = sadd.s32 %s215, %s216
      %s218 = smul.addr %s217, 4
      %s219 = scalar_lea.vmem %s0, %s218
      %p220 = pneg %p58
      %p221 = pneg %p55
      %p222 = scmp.lt.s32.totalorder %s19, 1
      %s223 = scalar_select %p222, %s19, 1
      %p224 = scmp.lt.s32.totalorder %s20, 0
      %s225 = scalar_select %p224, %s20, 0
      %s226 = smul.addr %s223, 2
      %s227 = sadd.s32 %s225, %s226
      %s228 = smul.addr %s227, 4
      %s229 = scalar_lea.vmem %s1, %s228
      %p230 = pneg %p86
      %p231 = pneg %p83
      %p232 = scmp.lt.s32.totalorder %s19, 1
      %s233 = scalar_select %p232, %s19, 1
      %p234 = scmp.lt.s32.totalorder %s20, 0
      %s235 = scalar_select %p234, %s20, 0
      %s236 = smul.addr %s233, 2
      %s237 = sadd.s32 %s235, %s236
      %s238 = smul.addr %s237, 4
      %s239 = scalar_lea.vmem %s2, %s238
      %p240 = pneg %p114
      %p241 = pneg %p111
      %p242 = pneg %p144
      %p243 = pneg %p141
      %s244 = smul.u32 2, %s21
      %p245 = scmp.lt.s32.totalorder %s19, 1
      %s246 = scalar_select %p245, %s19, 1
      %p247 = scmp.lt.s32.totalorder %s244, 1
      %s248 = scalar_select %p247, %s244, 1
      %p249 = scmp.lt.s32.totalorder %s20, 0
      %s250 = scalar_select %p249, %s20, 0
      %s251 = sadd.s32 %s250, %s248
      %s252 = smul.addr %s246, 2
      %s253 = sadd.s32 %s251, %s252
      %s254 = smul.addr %s253, 4
      %s255 = scalar_lea.vmem %s3, %s254
      %s256 = smul.u32 2, %s21
      %p257 = scmp.lt.s32.totalorder %s19, 1
      %s258 = scalar_select %p257, %s19, 1
      %p259 = scmp.lt.s32.totalorder %s256, 1
      %s260 = scalar_select %p259, %s256, 1
      %p261 = scmp.lt.s32.totalorder %s20, 0
      %s262 = scalar_select %p261, %s20, 0
      %s263 = sadd.s32 %s262, %s260
      %s264 = smul.addr %s258, 2
      %s265 = sadd.s32 %s263, %s264
      %s266 = smul.addr %s265, 4
      %s267 = scalar_lea.vmem %s0, %s266
      %s268 = smul.u32 2, %s21
      %p269 = scmp.lt.s32.totalorder %s19, 1
      %s270 = scalar_select %p269, %s19, 1
      %p271 = scmp.lt.s32.totalorder %s20, 0
      %s272 = scalar_select %p271, %s20, 0
      %s273 = smul.addr %s270, 2
      %s274 = sadd.s32 %s272, %s273
      %s275 = smul.addr %s274, 4
      %s276 = scalar_lea.vmem %s1, %s275
      %p277 = scmp.lt.s32.totalorder %s19, 1
      %s278 = scalar_select %p277, %s19, 1
      %p279 = scmp.lt.s32.totalorder %s20, 0
      %s280 = scalar_select %p279, %s20, 0
      %s281 = smul.addr %s278, 2
      %s282 = sadd.s32 %s280, %s281
      %s283 = smul.addr %s282, 4
      %s284 = scalar_lea.vmem %s2, %s283
      %s285 = smul.u32 2, %s21
      %p286 = scmp.lt.s32.totalorder %s19, 1
      %s287 = scalar_select %p286, %s19, 1
      %p288 = scmp.lt.s32.totalorder %s285, 1
      %s289 = scalar_select %p288, %s285, 1
      %p290 = scmp.lt.s32.totalorder %s20, 0
      %s291 = scalar_select %p290, %s20, 0
      %s292 = sadd.s32 %s291, %s289
      %s293 = smul.addr %s287, 2
      %s294 = sadd.s32 %s292, %s293
      %s295 = smul.addr %s294, 4
      %s296 = scalar_lea.vmem %s3, %s295
      %s297 = smul.u32 2, %s21
      %p299 = scmp.eq.s32.totalorder %s21, 0
      // Predicated region
      $region33: #{audio_encoder_forward.12} parent=31 // pred_check
        %p300 = pneg %p299
      $region34: #{audio_encoder_forward.12} parent=31 // pred_check_branch
        %302 = sbr.rel (%p300) target = $region36
      $region35: #{audio_encoder_forward.12} parent=31 // pred_region
        %v303 = vld [vmem:[%s276] sm:$0xf]
        %v304 = vld [vmem:[%s276 + $0x4] sm:$0xf]
        %v307 = vunpack.c.l.b16 %v303
        %v308 = vunpack.c.l.b16 %v304
        %v309 = vpack.c.b16 %v308, %v307
        %vm311 = vcmask 64512
        %312 = vst.msk [vmem:[#allocation2] sm:$0xff] %vm311, %v309
        %v313 = vld [vmem:[%s284] sm:$0xf]
        %v314 = vld [vmem:[%s284 + $0x4] sm:$0xf]
        %v317 = vunpack.c.l.b16 %v313
        %v318 = vunpack.c.l.b16 %v314
        %v319 = vpack.c.b16 %v318, %v317
        %321 = vst.msk [vmem:[#allocation3] sm:$0xff] %vm311, %v319
        %v322 = vld [vmem:[%s276] sm:$0xf]
        %v323 = vld [vmem:[%s276 + $0x4] sm:$0xf]
        %v326 = vunpack.c.l.b16 %v322
        %v327 = vunpack.c.l.b16 %v323
        %v328 = vpack.c.b16 %v327, %v326
        %329 = vrot.lane.b32.xlu0 %v328, 120
        %v330 = vpop.permute.xlu0 %329
        %s332 = scalar_lea.vmem [#allocation2], 8
        %333 = vst.msk [vmem:[%s332] sm:$0xff] %vm311, %v330
        %v334 = vld [vmem:[%s284] sm:$0xf]
        %v335 = vld [vmem:[%s284 + $0x4] sm:$0xf]
        %v338 = vunpack.c.l.b16 %v334
        %v339 = vunpack.c.l.b16 %v335
        %v340 = vpack.c.b16 %v339, %v338
        %341 = vrot.lane.b32.xlu0 %v340, 120
        %v342 = vpop.permute.xlu0 %341
        %s344 = scalar_lea.vmem [#allocation3], 8
        %345 = vst.msk [vmem:[%s344] sm:$0xff] %vm311, %v342
        %v346 = vld [vmem:[%s276] sm:$0xf]
        %v347 = vld [vmem:[%s276 + $0x4] sm:$0xf]
        %v350 = vunpack.c.l.b16 %v346
        %v351 = vunpack.c.l.b16 %v347
        %v352 = vpack.c.b16 %v351, %v350
        %353 = vrot.lane.b32.xlu0 %v352, 112
        %v354 = vpop.permute.xlu0 %353
        %s356 = scalar_lea.vmem [#allocation2], 16
        %357 = vst.msk [vmem:[%s356] sm:$0xff] %vm311, %v354
        %v358 = vld [vmem:[%s284] sm:$0xf]
        %v359 = vld [vmem:[%s284 + $0x4] sm:$0xf]
        %v362 = vunpack.c.l.b16 %v358
        %v363 = vunpack.c.l.b16 %v359
        %v364 = vpack.c.b16 %v363, %v362
        %365 = vrot.lane.b32.xlu0 %v364, 112
        %v366 = vpop.permute.xlu0 %365
        %s368 = scalar_lea.vmem [#allocation3], 16
        %369 = vst.msk [vmem:[%s368] sm:$0xff] %vm311, %v366
        %v370 = vld [vmem:[%s276] sm:$0xf]
        %v371 = vld [vmem:[%s276 + $0x4] sm:$0xf]
        %v374 = vunpack.c.l.b16 %v370
        %v375 = vunpack.c.l.b16 %v371
        %v376 = vpack.c.b16 %v375, %v374
        %377 = vrot.lane.b32.xlu0 %v376, 104
        %v378 = vpop.permute.xlu0 %377
        %s380 = scalar_lea.vmem [#allocation2], 24
        %381 = vst.msk [vmem:[%s380] sm:$0xff] %vm311, %v378
        %v382 = vld [vmem:[%s284] sm:$0xf]
        %v383 = vld [vmem:[%s284 + $0x4] sm:$0xf]
        %v386 = vunpack.c.l.b16 %v382
        %v387 = vunpack.c.l.b16 %v383
        %v388 = vpack.c.b16 %v387, %v386
        %389 = vrot.lane.b32.xlu0 %v388, 104
        %v390 = vpop.permute.xlu0 %389
        %s392 = scalar_lea.vmem [#allocation3], 24
        %393 = vst.msk [vmem:[%s392] sm:$0xff] %vm311, %v390
      $region36: #{audio_encoder_forward.12} parent=31 // pred_fallthru
        _
      %v394 = vld [vmem:[%s267] sm:$0xf]
      %v395 = vld [vmem:[%s267 + $0x4] sm:$0xf]
      %398 = vrot.lane.b32.xlu0 %v394, 120
      %v399 = vpop.permute.xlu0 %398
      %400 = vrot.lane.b32.xlu0 %v395, 120
      %v401 = vpop.permute.xlu0 %400
      %402 = vrot.lane.b32.xlu0 %v394, 112
      %v403 = vpop.permute.xlu0 %402
      %404 = vrot.lane.b32.xlu0 %v395, 112
      %v405 = vpop.permute.xlu0 %404
      %406 = vrot.lane.b32.xlu0 %v394, 104
      %v407 = vpop.permute.xlu0 %406
      %408 = vrot.lane.b32.xlu0 %v395, 104
      %v409 = vpop.permute.xlu0 %408
      %vm410 = vcmask 7168
      %411 = vst.msk [vmem:[#allocation4] sm:$0xff] %vm410, -inf
      %412 = vst.msk [vmem:[#allocation4 + $0x8] sm:$0xff] %vm410, -inf
      %413 = vst.msk [vmem:[#allocation4 + $0x10] sm:$0xff] %vm410, -inf
      %414 = vst.msk [vmem:[#allocation4 + $0x18] sm:$0xff] %vm410, -inf
      %415 = vst.msk [vmem:[#allocation4 + $0x20] sm:$0xff] %vm410, -inf
      %416 = vst.msk [vmem:[#allocation4 + $0x28] sm:$0xff] %vm410, -inf
      %417 = vst.msk [vmem:[#allocation4 + $0x30] sm:$0xff] %vm410, -inf
      %418 = vst.msk [vmem:[#allocation4 + $0x38] sm:$0xff] %vm410, -inf
      %419 = vst.msk [vmem:[#allocation5] sm:$0xff] %vm410, 0.0
      %420 = vst.msk [vmem:[#allocation5 + $0x8] sm:$0xff] %vm410, 0.0
      %421 = vst.msk [vmem:[#allocation5 + $0x10] sm:$0xff] %vm410, 0.0
      %422 = vst.msk [vmem:[#allocation5 + $0x18] sm:$0xff] %vm410, 0.0
      %423 = vst.msk [vmem:[#allocation5 + $0x20] sm:$0xff] %vm410, 0.0
      %424 = vst.msk [vmem:[#allocation5 + $0x28] sm:$0xff] %vm410, 0.0
      %425 = vst.msk [vmem:[#allocation5 + $0x30] sm:$0xff] %vm410, 0.0
      %426 = vst.msk [vmem:[#allocation5 + $0x38] sm:$0xff] %vm410, 0.0
      %vm427 = vcmask 64512
      %428 = vst.msk [vmem:[#allocation6] sm:$0xff] %vm427, 0.0
      %429 = vst.msk [vmem:[#allocation6 + $0x8] sm:$0xff] %vm427, 0.0
      %430 = vst.msk [vmem:[#allocation6 + $0x10] sm:$0xff] %vm427, 0.0
      %431 = vst.msk [vmem:[#allocation6 + $0x18] sm:$0xff] %vm427, 0.0
      %432 = vst.msk [vmem:[#allocation6 + $0x20] sm:$0xff] %vm427, 0.0
      %433 = vst.msk [vmem:[#allocation6 + $0x28] sm:$0xff] %vm427, 0.0
      %434 = vst.msk [vmem:[#allocation6 + $0x30] sm:$0xff] %vm427, 0.0
      %435 = vst.msk [vmem:[#allocation6 + $0x38] sm:$0xff] %vm427, 0.0
      %v436 = vld [vmem:[#allocation2] sm:$0xff]
      %v437 = vld [vmem:[#allocation2 + $0x8] sm:$0xff]
      %v438 = vld [vmem:[#allocation2 + $0x10] sm:$0xff]
      %v439 = vld [vmem:[#allocation2 + $0x18] sm:$0xff]
      %v440 = vld [vmem:[#allocation3] sm:$0xff]
      %v441 = vld [vmem:[#allocation3 + $0x8] sm:$0xff]
      %v442 = vld [vmem:[#allocation3 + $0x10] sm:$0xff]
      %v443 = vld [vmem:[#allocation3 + $0x18] sm:$0xff]
      %v444 = vunpack.c.l.b16 %v394
      %v445 = vunpack.c.l.b16 %v395
      %v446 = vpack.c.b16 %v445, %v444
      %v448 = vsel %vm427, %v446, 0
      %v451 = vsel %vm427, %v436, 0
      %453 = vmatprep.subr.bf16.mxu0 0
      %454 = vmatpush1.bf16.xpose.msra.mxu0 %v451
      %455 = vmatprep.subr.bf16.mxu0 0
      %456 = vmatpush1.bf16.xpose.msra.mxu0 0
      %457 = vmatprep.subr.bf16.mxu0 0
      %458 = vmatpush1.bf16.xpose.msra.mxu0 0
      %459 = vmatprep.subr.bf16.mxu0 0
      %460 = vmatpush1.bf16.xpose.msra.mxu0 0
      %461 = vmatprep.subr.bf16.mxu0 0
      %462 = vmatpush1.bf16.xpose.msra.mxu0 0
      %463 = vmatprep.subr.bf16.mxu0 0
      %464 = vmatpush1.bf16.xpose.msra.mxu0 0
      %465 = vmatprep.subr.bf16.mxu0 0
      %466 = vmatpush1.bf16.xpose.msra.mxu0 0
      %467 = vmatprep.subr.bf16.mxu0 0
      %468 = vmatpush1.bf16.xpose.msra.mxu0 0
      %469 = vmatprep.subr.bf16.mxu0 0
      %470 = vmatpush1.bf16.xpose.msra.mxu0 0
      %471 = vmatprep.subr.bf16.mxu0 0
      %472 = vmatpush1.bf16.xpose.msra.mxu0 0
      %473 = vmatprep.subr.bf16.mxu0 0
      %474 = vmatpush1.bf16.xpose.msra.mxu0 0
      %475 = vmatprep.subr.bf16.mxu0 0
      %476 = vmatpush1.bf16.xpose.msra.mxu0 0
      %477 = vmatprep.subr.bf16.mxu0 0
      %478 = vmatpush1.bf16.xpose.msra.mxu0 0
      %479 = vmatprep.subr.bf16.mxu0 0
      %480 = vmatpush1.bf16.xpose.msra.mxu0 0
      %481 = vmatprep.subr.bf16.mxu0 0
      %482 = vmatpush1.bf16.xpose.msra.mxu0 0
      %483 = vmatprep.subr.bf16.mxu0 0
      %484 = vmatpush1.bf16.xpose.msra.mxu0 0
      %485 = vmatprep.mubr.bf16.mxu0 0
      %486 = vmatmul.mubr.bf16.gmra.mrb[0].mxu0 %v448
      %v487 = vpop.f32.mrb[0].mxu0
      %v488 = vadd.f32 0.0, %v487
      %v489 = vpop.f32.mrb[0].mxu0
      %v490 = vpop.f32.mrb[0].mxu0
      %v491 = vadd.f32 0.0, %v490
      %v492 = vpop.f32.mrb[0].mxu0
      %493 = vdwg.mxu0
      %v494 = vunpack.c.l.b16 %v399
      %v495 = vunpack.c.l.b16 %v401
      %v496 = vpack.c.b16 %v495, %v494
      %v498 = vsel %vm427, %v496, 0
      %v501 = vsel %vm427, %v437, 0
      %503 = vmatprep.subr.bf16.mxu0 0
      %504 = vmatpush1.bf16.xpose.msra.mxu0 %v501
      %505 = vmatprep.subr.bf16.mxu0 0
      %506 = vmatpush1.bf16.xpose.msra.mxu0 0
      %507 = vmatprep.subr.bf16.mxu0 0
      %508 = vmatpush1.bf16.xpose.msra.mxu0 0
      %509 = vmatprep.subr.bf16.mxu0 0
      %510 = vmatpush1.bf16.xpose.msra.mxu0 0
      %511 = vmatprep.subr.bf16.mxu0 0
      %512 = vmatpush1.bf16.xpose.msra.mxu0 0
      %513 = vmatprep.subr.bf16.mxu0 0
      %514 = vmatpush1.bf16.xpose.msra.mxu0 0
      %515 = vmatprep.subr.bf16.mxu0 0
      %516 = vmatpush1.bf16.xpose.msra.mxu0 0
      %517 = vmatprep.subr.bf16.mxu0 0
      %518 = vmatpush1.bf16.xpose.msra.mxu0 0
      %519 = vmatprep.subr.bf16.mxu0 0
      %520 = vmatpush1.bf16.xpose.msra.mxu0 0
      %521 = vmatprep.subr.bf16.mxu0 0
      %522 = vmatpush1.bf16.xpose.msra.mxu0 0
      %523 = vmatprep.subr.bf16.mxu0 0
      %524 = vmatpush1.bf16.xpose.msra.mxu0 0
      %525 = vmatprep.subr.bf16.mxu0 0
      %526 = vmatpush1.bf16.xpose.msra.mxu0 0
      %527 = vmatprep.subr.bf16.mxu0 0
      %528 = vmatpush1.bf16.xpose.msra.mxu0 0
      %529 = vmatprep.subr.bf16.mxu0 0
      %530 = vmatpush1.bf16.xpose.msra.mxu0 0
      %531 = vmatprep.subr.bf16.mxu0 0
      %532 = vmatpush1.bf16.xpose.msra.mxu0 0
      %533 = vmatprep.subr.bf16.mxu0 0
      %534 = vmatpush1.bf16.xpose.msra.mxu0 0
      %535 = vmatprep.mubr.bf16.mxu0 0
      %536 = vmatmul.mubr.bf16.gmra.mrb[0].mxu0 %v498
      %v537 = vpop.f32.mrb[0].mxu0
      %v538 = vadd.f32 0.0, %v537
      %v539 = vpop.f32.mrb[0].mxu0
      %v540 = vpop.f32.mrb[0].mxu0
      %v541 = vadd.f32 0.0, %v540
      %v542 = vpop.f32.mrb[0].mxu0
      %543 = vdwg.mxu0
      %v544 = vunpack.c.l.b16 %v403
      %v545 = vunpack.c.l.b16 %v405
      %v546 = vpack.c.b16 %v545, %v544
      %v548 = vsel %vm427, %v546, 0
      %v551 = vsel %vm427, %v438, 0
      %553 = vmatprep.subr.bf16.mxu0 0
      %554 = vmatpush1.bf16.xpose.msra.mxu0 %v551
      %555 = vmatprep.subr.bf16.mxu0 0
      %556 = vmatpush1.bf16.xpose.msra.mxu0 0
      %557 = vmatprep.subr.bf16.mxu0 0
      %558 = vmatpush1.bf16.xpose.msra.mxu0 0
      %559 = vmatprep.subr.bf16.mxu0 0
      %560 = vmatpush1.bf16.xpose.msra.mxu0 0
      %561 = vmatprep.subr.bf16.mxu0 0
      %562 = vmatpush1.bf16.xpose.msra.mxu0 0
      %563 = vmatprep.subr.bf16.mxu0 0
      %564 = vmatpush1.bf16.xpose.msra.mxu0 0
      %565 = vmatprep.subr.bf16.mxu0 0
      %566 = vmatpush1.bf16.xpose.msra.mxu0 0
      %567 = vmatprep.subr.bf16.mxu0 0
      %568 = vmatpush1.bf16.xpose.msra.mxu0 0
      %569 = vmatprep.subr.bf16.mxu0 0
      %570 = vmatpush1.bf16.xpose.msra.mxu0 0
      %571 = vmatprep.subr.bf16.mxu0 0
      %572 = vmatpush1.bf16.xpose.msra.mxu0 0
      %573 = vmatprep.subr.bf16.mxu0 0
      %574 = vmatpush1.bf16.xpose.msra.mxu0 0
      %575 = vmatprep.subr.bf16.mxu0 0
      %576 = vmatpush1.bf16.xpose.msra.mxu0 0
      %577 = vmatprep.subr.bf16.mxu0 0
      %578 = vmatpush1.bf16.xpose.msra.mxu0 0
      %579 = vmatprep.subr.bf16.mxu0 0
      %580 = vmatpush1.bf16.xpose.msra.mxu0 0
      %581 = vmatprep.subr.bf16.mxu0 0
      %582 = vmatpush1.bf16.xpose.msra.mxu0 0
      %583 = vmatprep.subr.bf16.mxu0 0
      %584 = vmatpush1.bf16.xpose.msra.mxu0 0
      %585 = vmatprep.mubr.bf16.mxu0 0
      %586 = vmatmul.mubr.bf16.gmra.mrb[0].mxu0 %v548
      %v587 = vpop.f32.mrb[0].mxu0
      %v588 = vadd.f32 0.0, %v587
      %v589 = vpop.f32.mrb[0].mxu0
      %v590 = vpop.f32.mrb[0].mxu0
      %v591 = vadd.f32 0.0, %v590
      %v592 = vpop.f32.mrb[0].mxu0
      %593 = vdwg.mxu0
      %v594 = vunpack.c.l.b16 %v407
      %v595 = vunpack.c.l.b16 %v409
      %v596 = vpack.c.b16 %v595, %v594
      %v598 = vsel %vm427, %v596, 0
      %v601 = vsel %vm427, %v439, 0
      %603 = vmatprep.subr.bf16.mxu0 0
      %604 = vmatpush1.bf16.xpose.msra.mxu0 %v601
      %605 = vmatprep.subr.bf16.mxu0 0
      %606 = vmatpush1.bf16.xpose.msra.mxu0 0
      %607 = vmatprep.subr.bf16.mxu0 0
      %608 = vmatpush1.bf16.xpose.msra.mxu0 0
      %609 = vmatprep.subr.bf16.mxu0 0
      %610 = vmatpush1.bf16.xpose.msra.mxu0 0
      %611 = vmatprep.subr.bf16.mxu0 0
      %612 = vmatpush1.bf16.xpose.msra.mxu0 0
      %613 = vmatprep.subr.bf16.mxu0 0
      %614 = vmatpush1.bf16.xpose.msra.mxu0 0
      %615 = vmatprep.subr.bf16.mxu0 0
      %616 = vmatpush1.bf16.xpose.msra.mxu0 0
      %617 = vmatprep.subr.bf16.mxu0 0
      %618 = vmatpush1.bf16.xpose.msra.mxu0 0
      %619 = vmatprep.subr.bf16.mxu0 0
      %620 = vmatpush1.bf16.xpose.msra.mxu0 0
      %621 = vmatprep.subr.bf16.mxu0 0
      %622 = vmatpush1.bf16.xpose.msra.mxu0 0
      %623 = vmatprep.subr.bf16.mxu0 0
      %624 = vmatpush1.bf16.xpose.msra.mxu0 0
      %625 = vmatprep.subr.bf16.mxu0 0
      %626 = vmatpush1.bf16.xpose.msra.mxu0 0
      %627 = vmatprep.subr.bf16.mxu0 0
      %628 = vmatpush1.bf16.xpose.msra.mxu0 0
      %629 = vmatprep.subr.bf16.mxu0 0
      %630 = vmatpush1.bf16.xpose.msra.mxu0 0
      %631 = vmatprep.subr.bf16.mxu0 0
      %632 = vmatpush1.bf16.xpose.msra.mxu0 0
      %633 = vmatprep.subr.bf16.mxu0 0
      %634 = vmatpush1.bf16.xpose.msra.mxu0 0
      %635 = vmatprep.mubr.bf16.mxu0 0
      %636 = vmatmul.mubr.bf16.gmra.mrb[0].mxu0 %v598
      %v637 = vpop.f32.mrb[0].mxu0
      %v638 = vadd.f32 0.0, %v637
      %v639 = vpop.f32.mrb[0].mxu0
      %v640 = vpop.f32.mrb[0].mxu0
      %v641 = vadd.f32 0.0, %v640
      %v642 = vpop.f32.mrb[0].mxu0
      %643 = vdwg.mxu0
      %v644 = vlaneseq
      %v645 = vand.u32 %v644, 127
      %vm646 = vcmp.lt.s32.totalorder %v645, 12
      %v647 = vsel %vm646, %v488, -inf
      %v648 = vsel %vm646, %v491, -inf
      %v649 = vsel %vm646, %v538, -inf
      %v650 = vsel %vm646, %v541, -inf
      %v651 = vsel %vm646, %v588, -inf
      %v652 = vsel %vm646, %v591, -inf
      %v653 = vsel %vm646, %v638, -inf
      %v654 = vsel %vm646, %v641, -inf
      %v655 = vld [vmem:[#allocation4] sm:$0xff]
      %v656 = vld [vmem:[#allocation4 + $0x8] sm:$0xff]
      %v657 = vld [vmem:[#allocation4 + $0x10] sm:$0xff]
      %v658 = vld [vmem:[#allocation4 + $0x18] sm:$0xff]
      %v659 = vld [vmem:[#allocation4 + $0x20] sm:$0xff]
      %v660 = vld [vmem:[#allocation4 + $0x28] sm:$0xff]
      %v661 = vld [vmem:[#allocation4 + $0x30] sm:$0xff]
      %v662 = vld [vmem:[#allocation4 + $0x38] sm:$0xff]
      %vm663 = vcmask 130048
      %v664 = vsel %vm663, %v647, -inf
      %665 = vmax.xlane.f32.xlu0 %v664
      %v666 = vpop.xlane.xlu0 %665
      %v667 = vsel %vm663, %v648, -inf
      %668 = vmax.xlane.f32.xlu0 %v667
      %v669 = vpop.xlane.xlu0 %668
      %v670 = vsel %vm663, %v649, -inf
      %671 = vmax.xlane.f32.xlu0 %v670
      %v672 = vpop.xlane.xlu0 %671
      %v673 = vsel %vm663, %v650, -inf
      %674 = vmax.xlane.f32.xlu0 %v673
      %v675 = vpop.xlane.xlu0 %674
      %v676 = vsel %vm663, %v651, -inf
      %677 = vmax.xlane.f32.xlu0 %v676
      %v678 = vpop.xlane.xlu0 %677
      %v679 = vsel %vm663, %v652, -inf
      %680 = vmax.xlane.f32.xlu0 %v679
      %v681 = vpop.xlane.xlu0 %680
      %v682 = vsel %vm663, %v653, -inf
      %683 = vmax.xlane.f32.xlu0 %v682
      %v684 = vpop.xlane.xlu0 %683
      %v685 = vsel %vm663, %v654, -inf
      %686 = vmax.xlane.f32.xlu0 %v685
      %v687 = vpop.xlane.xlu0 %686
      %v688 = vmax.f32 %v655, %v666
      %v689 = vmax.f32 %v656, %v669
      %v690 = vmax.f32 %v657, %v672
      %v691 = vmax.f32 %v658, %v675
      %v692 = vmax.f32 %v659, %v678
      %v693 = vmax.f32 %v660, %v681
      %v694 = vmax.f32 %v661, %v684
      %v695 = vmax.f32 %v662, %v687
      %v696 = vsub.f32 %v655, %v688
      %v697 = vsub.f32 %v656, %v689
      %v698 = vsub.f32 %v657, %v690
      %v699 = vsub.f32 %v658, %v691
      %v700 = vsub.f32 %v659, %v692
      %v701 = vsub.f32 %v660, %v693
      %v702 = vsub.f32 %v661, %v694
      %v703 = vsub.f32 %v662, %v695
      %v704 = vmul.f32 %v696, 1.442695
      %v705 = vpow.pop %v704
      %v706 = vmul.f32 %v697, 1.442695
      %v707 = vpow.pop %v706
      %v708 = vmul.f32 %v698, 1.442695
      %v709 = vpow.pop %v708
      %v710 = vmul.f32 %v699, 1.442695
      %v711 = vpow.pop %v710
      %v712 = vmul.f32 %v700, 1.442695
      %v713 = vpow.pop %v712
      %v714 = vmul.f32 %v701, 1.442695
      %v715 = vpow.pop %v714
      %v716 = vmul.f32 %v702, 1.442695
      %v717 = vpow.pop %v716
      %v718 = vmul.f32 %v703, 1.442695
      %v719 = vpow.pop %v718
      %721 = vset.pattern.permute.xlu0 0
      %722 = vperm.xlu0 %721, %v688
      %v723 = vpop.permute.xlu0 %722
      %726 = vset.pattern.permute.xlu0 0
      %727 = vperm.xlu0 %726, %v689
      %v728 = vpop.permute.xlu0 %727
      %731 = vset.pattern.permute.xlu0 0
      %732 = vperm.xlu0 %731, %v690
      %v733 = vpop.permute.xlu0 %732
      %736 = vset.pattern.permute.xlu0 0
      %737 = vperm.xlu0 %736, %v691
      %v738 = vpop.permute.xlu0 %737
      %741 = vset.pattern.permute.xlu0 0
      %742 = vperm.xlu0 %741, %v692
      %v743 = vpop.permute.xlu0 %742
      %746 = vset.pattern.permute.xlu0 0
      %747 = vperm.xlu0 %746, %v693
      %v748 = vpop.permute.xlu0 %747
      %751 = vset.pattern.permute.xlu0 0
      %752 = vperm.xlu0 %751, %v694
      %v753 = vpop.permute.xlu0 %752
      %756 = vset.pattern.permute.xlu0 0
      %757 = vperm.xlu0 %756, %v695
      %v758 = vpop.permute.xlu0 %757
      %v760 = vsub.f32 %v647, %v723
      %v761 = vsub.f32 %v648, %v728
      %v762 = vsub.f32 %v649, %v733
      %v763 = vsub.f32 %v650, %v738
      %v764 = vsub.f32 %v651, %v743
      %v765 = vsub.f32 %v652, %v748
      %v766 = vsub.f32 %v653, %v753
      %v767 = vsub.f32 %v654, %v758
      %v768 = vpack.c.bf16 %v761, %v760
      %v769 = vpack.c.bf16 %v763, %v762
      %v770 = vpack.c.bf16 %v765, %v764
      %v771 = vpack.c.bf16 %v767, %v766
      %v773 = vmul.bf16 %v768, 1069105081
      %v774 = vpow.bf16.pop %v773
      %v776 = vmul.bf16 %v769, 1069105081
      %v777 = vpow.bf16.pop %v776
      %v779 = vmul.bf16 %v770, 1069105081
      %v780 = vpow.bf16.pop %v779
      %v782 = vmul.bf16 %v771, 1069105081
      %v783 = vpow.bf16.pop %v782
      %v784 = vld [vmem:[#allocation5] sm:$0xff]
      %v785 = vld [vmem:[#allocation5 + $0x8] sm:$0xff]
      %v786 = vld [vmem:[#allocation5 + $0x10] sm:$0xff]
      %v787 = vld [vmem:[#allocation5 + $0x18] sm:$0xff]
      %v788 = vld [vmem:[#allocation5 + $0x20] sm:$0xff]
      %v789 = vld [vmem:[#allocation5 + $0x28] sm:$0xff]
      %v790 = vld [vmem:[#allocation5 + $0x30] sm:$0xff]
      %v791 = vld [vmem:[#allocation5 + $0x38] sm:$0xff]
      %v792 = vmul.f32 %v705, %v784
      %v793 = vmul.f32 %v707, %v785
      %v794 = vmul.f32 %v709, %v786
      %v795 = vmul.f32 %v711, %v787
      %v796 = vmul.f32 %v713, %v788
      %v797 = vmul.f32 %v715, %v789
      %v798 = vmul.f32 %v717, %v790
      %v799 = vmul.f32 %v719, %v791
      %v800 = vunpack.c.l.bf16 %v774
      %v801 = vunpack.c.h.bf16 %v774
      %v802 = vunpack.c.l.bf16 %v777
      %v803 = vunpack.c.h.bf16 %v777
      %v804 = vunpack.c.l.bf16 %v780
      %v805 = vunpack.c.h.bf16 %v780
      %v806 = vunpack.c.l.bf16 %v783
      %v807 = vunpack.c.h.bf16 %v783
      %v808 = vsel %vm663, %v800, 0.0
      %809 = vadd.xlane.f32.xlu0 %v808
      %v810 = vpop.xlane.xlu0 %809
      %v811 = vsel %vm663, %v801, 0.0
      %812 = vadd.xlane.f32.xlu0 %v811
      %v813 = vpop.xlane.xlu0 %812
      %v814 = vsel %vm663, %v802, 0.0
      %815 = vadd.xlane.f32.xlu0 %v814
      %v816 = vpop.xlane.xlu0 %815
      %v817 = vsel %vm663, %v803, 0.0
      %818 = vadd.xlane.f32.xlu0 %v817
      %v819 = vpop.xlane.xlu0 %818
      %v820 = vsel %vm663, %v804, 0.0
      %821 = vadd.xlane.f32.xlu0 %v820
      %v822 = vpop.xlane.xlu0 %821
      %v823 = vsel %vm663, %v805, 0.0
      %824 = vadd.xlane.f32.xlu0 %v823
      %v825 = vpop.xlane.xlu0 %824
      %v826 = vsel %vm663, %v806, 0.0
      %827 = vadd.xlane.f32.xlu0 %v826
      %v828 = vpop.xlane.xlu0 %827
      %v829 = vsel %vm663, %v807, 0.0
      %830 = vadd.xlane.f32.xlu0 %v829
      %v831 = vpop.xlane.xlu0 %830
      %v832 = vadd.f32 %v792, %v810
      %v833 = vadd.f32 %v793, %v813
      %v834 = vadd.f32 %v794, %v816
      %v835 = vadd.f32 %v795, %v819
      %v836 = vadd.f32 %v796, %v822
      %v837 = vadd.f32 %v797, %v825
      %v838 = vadd.f32 %v798, %v828
      %v839 = vadd.f32 %v799, %v831
      %840 = vst.msk [vmem:[#allocation5] sm:$0xff] %vm410, %v832
      %841 = vst.msk [vmem:[#allocation5 + $0x8] sm:$0xff] %vm410, %v833
      %842 = vst.msk [vmem:[#allocation5 + $0x10] sm:$0xff] %vm410, %v834
      %843 = vst.msk [vmem:[#allocation5 + $0x18] sm:$0xff] %vm410, %v835
      %844 = vst.msk [vmem:[#allocation5 + $0x20] sm:$0xff] %vm410, %v836
      %845 = vst.msk [vmem:[#allocation5 + $0x28] sm:$0xff] %vm410, %v837
      %846 = vst.msk [vmem:[#allocation5 + $0x30] sm:$0xff] %vm410, %v838
      %847 = vst.msk [vmem:[#allocation5 + $0x38] sm:$0xff] %vm410, %v839
      %v849 = vsel %vm663, %v774, 0
      %851 = vmatprep.subr.bf16.mxu0 0
      %852 = vmatpush1.bf16.msra.mxu0 %v440
      %853 = vmatprep.subr.bf16.mxu0 0
      %854 = vmatpush1.bf16.msra.mxu0 0
      %855 = vmatprep.subr.bf16.mxu0 0
      %856 = vmatpush1.bf16.msra.mxu0 0
      %857 = vmatprep.subr.bf16.mxu0 0
      %858 = vmatpush1.bf16.msra.mxu0 0
      %859 = vmatprep.subr.bf16.mxu0 0
      %860 = vmatpush1.bf16.msra.mxu0 0
      %861 = vmatprep.subr.bf16.mxu0 0
      %862 = vmatpush1.bf16.msra.mxu0 0
      %863 = vmatprep.subr.bf16.mxu0 0
      %864 = vmatpush1.bf16.msra.mxu0 0
      %865 = vmatprep.subr.bf16.mxu0 0
      %866 = vmatpush1.bf16.msra.mxu0 0
      %867 = vmatprep.subr.bf16.mxu0 0
      %868 = vmatpush1.bf16.msra.mxu0 0
      %869 = vmatprep.subr.bf16.mxu0 0
      %870 = vmatpush1.bf16.msra.mxu0 0
      %871 = vmatprep.subr.bf16.mxu0 0
      %872 = vmatpush1.bf16.msra.mxu0 0
      %873 = vmatprep.subr.bf16.mxu0 0
      %874 = vmatpush1.bf16.msra.mxu0 0
      %875 = vmatprep.subr.bf16.mxu0 0
      %876 = vmatpush1.bf16.msra.mxu0 0
      %877 = vmatprep.subr.bf16.mxu0 0
      %878 = vmatpush1.bf16.msra.mxu0 0
      %879 = vmatprep.subr.bf16.mxu0 0
      %880 = vmatpush1.bf16.msra.mxu0 0
      %881 = vmatprep.subr.bf16.mxu0 0
      %882 = vmatpush1.bf16.msra.mxu0 0
      %883 = vmatprep.mubr.bf16.mxu0 0
      %884 = vmatmul.mubr.bf16.gmra.mrb[0].mxu0 %v849
      %v885 = vpop.f32.mrb[0].mxu0
      %v886 = vadd.f32 0.0, %v885
      %v887 = vpop.f32.mrb[0].mxu0
      %v888 = vpop.f32.mrb[0].mxu0
      %v889 = vadd.f32 0.0, %v888
      %v890 = vpop.f32.mrb[0].mxu0
      %891 = vdwg.mxu0
      %v893 = vsel %vm663, %v777, 0
      %895 = vmatprep.subr.bf16.mxu0 0
      %896 = vmatpush1.bf16.msra.mxu0 %v441
      %897 = vmatprep.subr.bf16.mxu0 0
      %898 = vmatpush1.bf16.msra.mxu0 0
      %899 = vmatprep.subr.bf16.mxu0 0
      %900 = vmatpush1.bf16.msra.mxu0 0
      %901 = vmatprep.subr.bf16.mxu0 0
      %902 = vmatpush1.bf16.msra.mxu0 0
      %903 = vmatprep.subr.bf16.mxu0 0
      %904 = vmatpush1.bf16.msra.mxu0 0
      %905 = vmatprep.subr.bf16.mxu0 0
      %906 = vmatpush1.bf16.msra.mxu0 0
      %907 = vmatprep.subr.bf16.mxu0 0
      %908 = vmatpush1.bf16.msra.mxu0 0
      %909 = vmatprep.subr.bf16.mxu0 0
      %910 = vmatpush1.bf16.msra.mxu0 0
      %911 = vmatprep.subr.bf16.mxu0 0
      %912 = vmatpush1.bf16.msra.mxu0 0
      %913 = vmatprep.subr.bf16.mxu0 0
      %914 = vmatpush1.bf16.msra.mxu0 0
      %915 = vmatprep.subr.bf16.mxu0 0
      %916 = vmatpush1.bf16.msra.mxu0 0
      %917 = vmatprep.subr.bf16.mxu0 0
      %918 = vmatpush1.bf16.msra.mxu0 0
      %919 = vmatprep.subr.bf16.mxu0 0
      %920 = vmatpush1.bf16.msra.mxu0 0
      %921 = vmatprep.subr.bf16.mxu0 0
      %922 = vmatpush1.bf16.msra.mxu0 0
      %923 = vmatprep.subr.bf16.mxu0 0
      %924 = vmatpush1.bf16.msra.mxu0 0
      %925 = vmatprep.subr.bf16.mxu0 0
      %926 = vmatpush1.bf16.msra.mxu0 0
      %927 = vmatprep.mubr.bf16.mxu0 0
      %928 = vmatmul.mubr.bf16.gmra.mrb[0].mxu0 %v893
      %v929 = vpop.f32.mrb[0].mxu0
      %v930 = vadd.f32 0.0, %v929
      %v931 = vpop.f32.mrb[0].mxu0
      %v932 = vpop.f32.mrb[0].mxu0
      %v933 = vadd.f32 0.0, %v932
      %v934 = vpop.f32.mrb[0].mxu0
      %935 = vdwg.mxu0
      %v937 = vsel %vm663, %v780, 0
      %939 = vmatprep.subr.bf16.mxu0 0
      %940 = vmatpush1.bf16.msra.mxu0 %v442
      %941 = vmatprep.subr.bf16.mxu0 0
      %942 = vmatpush1.bf16.msra.mxu0 0
      %943 = vmatprep.subr.bf16.mxu0 0
      %944 = vmatpush1.bf16.msra.mxu0 0
      %945 = vmatprep.subr.bf16.mxu0 0
      %946 = vmatpush1.bf16.msra.mxu0 0
      %947 = vmatprep.subr.bf16.mxu0 0
      %948 = vmatpush1.bf16.msra.mxu0 0
      %949 = vmatprep.subr.bf16.mxu0 0
      %950 = vmatpush1.bf16.msra.mxu0 0
      %951 = vmatprep.subr.bf16.mxu0 0
      %952 = vmatpush1.bf16.msra.mxu0 0
      %953 = vmatprep.subr.bf16.mxu0 0
      %954 = vmatpush1.bf16.msra.mxu0 0
      %955 = vmatprep.subr.bf16.mxu0 0
      %956 = vmatpush1.bf16.msra.mxu0 0
      %957 = vmatprep.subr.bf16.mxu0 0
      %958 = vmatpush1.bf16.msra.mxu0 0
      %959 = vmatprep.subr.bf16.mxu0 0
      %960 = vmatpush1.bf16.msra.mxu0 0
      %961 = vmatprep.subr.bf16.mxu0 0
      %962 = vmatpush1.bf16.msra.mxu0 0
      %963 = vmatprep.subr.bf16.mxu0 0
      %964 = vmatpush1.bf16.msra.mxu0 0
      %965 = vmatprep.subr.bf16.mxu0 0
      %966 = vmatpush1.bf16.msra.mxu0 0
      %967 = vmatprep.subr.bf16.mxu0 0
      %968 = vmatpush1.bf16.msra.mxu0 0
      %969 = vmatprep.subr.bf16.mxu0 0
      %970 = vmatpush1.bf16.msra.mxu0 0
      %971 = vmatprep.mubr.bf16.mxu0 0
      %972 = vmatmul.mubr.bf16.gmra.mrb[0].mxu0 %v937
      %v973 = vpop.f32.mrb[0].mxu0
      %v974 = vadd.f32 0.0, %v973
      %v975 = vpop.f32.mrb[0].mxu0
      %v976 = vpop.f32.mrb[0].mxu0
      %v977 = vadd.f32 0.0, %v976
      %v978 = vpop.f32.mrb[0].mxu0
      %979 = vdwg.mxu0
      %v981 = vsel %vm663, %v783, 0
      %983 = vmatprep.subr.bf16.mxu0 0
      %984 = vmatpush1.bf16.msra.mxu0 %v443
      %985 = vmatprep.subr.bf16.mxu0 0
      %986 = vmatpush1.bf16.msra.mxu0 0
      %987 = vmatprep.subr.bf16.mxu0 0
      %988 = vmatpush1.bf16.msra.mxu0 0
      %989 = vmatprep.subr.bf16.mxu0 0
      %990 = vmatpush1.bf16.msra.mxu0 0
      %991 = vmatprep.subr.bf16.mxu0 0
      %992 = vmatpush1.bf16.msra.mxu0 0
      %993 = vmatprep.subr.bf16.mxu0 0
      %994 = vmatpush1.bf16.msra.mxu0 0
      %995 = vmatprep.subr.bf16.mxu0 0
      %996 = vmatpush1.bf16.msra.mxu0 0
      %997 = vmatprep.subr.bf16.mxu0 0
      %998 = vmatpush1.bf16.msra.mxu0 0
      %999 = vmatprep.subr.bf16.mxu0 0
      %1000 = vmatpush1.bf16.msra.mxu0 0
      %1001 = vmatprep.subr.bf16.mxu0 0
      %1002 = vmatpush1.bf16.msra.mxu0 0
      %1003 = vmatprep.subr.bf16.mxu0 0
      %1004 = vmatpush1.bf16.msra.mxu0 0
      %1005 = vmatprep.subr.bf16.mxu0 0
      %1006 = vmatpush1.bf16.msra.mxu0 0
      %1007 = vmatprep.subr.bf16.mxu0 0
      %1008 = vmatpush1.bf16.msra.mxu0 0
      %1009 = vmatprep.subr.bf16.mxu0 0
      %1010 = vmatpush1.bf16.msra.mxu0 0
      %1011 = vmatprep.subr.bf16.mxu0 0
      %1012 = vmatpush1.bf16.msra.mxu0 0
      %1013 = vmatprep.subr.bf16.mxu0 0
      %1014 = vmatpush1.bf16.msra.mxu0 0
      %1015 = vmatprep.mubr.bf16.mxu0 0
      %1016 = vmatmul.mubr.bf16.gmra.mrb[0].mxu0 %v981
      %v1017 = vpop.f32.mrb[0].mxu0
      %v1018 = vadd.f32 0.0, %v1017
      %v1019 = vpop.f32.mrb[0].mxu0
      %v1020 = vpop.f32.mrb[0].mxu0
      %v1021 = vadd.f32 0.0, %v1020
      %v1022 = vpop.f32.mrb[0].mxu0
      %1023 = vdwg.mxu0
      %v1024 = vld [vmem:[#allocation6] sm:$0xff]
      %v1025 = vld [vmem:[#allocation6 + $0x8] sm:$0xff]
      %v1026 = vld [vmem:[#allocation6 + $0x10] sm:$0xff]
      %v1027 = vld [vmem:[#allocation6 + $0x18] sm:$0xff]
      %v1028 = vld [vmem:[#allocation6 + $0x20] sm:$0xff]
      %v1029 = vld [vmem:[#allocation6 + $0x28] sm:$0xff]
      %v1030 = vld [vmem:[#allocation6 + $0x30] sm:$0xff]
      %v1031 = vld [vmem:[#allocation6 + $0x38] sm:$0xff]
      %1033 = vset.pattern.permute.xlu0 0
      %1034 = vperm.xlu0 %1033, %v705
      %v1035 = vpop.permute.xlu0 %1034
      %1038 = vset.pattern.permute.xlu0 0
      %1039 = vperm.xlu0 %1038, %v707
      %v1040 = vpop.permute.xlu0 %1039
      %1043 = vset.pattern.permute.xlu0 0
      %1044 = vperm.xlu0 %1043, %v709
      %v1045 = vpop.permute.xlu0 %1044
      %1048 = vset.pattern.permute.xlu0 0
      %1049 = vperm.xlu0 %1048, %v711
      %v1050 = vpop.permute.xlu0 %1049
      %1053 = vset.pattern.permute.xlu0 0
      %1054 = vperm.xlu0 %1053, %v713
      %v1055 = vpop.permute.xlu0 %1054
      %1058 = vset.pattern.permute.xlu0 0
      %1059 = vperm.xlu0 %1058, %v715
      %v1060 = vpop.permute.xlu0 %1059
      %1063 = vset.pattern.permute.xlu0 0
      %1064 = vperm.xlu0 %1063, %v717
      %v1065 = vpop.permute.xlu0 %1064
      %1068 = vset.pattern.permute.xlu0 0
      %1069 = vperm.xlu0 %1068, %v719
      %v1070 = vpop.permute.xlu0 %1069
      %v1072 = vmul.f32 %v1035, %v1024
      %v1073 = vmul.f32 %v1040, %v1025
      %v1074 = vmul.f32 %v1045, %v1026
      %v1075 = vmul.f32 %v1050, %v1027
      %v1076 = vmul.f32 %v1055, %v1028
      %v1077 = vmul.f32 %v1060, %v1029
      %v1078 = vmul.f32 %v1065, %v1030
      %v1079 = vmul.f32 %v1070, %v1031
      %v1080 = vadd.f32 %v1072, %v886
      %v1081 = vadd.f32 %v1073, %v889
      %v1082 = vadd.f32 %v1074, %v930
      %v1083 = vadd.f32 %v1075, %v933
      %v1084 = vadd.f32 %v1076, %v974
      %v1085 = vadd.f32 %v1077, %v977
      %v1086 = vadd.f32 %v1078, %v1018
      %v1087 = vadd.f32 %v1079, %v1021
      %1088 = vst.msk [vmem:[#allocation6] sm:$0xff] %vm427, %v1080
      %1089 = vst.msk [vmem:[#allocation6 + $0x8] sm:$0xff] %vm427, %v1081
      %1090 = vst.msk [vmem:[#allocation6 + $0x10] sm:$0xff] %vm427, %v1082
      %1091 = vst.msk [vmem:[#allocation6 + $0x18] sm:$0xff] %vm427, %v1083
      %1092 = vst.msk [vmem:[#allocation6 + $0x20] sm:$0xff] %vm427, %v1084
      %1093 = vst.msk [vmem:[#allocation6 + $0x28] sm:$0xff] %vm427, %v1085
      %1094 = vst.msk [vmem:[#allocation6 + $0x30] sm:$0xff] %vm427, %v1086
      %1095 = vst.msk [vmem:[#allocation6 + $0x38] sm:$0xff] %vm427, %v1087
      %1096 = vst.msk [vmem:[#allocation4] sm:$0xff] %vm410, %v688
      %1097 = vst.msk [vmem:[#allocation4 + $0x8] sm:$0xff] %vm410, %v689
      %1098 = vst.msk [vmem:[#allocation4 + $0x10] sm:$0xff] %vm410, %v690
      %1099 = vst.msk [vmem:[#allocation4 + $0x18] sm:$0xff] %vm410, %v691
      %1100 = vst.msk [vmem:[#allocation4 + $0x20] sm:$0xff] %vm410, %v692
      %1101 = vst.msk [vmem:[#allocation4 + $0x28] sm:$0xff] %vm410, %v693
      %1102 = vst.msk [vmem:[#allocation4 + $0x30] sm:$0xff] %vm410, %v694
      %1103 = vst.msk [vmem:[#allocation4 + $0x38] sm:$0xff] %vm410, %v695
      %v1104 = vld [vmem:[#allocation6] sm:$0xff]
      %v1105 = vld [vmem:[#allocation6 + $0x8] sm:$0xff]
      %v1106 = vld [vmem:[#allocation6 + $0x10] sm:$0xff]
      %v1107 = vld [vmem:[#allocation6 + $0x18] sm:$0xff]
      %v1108 = vld [vmem:[#allocation6 + $0x20] sm:$0xff]
      %v1109 = vld [vmem:[#allocation6 + $0x28] sm:$0xff]
      %v1110 = vld [vmem:[#allocation6 + $0x30] sm:$0xff]
      %v1111 = vld [vmem:[#allocation6 + $0x38] sm:$0xff]
      %v1112 = vld [vmem:[#allocation5] sm:$0xff]
      %v1113 = vld [vmem:[#allocation5 + $0x8] sm:$0xff]
      %v1114 = vld [vmem:[#allocation5 + $0x10] sm:$0xff]
      %v1115 = vld [vmem:[#allocation5 + $0x18] sm:$0xff]
      %v1116 = vld [vmem:[#allocation5 + $0x20] sm:$0xff]
      %v1117 = vld [vmem:[#allocation5 + $0x28] sm:$0xff]
      %v1118 = vld [vmem:[#allocation5 + $0x30] sm:$0xff]
      %v1119 = vld [vmem:[#allocation5 + $0x38] sm:$0xff]
      %1121 = vset.pattern.permute.xlu0 0
      %1122 = vperm.xlu0 %1121, %v1112
      %v1123 = vpop.permute.xlu0 %1122
      %1126 = vset.pattern.permute.xlu0 0
      %1127 = vperm.xlu0 %1126, %v1113
      %v1128 = vpop.permute.xlu0 %1127
      %1131 = vset.pattern.permute.xlu0 0
      %1132 = vperm.xlu0 %1131, %v1114
      %v1133 = vpop.permute.xlu0 %1132
      %1136 = vset.pattern.permute.xlu0 0
      %1137 = vperm.xlu0 %1136, %v1115
      %v1138 = vpop.permute.xlu0 %1137
      %1141 = vset.pattern.permute.xlu0 0
      %1142 = vperm.xlu0 %1141, %v1116
      %v1143 = vpop.permute.xlu0 %1142
      %1146 = vset.pattern.permute.xlu0 0
      %1147 = vperm.xlu0 %1146, %v1117
      %v1148 = vpop.permute.xlu0 %1147
      %1151 = vset.pattern.permute.xlu0 0
      %1152 = vperm.xlu0 %1151, %v1118
      %v1153 = vpop.permute.xlu0 %1152
      %1156 = vset.pattern.permute.xlu0 0
      %1157 = vperm.xlu0 %1156, %v1119
      %v1158 = vpop.permute.xlu0 %1157
      %v1160 = vrcp.pop %v1123
      %v1161 = vmul.f32 %v1104, %v1160
      %v1162 = vrcp.pop %v1128
      %v1163 = vmul.f32 %v1105, %v1162
      %v1164 = vrcp.pop %v1133
      %v1165 = vmul.f32 %v1106, %v1164
      %v1166 = vrcp.pop %v1138
      %v1167 = vmul.f32 %v1107, %v1166
      %v1168 = vrcp.pop %v1143
      %v1169 = vmul.f32 %v1108, %v1168
      %v1170 = vrcp.pop %v1148
      %v1171 = vmul.f32 %v1109, %v1170
      %v1172 = vrcp.pop %v1153
      %v1173 = vmul.f32 %v1110, %v1172
      %v1174 = vrcp.pop %v1158
      %v1175 = vmul.f32 %v1111, %v1174
      %1178 = vrot.lane.b32.xlu0 %v1165, 8
      %v1179 = vpop.permute.xlu0 %1178
      %1180 = vrot.lane.b32.xlu0 %v1167, 8
      %v1181 = vpop.permute.xlu0 %1180
      %1186 = vrot.lane.b32.xlu0 %v1169, 16
      %v1187 = vpop.permute.xlu0 %1186
      %1188 = vrot.lane.b32.xlu0 %v1171, 16
      %v1189 = vpop.permute.xlu0 %1188
      %1194 = vrot.lane.b32.xlu0 %v1173, 24
      %v1195 = vpop.permute.xlu0 %1194
      %1196 = vrot.lane.b32.xlu0 %v1175, 24
      %v1197 = vpop.permute.xlu0 %1196
      %v1200 = vsel %vm427, %v1161, %v1179
      %v1201 = vsel %vm427, %v1163, %v1181
      %v1202 = vsel %vm663, %v1200, %v1187
      %v1203 = vsel %vm663, %v1201, %v1189
      %vm1204 = vcmask 195584
      %v1205 = vsel %vm1204, %v1202, %v1195
      %v1206 = vsel %vm1204, %v1203, %v1197
      %v1207 = vpack.c.bf16 %v1206, %v1205
      %v1209 = vunpack.c.l.b16 %v1207
      %v1210 = vunpack.c.h.b16 %v1207
      %v1211 = vpack.c.b16 %v1209, %v1209
      %v1212 = vpack.c.b16 %v1210, %v1210
      %vm1215 = vcmask 257024
      %1216 = vst.msk [vmem:[%s296] sm:$0xf] %vm1215, %v1211
      %1217 = vst.msk [vmem:[%s296 + $0x4] sm:$0xf] %vm1215, %v1212
      %s1218 = smul.u32 2, %s21
      %p1219 = scmp.lt.s32.totalorder %s19, 1
      %s1220 = scalar_select %p1219, %s19, 1
      %p1221 = scmp.lt.s32.totalorder %s1218, 1
      %s1222 = scalar_select %p1221, %s1218, 1
      %p1223 = scmp.lt.s32.totalorder %s20, 0
      %s1224 = scalar_select %p1223, %s20, 0
      %s1225 = sadd.s32 %s1224, %s1222
      %s1226 = smul.addr %s1220, 2
      %s1227 = sadd.s32 %s1225, %s1226
      %s1228 = smul.addr %s1227, 4
      %s1229 = scalar_lea.vmem %s3, %s1228
      // Predicated region
      $region37: #{audio_encoder_forward.12} parent=31 // pred_check
        %p1230 = pneg %p141
      $region38: #{audio_encoder_forward.12} parent=31 // pred_check_branch
        %1232 = sbr.rel (%p1230) target = $region40
      $region39: #{audio_encoder_forward.12} parent=31 // pred_region
        %s1233 = smul.u32 2, %s21
      $region40: #{audio_encoder_forward.12} parent=31 // pred_fallthru
        _
    $region32: #{audio_encoder_forward.12} parent=5 // pred_fallthru
      _
    %p1234 = scmp.le.s32.totalorder 2, %s9
    // Predicated region
    $region41: #{audio_encoder_forward.12} parent=5 // pred_check
      %p1235 = pneg %p1234
    $region42: #{audio_encoder_forward.12} parent=5 // pred_check_branch
      %1237 = sbr.rel (%p1235) target = $region44
    $region43: #{audio_encoder_forward.12} parent=5 // pred_region
      %s1238 = ssub.s32 %s9, 2
      // Predicated region
      $region45: #{audio_encoder_forward.12} parent=43 // pred_check
        %p1239 = pneg %p147
      $region46: #{audio_encoder_forward.12} parent=43 // pred_check_branch
        %1241 = sbr.rel (%p1239) target = $region48
      $region47: #{audio_encoder_forward.12} parent=43 // pred_region
        %s1242 = smul.u32 2, %s24
        %p1243 = scmp.lt.s32.totalorder %s22, 1
        %s1244 = scalar_select %p1243, %s22, 1
        %p1245 = scmp.lt.s32.totalorder %s1242, 1
        %s1246 = scalar_select %p1245, %s1242, 1
        %p1247 = scmp.lt.s32.totalorder %s23, 0
        %s1248 = scalar_select %p1247, %s23, 0
        %s1249 = sadd.s32 %s1248, %s1246
        %s1250 = smul.addr %s1244, 2
        %s1251 = sadd.s32 %s1249, %s1250
        %s1252 = smul.addr %s1251, 4
        %s1253 = scalar_lea.vmem %s3, %s1252
      $region48: #{audio_encoder_forward.12} parent=43 // pred_fallthru
        _
    $region44: #{audio_encoder_forward.12} parent=5 // pred_fallthru
      _
  $region6: #{audio_encoder_forward.12} parent=0 // loop_footer
    %s13 = sadd.s32 1, %s9
  $region7: #{audio_encoder_forward.12} parent=0 // loop_footer_branch
    %8 = sbr.rel target = $region3
  $region8: #{audio_encoder_forward.12} parent=0 // loop_exit
    _

// kernel: audio_encoder_forward.17
$region0: #{audio_encoder_forward.17}
  #allocation0 [shape = 'u32[]', space=smem, size = 0x4, offset = 0x4, fixed_abs, tag = 'smem constant byte address 0x4 - core index']
  #allocation1 [shape = 'u32[144,128]{1,0:T(1,128)}', space=vmem, size = 0x12000, scoped, tag = 'internal scratch']
  %s0 = inlined_call_operand.vmem [shape: f32[2,16,32], index: 0, kind: input, shape index: {}]
  %s1 = inlined_call_operand.vmem [shape: f32[1,32], index: 1, kind: input, shape index: {}]
  %s2 = inlined_call_operand.vmem [shape: f32[1,32], index: 2, kind: input, shape index: {}]
  %s3 = inlined_call_operand.vmem [shape: f32[2,16,32], index: 3, kind: output, shape index: {}]
  %s4 = sld [smem:[#allocation0]]
  $region45: #{audio_encoder_forward.17} parent=0
    _
  %s6 = ssub.s32 1, %s4
  %s7 = scalar_select 0, %s6, %s4
  loop: start=0, step=1, limit=4
  $region2: #{audio_encoder_forward.17} parent=0 // loop_pre_header
    _
  $region3: #{audio_encoder_forward.17} parent=0 // loop_header
    %s9 = sphi 0, %s13
    %p10 = scmp.ge.s32.totalorder %s9, 4
    %s16 = sphi 0, %s28
    %s17 = sphi 0, %s24
    %s18 = sphi 0, %s16
    %s19 = sphi 0, %s17
    %s20 = sphi 0, %s18
    %s21 = sphi 0, %s19
    %s33 = sphi 0, %s35
    %s36 = sphi 0, %s33
    %s37 = sphi 0, %s36
    %s53 = sphi 0, %s37
    %s57 = sphi 0, %s57
    %s59 = sphi 0, %s57
    %s60 = sphi 0, %s59
    %s74 = sphi 0, %s60
    %s78 = sphi 0, %s78
    %s80 = sphi 0, %s78
    %s81 = sphi 0, %s80
    %s95 = sphi 0, %s81
    %s103 = sphi 0, %s105
    %s106 = sphi 0, %s103
    %s107 = sphi 0, %s106
    %s123 = sphi 0, %s107
  $region4: #{audio_encoder_forward.17} parent=0 // loop_header_branch
    %12 = sbr.rel (%p10) target = $region8
  $region5: #{audio_encoder_forward.17} parent=0 // loop_body
    %s14 = ssub.s32 %s9, 1
    %s15 = ssub.s32 %s9, 2
    %s22 = sadd.s32 1, %s17
    %p23 = scmp.ge.s32.totalorder %s22, 2
    %s24 = scalar_select %p23, 0, %s22
    %s25 = sadd.s32 1, %s16
    %s26 = scalar_select %p23, %s25, %s16
    %p27 = scmp.ge.s32.totalorder %s26, 1
    %s28 = scalar_select %p27, 0, %s26
    %s29 = ssub.s32 %s17, %s24
    %s30 = ssub.s32 %s16, %s28
    %s31 = sor.u32 %s29, %s30
    %p32 = scmp.eq.s32.totalorder %s31, 0
    %s34 = sadd.s32 %s33, 1
    %s35 = scalar_select %p32, %s33, %s34
    %p38 = pneg %p32
    %p39 = scmp.eq.s32.totalorder %s9, 1
    %p40 = por %p38, %p39
    %p41 = scmp.ne.s32.totalorder %s33, %s36
    %p42 = scmp.eq.s32.totalorder %s9, 0
    %p43 = por %p41, %p42
    %p44 = scmp.ne.s32.totalorder %s33, %s36
    %p45 = scmp.eq.s32.totalorder %s14, 1
    %p46 = por %p44, %p45
    %p47 = scmp.ne.s32.totalorder %s36, %s37
    %p48 = scmp.eq.s32.totalorder %s14, 0
    %p49 = por %p47, %p48
    %p50 = scmp.ne.s32.totalorder %s36, %s37
    %p51 = scmp.eq.s32.totalorder %s15, 1
    %p52 = por %p50, %p51
    %p54 = scmp.ne.s32.totalorder %s37, %s53
    %p55 = scmp.eq.s32.totalorder %s15, 0
    %p56 = por %p54, %p55
    %s58 = sadd.s32 %s57, 1
    %p61 = scmp.eq.s32.totalorder %s9, 1
    %p62 = scmp.ne.s32.totalorder %s57, %s59
    %p63 = scmp.eq.s32.totalorder %s9, 0
    %p64 = por %p62, %p63
    %p65 = scmp.ne.s32.totalorder %s57, %s59
    %p66 = scmp.eq.s32.totalorder %s14, 1
    %p67 = por %p65, %p66
    %p68 = scmp.ne.s32.totalorder %s59, %s60
    %p69 = scmp.eq.s32.totalorder %s14, 0
    %p70 = por %p68, %p69
    %p71 = scmp.ne.s32.totalorder %s59, %s60
    %p72 = scmp.eq.s32.totalorder %s15, 1
    %p73 = por %p71, %p72
    %p75 = scmp.ne.s32.totalorder %s60, %s74
    %p76 = scmp.eq.s32.totalorder %s15, 0
    %p77 = por %p75, %p76
    %s79 = sadd.s32 %s78, 1
    %p82 = scmp.eq.s32.totalorder %s9, 1
    %p83 = scmp.ne.s32.totalorder %s78, %s80
    %p84 = scmp.eq.s32.totalorder %s9, 0
    %p85 = por %p83, %p84
    %p86 = scmp.ne.s32.totalorder %s78, %s80
    %p87 = scmp.eq.s32.totalorder %s14, 1
    %p88 = por %p86, %p87
    %p89 = scmp.ne.s32.totalorder %s80, %s81
    %p90 = scmp.eq.s32.totalorder %s14, 0
    %p91 = por %p89, %p90
    %p92 = scmp.ne.s32.totalorder %s80, %s81
    %p93 = scmp.eq.s32.totalorder %s15, 1
    %p94 = por %p92, %p93
    %p96 = scmp.ne.s32.totalorder %s81, %s95
    %p97 = scmp.eq.s32.totalorder %s15, 0
    %p98 = por %p96, %p97
    %s99 = ssub.s32 %s17, %s24
    %s100 = ssub.s32 %s16, %s28
    %s101 = sor.u32 %s99, %s100
    %p102 = scmp.eq.s32.totalorder %s101, 0
    %s104 = sadd.s32 %s103, 1
    %s105 = scalar_select %p102, %s103, %s104
    %p108 = pneg %p102
    %p109 = scmp.eq.s32.totalorder %s9, 1
    %p110 = por %p108, %p109
    %p111 = scmp.ne.s32.totalorder %s103, %s106
    %p112 = scmp.eq.s32.totalorder %s9, 0
    %p113 = por %p111, %p112
    %p114 = scmp.ne.s32.totalorder %s103, %s106
    %p115 = scmp.eq.s32.totalorder %s14, 1
    %p116 = por %p114, %p115
    %p117 = scmp.ne.s32.totalorder %s106, %s107
    %p118 = scmp.eq.s32.totalorder %s14, 0
    %p119 = por %p117, %p118
    %p120 = scmp.ne.s32.totalorder %s106, %s107
    %p121 = scmp.eq.s32.totalorder %s15, 1
    %p122 = por %p120, %p121
    %p124 = scmp.ne.s32.totalorder %s107, %s123
    %p125 = scmp.eq.s32.totalorder %s15, 0
    %p126 = por %p124, %p125
    %p127 = scmp.le.s32.totalorder 1, %s9
    %p128 = scmp.lt.s32.totalorder %s9, 3
    %p129 = pnand %p127, %p128
    %p130 = pneg %p129
    // Predicated region
    $region9: #{audio_encoder_forward.17} parent=5 // pred_check
      _
    $region10: #{audio_encoder_forward.17} parent=5 // pred_check_branch
      %132 = sbr.rel (%p129) target = $region12
    $region11: #{audio_encoder_forward.17} parent=5 // pred_region
      %s133 = ssub.s32 %s9, 1
      // Predicated region
      $region13: #{audio_encoder_forward.17} parent=11 // pred_check
        %p134 = pneg %p70
      $region14: #{audio_encoder_forward.17} parent=11 // pred_check_branch
        %136 = sbr.rel (%p134) target = $region16
      $region15: #{audio_encoder_forward.17} parent=11 // pred_region
        _
      $region16: #{audio_encoder_forward.17} parent=11 // pred_fallthru
        _
      // Predicated region
      $region17: #{audio_encoder_forward.17} parent=11 // pred_check
        %p137 = pneg %p91
      $region18: #{audio_encoder_forward.17} parent=11 // pred_check_branch
        %139 = sbr.rel (%p137) target = $region20
      $region19: #{audio_encoder_forward.17} parent=11 // pred_region
        _
      $region20: #{audio_encoder_forward.17} parent=11 // pred_fallthru
        _
    $region12: #{audio_encoder_forward.17} parent=5 // pred_fallthru
      _
    %p140 = scmp.lt.s32.totalorder %s9, 2
    // Predicated region
    $region21: #{audio_encoder_forward.17} parent=5 // pred_check
      %p141 = pneg %p140
    $region22: #{audio_encoder_forward.17} parent=5 // pred_check_branch
      %143 = sbr.rel (%p141) target = $region24
    $region23: #{audio_encoder_forward.17} parent=5 // pred_region
      // Predicated region
      $region25: #{audio_encoder_forward.17} parent=23 // pred_check
        %p144 = pneg %p43
      $region26: #{audio_encoder_forward.17} parent=23 // pred_check_branch
        %146 = sbr.rel (%p144) target = $region28
      $region27: #{audio_encoder_forward.17} parent=23 // pred_region
        %s147 = smul.u32 2, %s16
        %p148 = scmp.lt.s32.totalorder %s17, 1
        %s149 = scalar_select %p148, %s17, 1
        %p150 = scmp.lt.s32.totalorder %s147, 1
        %s151 = scalar_select %p150, %s147, 1
        %s152 = smul.addr %s149, 2
        %s153 = sadd.s32 %s151, %s152
        %s154 = smul.addr %s153, 8
        %s155 = scalar_lea.vmem %s0, %s154
        %s156 = smul.u32 2, %s16
      $region28: #{audio_encoder_forward.17} parent=23 // pred_fallthru
        _
    $region24: #{audio_encoder_forward.17} parent=5 // pred_fallthru
      _
    %p157 = scmp.le.s32.totalorder 1, %s9
    %p158 = scmp.lt.s32.totalorder %s9, 3
    %p159 = pnand %p157, %p158
    %p160 = pneg %p159
    // Predicated region
    $region29: #{audio_encoder_forward.17} parent=5 // pred_check
      _
    $region30: #{audio_encoder_forward.17} parent=5 // pred_check_branch
      %162 = sbr.rel (%p159) target = $region32
    $region31: #{audio_encoder_forward.17} parent=5 // pred_region
      %s163 = ssub.s32 %s9, 1
      %s164 = smul.u32 2, %s18
      %p165 = scmp.lt.s32.totalorder %s19, 1
      %s166 = scalar_select %p165, %s19, 1
      %p167 = scmp.lt.s32.totalorder %s164, 1
      %s168 = scalar_select %p167, %s164, 1
      %s169 = smul.addr %s166, 2
      %s170 = sadd.s32 %s168, %s169
      %s171 = smul.addr %s170, 8
      %s172 = scalar_lea.vmem %s0, %s171
      %p173 = pneg %p49
      %p174 = pneg %p46
      %p175 = pneg %p70
      %p176 = pneg %p67
      %p177 = pneg %p91
      %p178 = pneg %p88
      %p179 = pneg %p119
      %p180 = pneg %p116
      %s181 = smul.u32 2, %s18
      %p182 = scmp.lt.s32.totalorder %s19, 1
      %s183 = scalar_select %p182, %s19, 1
      %p184 = scmp.lt.s32.totalorder %s181, 1
      %s185 = scalar_select %p184, %s181, 1
      %s186 = smul.addr %s183, 2
      %s187 = sadd.s32 %s185, %s186
      %s188 = smul.addr %s187, 8
      %s189 = scalar_lea.vmem %s3, %s188
      %s190 = smul.u32 2, %s18
      %p191 = scmp.lt.s32.totalorder %s19, 1
      %s192 = scalar_select %p191, %s19, 1
      %p193 = scmp.lt.s32.totalorder %s190, 1
      %s194 = scalar_select %p193, %s190, 1
      %s195 = smul.addr %s192, 2
      %s196 = sadd.s32 %s194, %s195
      %s197 = smul.addr %s196, 8
      %s198 = scalar_lea.vmem %s0, %s197
      %s199 = smul.u32 2, %s18
      %s200 = smul.u32 2, %s18
      %p201 = scmp.lt.s32.totalorder %s19, 1
      %s202 = scalar_select %p201, %s19, 1
      %p203 = scmp.lt.s32.totalorder %s200, 1
      %s204 = scalar_select %p203, %s200, 1
      %s205 = smul.addr %s202, 2
      %s206 = sadd.s32 %s204, %s205
      %s207 = smul.addr %s206, 8
      %s208 = scalar_lea.vmem %s3, %s207
      %s209 = smul.u32 2, %s18
      %v210 = vld [vmem:[%s198] sm:$0xff]
      %v211 = vld [vmem:[%s198 + $0x8] sm:$0xff]
      %v212 = vld [vmem:[%s1] sm:$0x1]
      %v213 = vld [vmem:[%s2] sm:$0x1]
      %vm214 = vcmask 261120
      %v215 = vsel %vm214, %v210, 0.0
      %216 = vadd.xlane.f32.xlu0 %v215
      %v217 = vpop.xlane.xlu0 %216
      %v218 = vsel %vm214, %v211, 0.0
      %219 = vadd.xlane.f32.xlu0 %v218
      %v220 = vpop.xlane.xlu0 %219
      %v221 = vrcp.pop 32.0
      %v222 = vmul.f32 %v217, %v221
      %v223 = vmul.f32 %v220, %v221
      %v224 = vsub.f32 %v210, %v222
      %v225 = vsub.f32 %v211, %v223
      %v226 = vmul.f32 %v224, %v224
      %v227 = vmul.f32 %v225, %v225
      %v228 = vsel %vm214, %v226, 0.0
      %229 = vadd.xlane.f32.xlu0 %v228
      %v230 = vpop.xlane.xlu0 %229
      %v231 = vsel %vm214, %v227, 0.0
      %232 = vadd.xlane.f32.xlu0 %v231
      %v233 = vpop.xlane.xlu0 %232
      %v234 = vmul.f32 %v230, %v221
      %v235 = vmul.f32 %v233, %v221
      %v236 = vadd.f32 %v234, 1e-05
      %v237 = vadd.f32 %v235, 1e-05
      %v238 = vrsqrt.pop %v236
      %v239 = vrsqrt.pop %v237
      %v240 = vmul.f32 %v224, %v238
      %v241 = vmul.f32 %v225, %v239
      %v243 = vlaneseq
      %v244 = vshrl.u32 %v243, 7
      %v245 = vsub.s32 0, %v244
      %v246 = vrot.slane %v212, %v245
      %v248 = vmul.f32 %v240, %v246
      %v249 = vmul.f32 %v241, %v246
      %v251 = vlaneseq
      %v252 = vshrl.u32 %v251, 7
      %v253 = vsub.s32 0, %v252
      %v254 = vrot.slane %v213, %v253
      %v256 = vadd.f32 %v248, %v254
      %v257 = vadd.f32 %v249, %v254
      %258 = vst.msk [vmem:[%s208] sm:$0xff] %vm214, %v256
      %259 = vst.msk [vmem:[%s208 + $0x8] sm:$0xff] %vm214, %v257
      %s260 = smul.u32 2, %s18
      %p261 = scmp.lt.s32.totalorder %s19, 1
      %s262 = scalar_select %p261, %s19, 1
      %p263 = scmp.lt.s32.totalorder %s260, 1
      %s264 = scalar_select %p263, %s260, 1
      %s265 = smul.addr %s262, 2
      %s266 = sadd.s32 %s264, %s265
      %s267 = smul.addr %s266, 8
      %s268 = scalar_lea.vmem %s3, %s267
      // Predicated region
      $region33: #{audio_encoder_forward.17} parent=31 // pred_check
        %p269 = pneg %p116
      $region34: #{audio_encoder_forward.17} parent=31 // pred_check_branch
        %271 = sbr.rel (%p269) target = $region36
      $region35: #{audio_encoder_forward.17} parent=31 // pred_region
        %s272 = smul.u32 2, %s18
      $region36: #{audio_encoder_forward.17} parent=31 // pred_fallthru
        _
    $region32: #{audio_encoder_forward.17} parent=5 // pred_fallthru
      _
    %p273 = scmp.le.s32.totalorder 2, %s9
    // Predicated region
    $region37: #{audio_encoder_forward.17} parent=5 // pred_check
      %p274 = pneg %p273
    $region38: #{audio_encoder_forward.17} parent=5 // pred_check_branch
      %276 = sbr.rel (%p274) target = $region40
    $region39: #{audio_encoder_forward.17} parent=5 // pred_region
      %s277 = ssub.s32 %s9, 2
      // Predicated region
      $region41: #{audio_encoder_forward.17} parent=39 // pred_check
        %p278 = pneg %p122
      $region42: #{audio_encoder_forward.17} parent=39 // pred_check_branch
        %280 = sbr.rel (%p278) target = $region44
      $region43: #{audio_encoder_forward.17} parent=39 // pred_region
        %s281 = smul.u32 2, %s20
        %p282 = scmp.lt.s32.totalorder %s21, 1
        %s283 = scalar_select %p282, %s21, 1
        %p284 = scmp.lt.s32.totalorder %s281, 1
        %s285 = scalar_select %p284, %s281, 1
        %s286 = smul.addr %s283, 2
        %s287 = sadd.s32 %s285, %s286
        %s288 = smul.addr %s287, 8
        %s289 = scalar_lea.vmem %s3, %s288
      $region44: #{audio_encoder_forward.17} parent=39 // pred_fallthru
        _
    $region40: #{audio_encoder_forward.17} parent=5 // pred_fallthru
      _
  $region6: #{audio_encoder_forward.17} parent=0 // loop_footer
    %s13 = sadd.s32 1, %s9
  $region7: #{audio_encoder_forward.17} parent=0 // loop_footer_branch
    %8 = sbr.rel target = $region3
  $region8: #{audio_encoder_forward.17} parent=0 // loop_exit
    _

// kernel: audio_encoder_forward.13
$region0: #{audio_encoder_forward.13}
  #allocation0 [shape = 'u32[]', space=smem, size = 0x4, offset = 0x4, fixed_abs, tag = 'smem constant byte address 0x4 - core index']
  #allocation1 [shape = 'u32[144,128]{1,0:T(1,128)}', space=vmem, size = 0x12000, scoped, tag = 'internal scratch']
  #allocation2 [shape = 'f32[16,32]{1,0:T(8,128)}', space=vmem, size = 0x2000, scoped, tag = 'scratch operand']
  #allocation3 [shape = 'bf16[16,32]{1,0:T(16,128)(2,1)}', space=vmem, size = 0x1000, scoped, tag = 'scratch operand']
  #allocation4 [shape = 'f32[16,32]{1,0:T(8,128)}', space=vmem, size = 0x2000, scoped, tag = 'scratch operand']
  %s0 = inlined_call_operand.vmem [shape: f32[2,16,32], index: 0, kind: input, shape index: {}]
  %s1 = inlined_call_operand.vmem [shape: bf16[2,16,32], index: 1, kind: input, shape index: {}]
  %s2 = inlined_call_operand.vmem [shape: bf16[32,32], index: 2, kind: input, shape index: {}]
  %s3 = inlined_call_operand.vmem [shape: f32[1,32], index: 3, kind: input, shape index: {}]
  %s4 = inlined_call_operand.vmem [shape: f32[1,32], index: 4, kind: input, shape index: {}]
  %s5 = inlined_call_operand.vmem [shape: f32[1,32], index: 5, kind: input, shape index: {}]
  %s6 = inlined_call_operand.vmem [shape: bf16[32,128], index: 6, kind: input, shape index: {}]
  %s7 = inlined_call_operand.vmem [shape: f32[1,128], index: 7, kind: input, shape index: {}]
  %s8 = inlined_call_operand.vmem [shape: bf16[128,32], index: 8, kind: input, shape index: {}]
  %s9 = inlined_call_operand.vmem [shape: f32[1,32], index: 9, kind: input, shape index: {}]
  %s10 = inlined_call_operand.vmem [shape: f32[2,16,32], index: 10, kind: output, shape index: {}]
  %s11 = sld [smem:[#allocation0]]
  $region81: #{audio_encoder_forward.13} parent=0
    _
  %s13 = ssub.s32 1, %s11
  %s14 = scalar_select 0, %s13, %s11
  loop: start=0, step=1, limit=4
  $region2: #{audio_encoder_forward.13} parent=0 // loop_pre_header
    _
  $region3: #{audio_encoder_forward.13} parent=0 // loop_header
    %s16 = sphi 0, %s20
    %p17 = scmp.ge.s32.totalorder %s16, 4
    %s23 = sphi 0, %s42
    %s24 = sphi 0, %s38
    %s25 = sphi 0, %s34
    %s26 = sphi 0, %s23
    %s27 = sphi 0, %s24
    %s28 = sphi 0, %s25
    %s29 = sphi 0, %s26
    %s30 = sphi 0, %s27
    %s31 = sphi 0, %s28
    %s47 = sphi 0, %s49
    %s50 = sphi 0, %s47
    %s51 = sphi 0, %s50
    %s67 = sphi 0, %s51
    %s75 = sphi 0, %s77
    %s78 = sphi 0, %s75
    %s79 = sphi 0, %s78
    %s95 = sphi 0, %s79
    %s99 = sphi 0, %s99
    %s101 = sphi 0, %s99
    %s102 = sphi 0, %s101
    %s116 = sphi 0, %s102
    %s120 = sphi 0, %s120
    %s122 = sphi 0, %s120
    %s123 = sphi 0, %s122
    %s137 = sphi 0, %s123
    %s141 = sphi 0, %s141
    %s143 = sphi 0, %s141
    %s144 = sphi 0, %s143
    %s158 = sphi 0, %s144
    %s162 = sphi 0, %s162
    %s164 = sphi 0, %s162
    %s165 = sphi 0, %s164
    %s179 = sphi 0, %s165
    %s185 = sphi 0, %s187
    %s188 = sphi 0, %s185
    %s189 = sphi 0, %s188
    %s205 = sphi 0, %s189
    %s211 = sphi 0, %s213
    %s214 = sphi 0, %s211
    %s215 = sphi 0, %s214
    %s231 = sphi 0, %s215
    %s237 = sphi 0, %s239
    %s240 = sphi 0, %s237
    %s241 = sphi 0, %s240
    %s257 = sphi 0, %s241
    %s261 = sphi 0, %s261
    %s263 = sphi 0, %s261
    %s264 = sphi 0, %s263
    %s278 = sphi 0, %s264
    %s286 = sphi 0, %s288
    %s289 = sphi 0, %s286
    %s290 = sphi 0, %s289
    %s306 = sphi 0, %s290
  $region4: #{audio_encoder_forward.13} parent=0 // loop_header_branch
    %19 = sbr.rel (%p17) target = $region8
  $region5: #{audio_encoder_forward.13} parent=0 // loop_body
    %s21 = ssub.s32 %s16, 1
    %s22 = ssub.s32 %s16, 2
    %s32 = sadd.s32 1, %s25
    %p33 = scmp.ge.s32.totalorder %s32, 1
    %s34 = scalar_select %p33, 0, %s32
    %s35 = sadd.s32 1, %s24
    %s36 = scalar_select %p33, %s35, %s24
    %p37 = scmp.ge.s32.totalorder %s36, 2
    %s38 = scalar_select %p37, 0, %s36
    %s39 = sadd.s32 1, %s23
    %s40 = scalar_select %p37, %s39, %s23
    %p41 = scmp.ge.s32.totalorder %s40, 1
    %s42 = scalar_select %p41, 0, %s40
    %s43 = ssub.s32 %s24, %s38
    %s44 = ssub.s32 %s23, %s42
    %s45 = sor.u32 %s43, %s44
    %p46 = scmp.eq.s32.totalorder %s45, 0
    %s48 = sadd.s32 %s47, 1
    %s49 = scalar_select %p46, %s47, %s48
    %p52 = pneg %p46
    %p53 = scmp.eq.s32.totalorder %s16, 1
    %p54 = por %p52, %p53
    %p55 = scmp.ne.s32.totalorder %s47, %s50
    %p56 = scmp.eq.s32.totalorder %s16, 0
    %p57 = por %p55, %p56
    %p58 = scmp.ne.s32.totalorder %s47, %s50
    %p59 = scmp.eq.s32.totalorder %s21, 1
    %p60 = por %p58, %p59
    %p61 = scmp.ne.s32.totalorder %s50, %s51
    %p62 = scmp.eq.s32.totalorder %s21, 0
    %p63 = por %p61, %p62
    %p64 = scmp.ne.s32.totalorder %s50, %s51
    %p65 = scmp.eq.s32.totalorder %s22, 1
    %p66 = por %p64, %p65
    %p68 = scmp.ne.s32.totalorder %s51, %s67
    %p69 = scmp.eq.s32.totalorder %s22, 0
    %p70 = por %p68, %p69
    %s71 = ssub.s32 %s24, %s38
    %s72 = ssub.s32 %s23, %s42
    %s73 = sor.u32 %s71, %s72
    %p74 = scmp.eq.s32.totalorder %s73, 0
    %s76 = sadd.s32 %s75, 1
    %s77 = scalar_select %p74, %s75, %s76
    %p80 = pneg %p74
    %p81 = scmp.eq.s32.totalorder %s16, 1
    %p82 = por %p80, %p81
    %p83 = scmp.ne.s32.totalorder %s75, %s78
    %p84 = scmp.eq.s32.totalorder %s16, 0
    %p85 = por %p83, %p84
    %p86 = scmp.ne.s32.totalorder %s75, %s78
    %p87 = scmp.eq.s32.totalorder %s21, 1
    %p88 = por %p86, %p87
    %p89 = scmp.ne.s32.totalorder %s78, %s79
    %p90 = scmp.eq.s32.totalorder %s21, 0
    %p91 = por %p89, %p90
    %p92 = scmp.ne.s32.totalorder %s78, %s79
    %p93 = scmp.eq.s32.totalorder %s22, 1
    %p94 = por %p92, %p93
    %p96 = scmp.ne.s32.totalorder %s79, %s95
    %p97 = scmp.eq.s32.totalorder %s22, 0
    %p98 = por %p96, %p97
    %s100 = sadd.s32 %s99, 1
    %p103 = scmp.eq.s32.totalorder %s16, 1
    %p104 = scmp.ne.s32.totalorder %s99, %s101
    %p105 = scmp.eq.s32.totalorder %s16, 0
    %p106 = por %p104, %p105
    %p107 = scmp.ne.s32.totalorder %s99, %s101
    %p108 = scmp.eq.s32.totalorder %s21, 1
    %p109 = por %p107, %p108
    %p110 = scmp.ne.s32.totalorder %s101, %s102
    %p111 = scmp.eq.s32.totalorder %s21, 0
    %p112 = por %p110, %p111
    %p113 = scmp.ne.s32.totalorder %s101, %s102
    %p114 = scmp.eq.s32.totalorder %s22, 1
    %p115 = por %p113, %p114
    %p117 = scmp.ne.s32.totalorder %s102, %s116
    %p118 = scmp.eq.s32.totalorder %s22, 0
    %p119 = por %p117, %p118
    %s121 = sadd.s32 %s120, 1
    %p124 = scmp.eq.s32.totalorder %s16, 1
    %p125 = scmp.ne.s32.totalorder %s120, %s122
    %p126 = scmp.eq.s32.totalorder %s16, 0
    %p127 = por %p125, %p126
    %p128 = scmp.ne.s32.totalorder %s120, %s122
    %p129 = scmp.eq.s32.totalorder %s21, 1
    %p130 = por %p128, %p129
    %p131 = scmp.ne.s32.totalorder %s122, %s123
    %p132 = scmp.eq.s32.totalorder %s21, 0
    %p133 = por %p131, %p132
    %p134 = scmp.ne.s32.totalorder %s122, %s123
    %p135 = scmp.eq.s32.totalorder %s22, 1
    %p136 = por %p134, %p135
    %p138 = scmp.ne.s32.totalorder %s123, %s137
    %p139 = scmp.eq.s32.totalorder %s22, 0
    %p140 = por %p138, %p139
    %s142 = sadd.s32 %s141, 1
    %p145 = scmp.eq.s32.totalorder %s16, 1
    %p146 = scmp.ne.s32.totalorder %s141, %s143
    %p147 = scmp.eq.s32.totalorder %s16, 0
    %p148 = por %p146, %p147
    %p149 = scmp.ne.s32.totalorder %s141, %s143
    %p150 = scmp.eq.s32.totalorder %s21, 1
    %p151 = por %p149, %p150
    %p152 = scmp.ne.s32.totalorder %s143, %s144
    %p153 = scmp.eq.s32.totalorder %s21, 0
    %p154 = por %p152, %p153
    %p155 = scmp.ne.s32.totalorder %s143, %s144
    %p156 = scmp.eq.s32.totalorder %s22, 1
    %p157 = por %p155, %p156
    %p159 = scmp.ne.s32.totalorder %s144, %s158
    %p160 = scmp.eq.s32.totalorder %s22, 0
    %p161 = por %p159, %p160
    %s163 = sadd.s32 %s162, 1
    %p166 = scmp.eq.s32.totalorder %s16, 1
    %p167 = scmp.ne.s32.totalorder %s162, %s164
    %p168 = scmp.eq.s32.totalorder %s16, 0
    %p169 = por %p167, %p168
    %p170 = scmp.ne.s32.totalorder %s162, %s164
    %p171 = scmp.eq.s32.totalorder %s21, 1
    %p172 = por %p170, %p171
    %p173 = scmp.ne.s32.totalorder %s164, %s165
    %p174 = scmp.eq.s32.totalorder %s21, 0
    %p175 = por %p173, %p174
    %p176 = scmp.ne.s32.totalorder %s164, %s165
    %p177 = scmp.eq.s32.totalorder %s22, 1
    %p178 = por %p176, %p177
    %p180 = scmp.ne.s32.totalorder %s165, %s179
    %p181 = scmp.eq.s32.totalorder %s22, 0
    %p182 = por %p180, %p181
    %s183 = ssub.s32 %s25, %s34
    %p184 = scmp.eq.s32.totalorder %s183, 0
    %s186 = sadd.s32 %s185, 1
    %s187 = scalar_select %p184, %s185, %s186
    %p190 = pneg %p184
    %p191 = scmp.eq.s32.totalorder %s16, 1
    %p192 = por %p190, %p191
    %p193 = scmp.ne.s32.totalorder %s185, %s188
    %p194 = scmp.eq.s32.totalorder %s16, 0
    %p195 = por %p193, %p194
    %p196 = scmp.ne.s32.totalorder %s185, %s188
    %p197 = scmp.eq.s32.totalorder %s21, 1
    %p198 = por %p196, %p197
    %p199 = scmp.ne.s32.totalorder %s188, %s189
    %p200 = scmp.eq.s32.totalorder %s21, 0
    %p201 = por %p199, %p200
    %p202 = scmp.ne.s32.totalorder %s188, %s189
    %p203 = scmp.eq.s32.totalorder %s22, 1
    %p204 = por %p202, %p203
    %p206 = scmp.ne.s32.totalorder %s189, %s205
    %p207 = scmp.eq.s32.totalorder %s22, 0
    %p208 = por %p206, %p207
    %s209 = ssub.s32 %s25, %s34
    %p210 = scmp.eq.s32.totalorder %s209, 0
    %s212 = sadd.s32 %s211, 1
    %s213 = scalar_select %p210, %s211, %s212
    %p216 = pneg %p210
    %p217 = scmp.eq.s32.totalorder %s16, 1
    %p218 = por %p216, %p217
    %p219 = scmp.ne.s32.totalorder %s211, %s214
    %p220 = scmp.eq.s32.totalorder %s16, 0
    %p221 = por %p219, %p220
    %p222 = scmp.ne.s32.totalorder %s211, %s214
    %p223 = scmp.eq.s32.totalorder %s21, 1
    %p224 = por %p222, %p223
    %p225 = scmp.ne.s32.totalorder %s214, %s215
    %p226 = scmp.eq.s32.totalorder %s21, 0
    %p227 = por %p225, %p226
    %p228 = scmp.ne.s32.totalorder %s214, %s215
    %p229 = scmp.eq.s32.totalorder %s22, 1
    %p230 = por %p228, %p229
    %p232 = scmp.ne.s32.totalorder %s215, %s231
    %p233 = scmp.eq.s32.totalorder %s22, 0
    %p234 = por %p232, %p233
    %s235 = ssub.s32 %s25, %s34
    %p236 = scmp.eq.s32.totalorder %s235, 0
    %s238 = sadd.s32 %s237, 1
    %s239 = scalar_select %p236, %s237, %s238
    %p242 = pneg %p236
    %p243 = scmp.eq.s32.totalorder %s16, 1
    %p244 = por %p242, %p243
    %p245 = scmp.ne.s32.totalorder %s237, %s240
    %p246 = scmp.eq.s32.totalorder %s16, 0
    %p247 = por %p245, %p246
    %p248 = scmp.ne.s32.totalorder %s237, %s240
    %p249 = scmp.eq.s32.totalorder %s21, 1
    %p250 = por %p248, %p249
    %p251 = scmp.ne.s32.totalorder %s240, %s241
    %p252 = scmp.eq.s32.totalorder %s21, 0
    %p253 = por %p251, %p252
    %p254 = scmp.ne.s32.totalorder %s240, %s241
    %p255 = scmp.eq.s32.totalorder %s22, 1
    %p256 = por %p254, %p255
    %p258 = scmp.ne.s32.totalorder %s241, %s257
    %p259 = scmp.eq.s32.totalorder %s22, 0
    %p260 = por %p258, %p259
    %s262 = sadd.s32 %s261, 1
    %p265 = scmp.eq.s32.totalorder %s16, 1
    %p266 = scmp.ne.s32.totalorder %s261, %s263
    %p267 = scmp.eq.s32.totalorder %s16, 0
    %p268 = por %p266, %p267
    %p269 = scmp.ne.s32.totalorder %s261, %s263
    %p270 = scmp.eq.s32.totalorder %s21, 1
    %p271 = por %p269, %p270
    %p272 = scmp.ne.s32.totalorder %s263, %s264
    %p273 = scmp.eq.s32.totalorder %s21, 0
    %p274 = por %p272, %p273
    %p275 = scmp.ne.s32.totalorder %s263, %s264
    %p276 = scmp.eq.s32.totalorder %s22, 1
    %p277 = por %p275, %p276
    %p279 = scmp.ne.s32.totalorder %s264, %s278
    %p280 = scmp.eq.s32.totalorder %s22, 0
    %p281 = por %p279, %p280
    %s282 = ssub.s32 %s24, %s38
    %s283 = ssub.s32 %s23, %s42
    %s284 = sor.u32 %s282, %s283
    %p285 = scmp.eq.s32.totalorder %s284, 0
    %s287 = sadd.s32 %s286, 1
    %s288 = scalar_select %p285, %s286, %s287
    %p291 = pneg %p285
    %p292 = scmp.eq.s32.totalorder %s16, 1
    %p293 = por %p291, %p292
    %p294 = scmp.ne.s32.totalorder %s286, %s289
    %p295 = scmp.eq.s32.totalorder %s16, 0
    %p296 = por %p294, %p295
    %p297 = scmp.ne.s32.totalorder %s286, %s289
    %p298 = scmp.eq.s32.totalorder %s21, 1
    %p299 = por %p297, %p298
    %p300 = scmp.ne.s32.totalorder %s289, %s290
    %p301 = scmp.eq.s32.totalorder %s21, 0
    %p302 = por %p300, %p301
    %p303 = scmp.ne.s32.totalorder %s289, %s290
    %p304 = scmp.eq.s32.totalorder %s22, 1
    %p305 = por %p303, %p304
    %p307 = scmp.ne.s32.totalorder %s290, %s306
    %p308 = scmp.eq.s32.totalorder %s22, 0
    %p309 = por %p307, %p308
    %p310 = scmp.le.s32.totalorder 1, %s16
    %p311 = scmp.lt.s32.totalorder %s16, 3
    %p312 = pnand %p310, %p311
    %p313 = pneg %p312
    // Predicated region
    $region9: #{audio_encoder_forward.13} parent=5 // pred_check
      _
    $region10: #{audio_encoder_forward.13} parent=5 // pred_check_branch
      %315 = sbr.rel (%p312) target = $region12
    $region11: #{audio_encoder_forward.13} parent=5 // pred_region
      %s316 = ssub.s32 %s16, 1
      // Predicated region
      $region13: #{audio_encoder_forward.13} parent=11 // pred_check
        %p317 = pneg %p112
      $region14: #{audio_encoder_forward.13} parent=11 // pred_check_branch
        %319 = sbr.rel (%p317) target = $region16
      $region15: #{audio_encoder_forward.13} parent=11 // pred_region
        _
      $region16: #{audio_encoder_forward.13} parent=11 // pred_fallthru
        _
      // Predicated region
      $region17: #{audio_encoder_forward.13} parent=11 // pred_check
        %p320 = pneg %p133
      $region18: #{audio_encoder_forward.13} parent=11 // pred_check_branch
        %322 = sbr.rel (%p320) target = $region20
      $region19: #{audio_encoder_forward.13} parent=11 // pred_region
        _
      $region20: #{audio_encoder_forward.13} parent=11 // pred_fallthru
        _
      // Predicated region
      $region21: #{audio_encoder_forward.13} parent=11 // pred_check
        %p323 = pneg %p154
      $region22: #{audio_encoder_forward.13} parent=11 // pred_check_branch
        %325 = sbr.rel (%p323) target = $region24
      $region23: #{audio_encoder_forward.13} parent=11 // pred_region
        _
      $region24: #{audio_encoder_forward.13} parent=11 // pred_fallthru
        _
      // Predicated region
      $region25: #{audio_encoder_forward.13} parent=11 // pred_check
        %p326 = pneg %p175
      $region26: #{audio_encoder_forward.13} parent=11 // pred_check_branch
        %328 = sbr.rel (%p326) target = $region28
      $region27: #{audio_encoder_forward.13} parent=11 // pred_region
        _
      $region28: #{audio_encoder_forward.13} parent=11 // pred_fallthru
        _
      // Predicated region
      $region29: #{audio_encoder_forward.13} parent=11 // pred_check
        %p329 = pneg %p201
      $region30: #{audio_encoder_forward.13} parent=11 // pred_check_branch
        %331 = sbr.rel (%p329) target = $region32
      $region31: #{audio_encoder_forward.13} parent=11 // pred_region
        %p332 = scmp.lt.s32.totalorder %s28, 0
        %s333 = scalar_select %p332, %s28, 0
        %s334 = smul.addr %s333, 4
        %s335 = scalar_lea.vmem %s6, %s334
      $region32: #{audio_encoder_forward.13} parent=11 // pred_fallthru
        _
      // Predicated region
      $region33: #{audio_encoder_forward.13} parent=11 // pred_check
        %p336 = pneg %p227
      $region34: #{audio_encoder_forward.13} parent=11 // pred_check_branch
        %338 = sbr.rel (%p336) target = $region36
      $region35: #{audio_encoder_forward.13} parent=11 // pred_region
        %p339 = scmp.lt.s32.totalorder %s28, 0
        %s340 = scalar_select %p339, %s28, 0
        %s341 = scalar_lea.vmem %s7, %s340
      $region36: #{audio_encoder_forward.13} parent=11 // pred_fallthru
        _
      // Predicated region
      $region37: #{audio_encoder_forward.13} parent=11 // pred_check
        %p342 = pneg %p253
      $region38: #{audio_encoder_forward.13} parent=11 // pred_check_branch
        %344 = sbr.rel (%p342) target = $region40
      $region39: #{audio_encoder_forward.13} parent=11 // pred_region
        %s345 = smul.u32 16, %s28
        %p346 = scmp.lt.s32.totalorder %s345, 15
        %s347 = scalar_select %p346, %s345, 15
        %s348 = smul.addr %s347, 4
        %s349 = scalar_lea.vmem %s8, %s348
        %s350 = smul.u32 16, %s28
      $region40: #{audio_encoder_forward.13} parent=11 // pred_fallthru
        _
      // Predicated region
      $region41: #{audio_encoder_forward.13} parent=11 // pred_check
        %p351 = pneg %p274
      $region42: #{audio_encoder_forward.13} parent=11 // pred_check_branch
        %353 = sbr.rel (%p351) target = $region44
      $region43: #{audio_encoder_forward.13} parent=11 // pred_region
        _
      $region44: #{audio_encoder_forward.13} parent=11 // pred_fallthru
        _
    $region12: #{audio_encoder_forward.13} parent=5 // pred_fallthru
      _
    %p354 = scmp.lt.s32.totalorder %s16, 2
    // Predicated region
    $region45: #{audio_encoder_forward.13} parent=5 // pred_check
      %p355 = pneg %p354
    $region46: #{audio_encoder_forward.13} parent=5 // pred_check_branch
      %357 = sbr.rel (%p355) target = $region48
    $region47: #{audio_encoder_forward.13} parent=5 // pred_region
      // Predicated region
      $region49: #{audio_encoder_forward.13} parent=47 // pred_check
        %p358 = pneg %p57
      $region50: #{audio_encoder_forward.13} parent=47 // pred_check_branch
        %360 = sbr.rel (%p358) target = $region52
      $region51: #{audio_encoder_forward.13} parent=47 // pred_region
        %s361 = smul.u32 2, %s23
        %p362 = scmp.lt.s32.totalorder %s24, 1
        %s363 = scalar_select %p362, %s24, 1
        %p364 = scmp.lt.s32.totalorder %s361, 1
        %s365 = scalar_select %p364, %s361, 1
        %s366 = smul.addr %s363, 2
        %s367 = sadd.s32 %s365, %s366
        %s368 = smul.addr %s367, 8
        %s369 = scalar_lea.vmem %s0, %s368
        %s370 = smul.u32 2, %s23
      $region52: #{audio_encoder_forward.13} parent=47 // pred_fallthru
        _
      // Predicated region
      $region53: #{audio_encoder_forward.13} parent=47 // pred_check
        %p371 = pneg %p85
      $region54: #{audio_encoder_forward.13} parent=47 // pred_check_branch
        %373 = sbr.rel (%p371) target = $region56
      $region55: #{audio_encoder_forward.13} parent=47 // pred_region
        %s374 = smul.u32 2, %s23
        %p375 = scmp.lt.s32.totalorder %s24, 1
        %s376 = scalar_select %p375, %s24, 1
        %p377 = scmp.lt.s32.totalorder %s374, 1
        %s378 = scalar_select %p377, %s374, 1
        %s379 = smul.addr %s376, 2
        %s380 = sadd.s32 %s378, %s379
        %s381 = smul.addr %s380, 4
        %s382 = scalar_lea.vmem %s1, %s381
        %s383 = smul.u32 2, %s23
      $region56: #{audio_encoder_forward.13} parent=47 // pred_fallthru
        _
    $region48: #{audio_encoder_forward.13} parent=5 // pred_fallthru
      _
    %p384 = scmp.le.s32.totalorder 1, %s16
    %p385 = scmp.lt.s32.totalorder %s16, 3
    %p386 = pnand %p384, %p385
    %p387 = pneg %p386
    // Predicated region
    $region57: #{audio_encoder_forward.13} parent=5 // pred_check
      _
    $region58: #{audio_encoder_forward.13} parent=5 // pred_check_branch
      %389 = sbr.rel (%p386) target = $region60
    $region59: #{audio_encoder_forward.13} parent=5 // pred_region
      %s390 = ssub.s32 %s16, 1
      %s391 = smul.u32 2, %s26
      %p392 = scmp.lt.s32.totalorder %s27, 1
      %s393 = scalar_select %p392, %s27, 1
      %p394 = scmp.lt.s32.totalorder %s391, 1
      %s395 = scalar_select %p394, %s391, 1
      %s396 = smul.addr %s393, 2
      %s397 = sadd.s32 %s395, %s396
      %s398 = smul.addr %s397, 8
      %s399 = scalar_lea.vmem %s0, %s398
      %p400 = pneg %p63
      %p401 = pneg %p60
      %s402 = smul.u32 2, %s26
      %p403 = scmp.lt.s32.totalorder %s27, 1
      %s404 = scalar_select %p403, %s27, 1
      %p405 = scmp.lt.s32.totalorder %s402, 1
      %s406 = scalar_select %p405, %s402, 1
      %s407 = smul.addr %s404, 2
      %s408 = sadd.s32 %s406, %s407
      %s409 = smul.addr %s408, 4
      %s410 = scalar_lea.vmem %s1, %s409
      %p411 = pneg %p91
      %p412 = pneg %p88
      %p413 = pneg %p112
      %p414 = pneg %p109
      %p415 = pneg %p133
      %p416 = pneg %p130
      %p417 = pneg %p154
      %p418 = pneg %p151
      %p419 = pneg %p175
      %p420 = pneg %p172
      %p421 = scmp.lt.s32.totalorder %s28, 0
      %s422 = scalar_select %p421, %s28, 0
      %s423 = smul.addr %s422, 4
      %s424 = scalar_lea.vmem %s6, %s423
      %p425 = pneg %p201
      %p426 = pneg %p198
      %p427 = scmp.lt.s32.totalorder %s28, 0
      %s428 = scalar_select %p427, %s28, 0
      %s429 = scalar_lea.vmem %s7, %s428
      %p430 = pneg %p227
      %p431 = pneg %p224
      %s432 = smul.u32 16, %s28
      %p433 = scmp.lt.s32.totalorder %s432, 15
      %s434 = scalar_select %p433, %s432, 15
      %s435 = smul.addr %s434, 4
      %s436 = scalar_lea.vmem %s8, %s435
      %p437 = pneg %p253
      %p438 = pneg %p250
      %p439 = pneg %p274
      %p440 = pneg %p271
      %p441 = pneg %p302
      %p442 = pneg %p299
      %s443 = smul.u32 2, %s26
      %p444 = scmp.lt.s32.totalorder %s27, 1
      %s445 = scalar_select %p444, %s27, 1
      %p446 = scmp.lt.s32.totalorder %s443, 1
      %s447 = scalar_select %p446, %s443, 1
      %s448 = smul.addr %s445, 2
      %s449 = sadd.s32 %s447, %s448
      %s450 = smul.addr %s449, 8
      %s451 = scalar_lea.vmem %s10, %s450
      %s452 = smul.u32 2, %s26
      %p453 = scmp.lt.s32.totalorder %s27, 1
      %s454 = scalar_select %p453, %s27, 1
      %p455 = scmp.lt.s32.totalorder %s452, 1
      %s456 = scalar_select %p455, %s452, 1
      %s457 = smul.addr %s454, 2
      %s458 = sadd.s32 %s456, %s457
      %s459 = smul.addr %s458, 8
      %s460 = scalar_lea.vmem %s0, %s459
      %s461 = smul.u32 2, %s26
      %s462 = smul.u32 2, %s26
      %p463 = scmp.lt.s32.totalorder %s27, 1
      %s464 = scalar_select %p463, %s27, 1
      %p465 = scmp.lt.s32.totalorder %s462, 1
      %s466 = scalar_select %p465, %s462, 1
      %s467 = smul.addr %s464, 2
      %s468 = sadd.s32 %s466, %s467
      %s469 = smul.addr %s468, 4
      %s470 = scalar_lea.vmem %s1, %s469
      %s471 = smul.u32 2, %s26
      %p472 = scmp.lt.s32.totalorder %s28, 0
      %s473 = scalar_select %p472, %s28, 0
      %s474 = smul.addr %s473, 4
      %s475 = scalar_lea.vmem %s6, %s474
      %p476 = scmp.lt.s32.totalorder %s28, 0
      %s477 = scalar_select %p476, %s28, 0
      %s478 = scalar_lea.vmem %s7, %s477
      %s479 = smul.u32 16, %s28
      %p480 = scmp.lt.s32.totalorder %s479, 15
      %s481 = scalar_select %p480, %s479, 15
      %s482 = smul.addr %s481, 4
      %s483 = scalar_lea.vmem %s8, %s482
      %s484 = smul.u32 16, %s28
      %s485 = smul.u32 2, %s26
      %p486 = scmp.lt.s32.totalorder %s27, 1
      %s487 = scalar_select %p486, %s27, 1
      %p488 = scmp.lt.s32.totalorder %s485, 1
      %s489 = scalar_select %p488, %s485, 1
      %s490 = smul.addr %s487, 2
      %s491 = sadd.s32 %s489, %s490
      %s492 = smul.addr %s491, 8
      %s493 = scalar_lea.vmem %s10, %s492
      %s494 = smul.u32 2, %s26
      %p496 = scmp.eq.s32.totalorder %s28, 0
      // Predicated region
      $region61: #{audio_encoder_forward.13} parent=59 // pred_check
        %p497 = pneg %p496
      $region62: #{audio_encoder_forward.13} parent=59 // pred_check_branch
        %499 = sbr.rel (%p497) target = $region64
      $region63: #{audio_encoder_forward.13} parent=59 // pred_region
        %v500 = vld [vmem:[%s470] sm:$0xf]
        %v501 = vld [vmem:[%s470 + $0x4] sm:$0xf]
        %v502 = vld [vmem:[%s2] sm:$0xf]
        %v503 = vld [vmem:[%s2 + $0x4] sm:$0xf]
        %v504 = vld [vmem:[%s2 + $0x8] sm:$0xf]
        %v505 = vld [vmem:[%s2 + $0xc] sm:$0xf]
        %v506 = vld [vmem:[%s3] sm:$0x1]
        %v508 = vlaneseq
        %v509 = vshrl.u32 %v508, 7
        %v510 = vsub.s32 0, %v509
        %v511 = vrot.slane %v506, %v510
        %v515 = vunpack.c.l.b16 %v500
        %v516 = vunpack.c.l.b16 %v501
        %v517 = vpack.c.b16 %v516, %v515
        %v522 = vunpack.c.l.b16 %v502
        %v523 = vunpack.c.l.b16 %v503
        %v524 = vunpack.c.l.b16 %v504
        %v525 = vunpack.c.l.b16 %v505
        %v526 = vpack.c.b16 %v523, %v522
        %v527 = vpack.c.b16 %v525, %v524
        %vm530 = vcmask 261120
        %v532 = vsel %vm530, %v517, 0
        %534 = vmatprep.subr.bf16.mxu0 0
        %535 = vmatpush1.bf16.msra.mxu0 %v526
        %536 = vmatprep.subr.bf16.mxu0 0
        %537 = vmatpush1.bf16.msra.mxu0 %v527
        %538 = vmatprep.subr.bf16.mxu0 0
        %539 = vmatpush1.bf16.msra.mxu0 0
        %540 = vmatprep.subr.bf16.mxu0 0
        %541 = vmatpush1.bf16.msra.mxu0 0
        %542 = vmatprep.subr.bf16.mxu0 0
        %543 = vmatpush1.bf16.msra.mxu0 0
        %544 = vmatprep.subr.bf16.mxu0 0
        %545 = vmatpush1.bf16.msra.mxu0 0
        %546 = vmatprep.subr.bf16.mxu0 0
        %547 = vmatpush1.bf16.msra.mxu0 0
        %548 = vmatprep.subr.bf16.mxu0 0
        %549 = vmatpush1.bf16.msra.mxu0 0
        %550 = vmatprep.subr.bf16.mxu0 0
        %551 = vmatpush1.bf16.msra.mxu0 0
        %552 = vmatprep.subr.bf16.mxu0 0
        %553 = vmatpush1.bf16.msra.mxu0 0
        %554 = vmatprep.subr.bf16.mxu0 0
        %555 = vmatpush1.bf16.msra.mxu0 0
        %556 = vmatprep.subr.bf16.mxu0 0
        %557 = vmatpush1.bf16.msra.mxu0 0
        %558 = vmatprep.subr.bf16.mxu0 0
        %559 = vmatpush1.bf16.msra.mxu0 0
        %560 = vmatprep.subr.bf16.mxu0 0
        %561 = vmatpush1.bf16.msra.mxu0 0
        %562 = vmatprep.subr.bf16.mxu0 0
        %563 = vmatpush1.bf16.msra.mxu0 0
        %564 = vmatprep.subr.bf16.mxu0 0
        %565 = vmatpush1.bf16.msra.mxu0 0
        %566 = vmatprep.mubr.bf16.mxu0 0
        %567 = vmatmul.mubr.bf16.gmra.mrb[0].mxu0 %v532
        %v568 = vpop.f32.mrb[0].mxu0
        %v569 = vadd.f32 %v511, %v568
        %v570 = vpop.f32.mrb[0].mxu0
        %v571 = vpop.f32.mrb[0].mxu0
        %v572 = vadd.f32 %v511, %v571
        %v573 = vpop.f32.mrb[0].mxu0
        %574 = vdwg.mxu0
        %v575 = vld [vmem:[%s460] sm:$0xff]
        %v576 = vld [vmem:[%s460 + $0x8] sm:$0xff]
        %v577 = vadd.f32 %v575, %v569
        %v578 = vadd.f32 %v576, %v572
        %579 = vst.msk [vmem:[#allocation2] sm:$0xff] %vm530, %v577
        %580 = vst.msk [vmem:[#allocation2 + $0x8] sm:$0xff] %vm530, %v578
        %v581 = vld [vmem:[%s4] sm:$0x1]
        %v582 = vld [vmem:[%s5] sm:$0x1]
        %v583 = vsel %vm530, %v577, 0.0
        %584 = vadd.xlane.f32.xlu0 %v583
        %v585 = vpop.xlane.xlu0 %584
        %v586 = vsel %vm530, %v578, 0.0
        %587 = vadd.xlane.f32.xlu0 %v586
        %v588 = vpop.xlane.xlu0 %587
        %v589 = vrcp.pop 32.0
        %v590 = vmul.f32 %v585, %v589
        %v591 = vmul.f32 %v588, %v589
        %v592 = vsub.f32 %v577, %v590
        %v593 = vsub.f32 %v578, %v591
        %v594 = vmul.f32 %v592, %v592
        %v595 = vmul.f32 %v593, %v593
        %v596 = vsel %vm530, %v594, 0.0
        %597 = vadd.xlane.f32.xlu0 %v596
        %v598 = vpop.xlane.xlu0 %597
        %v599 = vsel %vm530, %v595, 0.0
        %600 = vadd.xlane.f32.xlu0 %v599
        %v601 = vpop.xlane.xlu0 %600
        %v602 = vmul.f32 %v598, %v589
        %v603 = vmul.f32 %v601, %v589
        %v604 = vadd.f32 %v602, 1e-05
        %v605 = vadd.f32 %v603, 1e-05
        %v606 = vrsqrt.pop %v604
        %v607 = vrsqrt.pop %v605
        %v608 = vmul.f32 %v592, %v606
        %v609 = vmul.f32 %v593, %v607
        %v611 = vlaneseq
        %v612 = vshrl.u32 %v611, 7
        %v613 = vsub.s32 0, %v612
        %v614 = vrot.slane %v581, %v613
        %v616 = vmul.f32 %v608, %v614
        %v617 = vmul.f32 %v609, %v614
        %v619 = vlaneseq
        %v620 = vshrl.u32 %v619, 7
        %v621 = vsub.s32 0, %v620
        %v622 = vrot.slane %v582, %v621
        %v624 = vadd.f32 %v616, %v622
        %v625 = vadd.f32 %v617, %v622
        %v626 = vpack.c.bf16 %v625, %v624
        %627 = vst.msk [vmem:[#allocation3] sm:$0xff] %vm530, %v626
        %628 = vst.msk [vmem:[#allocation4] sm:$0xff] %vm530, 0.0
        %629 = vst.msk [vmem:[#allocation4 + $0x8] sm:$0xff] %vm530, 0.0
      $region64: #{audio_encoder_forward.13} parent=59 // pred_fallthru
        _
      %v630 = vld [vmem:[#allocation3] sm:$0xff]
      %v631 = vld [vmem:[%s475] sm:$0xf]
      %v632 = vld [vmem:[%s475 + $0x4] sm:$0xf]
      %v633 = vld [vmem:[%s475 + $0x8] sm:$0xf]
      %v634 = vld [vmem:[%s475 + $0xc] sm:$0xf]
      %v635 = vld [vmem:[%s478] sm:$0x1]
      %v637 = vlaneseq
      %v638 = vshrl.u32 %v637, 7
      %v639 = vsub.s32 0, %v638
      %v640 = vrot.slane %v635, %v639
      %v646 = vunpack.c.l.b16 %v631
      %v647 = vunpack.c.l.b16 %v632
      %v648 = vunpack.c.l.b16 %v633
      %v649 = vunpack.c.l.b16 %v634
      %v650 = vpack.c.b16 %v647, %v646
      %v651 = vpack.c.b16 %v649, %v648
      %vm654 = vcmask 261120
      %v656 = vsel %vm654, %v630, 0
      %658 = vmatprep.subr.bf16.mxu0 0
      %659 = vmatpush1.bf16.msra.mxu0 %v650
      %660 = vmatprep.subr.bf16.mxu0 0
      %661 = vmatpush1.bf16.msra.mxu0 %v651
      %662 = vmatprep.subr.bf16.mxu0 0
      %663 = vmatpush1.bf16.msra.mxu0 0
      %664 = vmatprep.subr.bf16.mxu0 0
      %665 = vmatpush1.bf16.msra.mxu0 0
      %666 = vmatprep.subr.bf16.mxu0 0
      %667 = vmatpush1.bf16.msra.mxu0 0
      %668 = vmatprep.subr.bf16.mxu0 0
      %669 = vmatpush1.bf16.msra.mxu0 0
      %670 = vmatprep.subr.bf16.mxu0 0
      %671 = vmatpush1.bf16.msra.mxu0 0
      %672 = vmatprep.subr.bf16.mxu0 0
      %673 = vmatpush1.bf16.msra.mxu0 0
      %674 = vmatprep.subr.bf16.mxu0 0
      %675 = vmatpush1.bf16.msra.mxu0 0
      %676 = vmatprep.subr.bf16.mxu0 0
      %677 = vmatpush1.bf16.msra.mxu0 0
      %678 = vmatprep.subr.bf16.mxu0 0
      %679 = vmatpush1.bf16.msra.mxu0 0
      %680 = vmatprep.subr.bf16.mxu0 0
      %681 = vmatpush1.bf16.msra.mxu0 0
      %682 = vmatprep.subr.bf16.mxu0 0
      %683 = vmatpush1.bf16.msra.mxu0 0
      %684 = vmatprep.subr.bf16.mxu0 0
      %685 = vmatpush1.bf16.msra.mxu0 0
      %686 = vmatprep.subr.bf16.mxu0 0
      %687 = vmatpush1.bf16.msra.mxu0 0
      %688 = vmatprep.subr.bf16.mxu0 0
      %689 = vmatpush1.bf16.msra.mxu0 0
      %690 = vmatprep.mubr.bf16.mxu0 0
      %691 = vmatmul.mubr.bf16.gmra.mrb[0].mxu0 %v656
      %v692 = vpop.f32.mrb[0].mxu0
      %v693 = vadd.f32 %v640, %v692
      %v694 = vpop.f32.mrb[0].mxu0
      %v695 = vpop.f32.mrb[0].mxu0
      %v696 = vadd.f32 %v640, %v695
      %v697 = vpop.f32.mrb[0].mxu0
      %698 = vdwg.mxu0
      %v699 = vmul.f32 %v693, 0.5
      %v700 = vmul.f32 %v696, 0.5
      %v701 = vrcp.pop 1.4142135
      %v702 = vmul.f32 %v693, %v701
      %v703 = vmul.f32 %v696, %v701
      %v704 = verf.f32.pop %v702
      %v705 = verf.f32.pop %v703
      %v706 = vadd.f32 %v704, 1.0
      %v707 = vadd.f32 %v705, 1.0
      %v708 = vmul.f32 %v699, %v706
      %v709 = vmul.f32 %v700, %v707
      %v710 = vld [vmem:[#allocation4] sm:$0xff]
      %v711 = vld [vmem:[#allocation4 + $0x8] sm:$0xff]
      %v712 = vpack.c.bf16 %v709, %v708
      %v713 = vld [vmem:[%s483] sm:$0xf]
      %v714 = vld [vmem:[%s483 + $0x4] sm:$0xf]
      %v715 = vld [vmem:[%s483 + $0x8] sm:$0xf]
      %v716 = vld [vmem:[%s483 + $0xc] sm:$0xf]
      %v717 = vld [vmem:[%s483 + $0x10] sm:$0xf]
      %v718 = vld [vmem:[%s483 + $0x14] sm:$0xf]
      %v719 = vld [vmem:[%s483 + $0x18] sm:$0xf]
      %v720 = vld [vmem:[%s483 + $0x1c] sm:$0xf]
      %v721 = vld [vmem:[%s483 + $0x20] sm:$0xf]
      %v722 = vld [vmem:[%s483 + $0x24] sm:$0xf]
      %v723 = vld [vmem:[%s483 + $0x28] sm:$0xf]
      %v724 = vld [vmem:[%s483 + $0x2c] sm:$0xf]
      %v725 = vld [vmem:[%s483 + $0x30] sm:$0xf]
      %v726 = vld [vmem:[%s483 + $0x34] sm:$0xf]
      %v727 = vld [vmem:[%s483 + $0x38] sm:$0xf]
      %v728 = vld [vmem:[%s483 + $0x3c] sm:$0xf]
      %v745 = vunpack.c.l.b16 %v713
      %v746 = vunpack.c.l.b16 %v714
      %v747 = vunpack.c.l.b16 %v715
      %v748 = vunpack.c.l.b16 %v716
      %v749 = vunpack.c.l.b16 %v717
      %v750 = vunpack.c.l.b16 %v718
      %v751 = vunpack.c.l.b16 %v719
      %v752 = vunpack.c.l.b16 %v720
      %v753 = vunpack.c.l.b16 %v721
      %v754 = vunpack.c.l.b16 %v722
      %v755 = vunpack.c.l.b16 %v723
      %v756 = vunpack.c.l.b16 %v724
      %v757 = vunpack.c.l.b16 %v725
      %v758 = vunpack.c.l.b16 %v726
      %v759 = vunpack.c.l.b16 %v727
      %v760 = vunpack.c.l.b16 %v728
      %v761 = vpack.c.b16 %v746, %v745
      %v762 = vpack.c.b16 %v748, %v747
      %v763 = vpack.c.b16 %v750, %v749
      %v764 = vpack.c.b16 %v752, %v751
      %v765 = vpack.c.b16 %v754, %v753
      %v766 = vpack.c.b16 %v756, %v755
      %v767 = vpack.c.b16 %v758, %v757
      %v768 = vpack.c.b16 %v760, %v759
      %777 = vmatprep.subr.bf16.mxu0 0
      %778 = vmatpush1.bf16.msra.mxu0 %v761
      %779 = vmatprep.subr.bf16.mxu0 0
      %780 = vmatpush1.bf16.msra.mxu0 %v762
      %781 = vmatprep.subr.bf16.mxu0 0
      %782 = vmatpush1.bf16.msra.mxu0 %v763
      %783 = vmatprep.subr.bf16.mxu0 0
      %784 = vmatpush1.bf16.msra.mxu0 %v764
      %785 = vmatprep.subr.bf16.mxu0 0
      %786 = vmatpush1.bf16.msra.mxu0 %v765
      %787 = vmatprep.subr.bf16.mxu0 0
      %788 = vmatpush1.bf16.msra.mxu0 %v766
      %789 = vmatprep.subr.bf16.mxu0 0
      %790 = vmatpush1.bf16.msra.mxu0 %v767
      %791 = vmatprep.subr.bf16.mxu0 0
      %792 = vmatpush1.bf16.msra.mxu0 %v768
      %793 = vmatprep.subr.bf16.mxu0 0
      %794 = vmatpush1.bf16.msra.mxu0 0
      %795 = vmatprep.subr.bf16.mxu0 0
      %796 = vmatpush1.bf16.msra.mxu0 0
      %797 = vmatprep.subr.bf16.mxu0 0
      %798 = vmatpush1.bf16.msra.mxu0 0
      %799 = vmatprep.subr.bf16.mxu0 0
      %800 = vmatpush1.bf16.msra.mxu0 0
      %801 = vmatprep.subr.bf16.mxu0 0
      %802 = vmatpush1.bf16.msra.mxu0 0
      %803 = vmatprep.subr.bf16.mxu0 0
      %804 = vmatpush1.bf16.msra.mxu0 0
      %805 = vmatprep.subr.bf16.mxu0 0
      %806 = vmatpush1.bf16.msra.mxu0 0
      %807 = vmatprep.subr.bf16.mxu0 0
      %808 = vmatpush1.bf16.msra.mxu0 0
      %809 = vmatprep.mubr.bf16.mxu0 0
      %810 = vmatmul.mubr.bf16.gmra.mrb[0].mxu0 %v712
      %v811 = vpop.f32.mrb[0].mxu0
      %v812 = vadd.f32 0.0, %v811
      %v813 = vpop.f32.mrb[0].mxu0
      %v814 = vpop.f32.mrb[0].mxu0
      %v815 = vadd.f32 0.0, %v814
      %v816 = vpop.f32.mrb[0].mxu0
      %817 = vdwg.mxu0
      %v818 = vadd.f32 %v710, %v812
      %v819 = vadd.f32 %v711, %v815
      %820 = vst.msk [vmem:[#allocation4] sm:$0xff] %vm654, %v818
      %821 = vst.msk [vmem:[#allocation4 + $0x8] sm:$0xff] %vm654, %v819
      // Predicated region
      $region65: #{audio_encoder_forward.13} parent=59 // pred_check
        %p822 = pneg %p496
      $region66: #{audio_encoder_forward.13} parent=59 // pred_check_branch
        %824 = sbr.rel (%p822) target = $region68
      $region67: #{audio_encoder_forward.13} parent=59 // pred_region
        %v825 = vld [vmem:[#allocation2] sm:$0xff]
        %v826 = vld [vmem:[#allocation2 + $0x8] sm:$0xff]
        %v827 = vld [vmem:[#allocation4] sm:$0xff]
        %v828 = vld [vmem:[#allocation4 + $0x8] sm:$0xff]
        %v829 = vadd.f32 %v825, %v827
        %v830 = vadd.f32 %v826, %v828
        %v831 = vld [vmem:[%s9] sm:$0x1]
        %v833 = vlaneseq
        %v834 = vshrl.u32 %v833, 7
        %v835 = vsub.s32 0, %v834
        %v836 = vrot.slane %v831, %v835
        %v838 = vadd.f32 %v829, %v836
        %v839 = vadd.f32 %v830, %v836
        %840 = vst.msk [vmem:[%s493] sm:$0xff] %vm654, %v838
        %841 = vst.msk [vmem:[%s493 + $0x8] sm:$0xff] %vm654, %v839
      $region68: #{audio_encoder_forward.13} parent=59 // pred_fallthru
        _
      %s842 = smul.u32 2, %s26
      %p843 = scmp.lt.s32.totalorder %s27, 1
      %s844 = scalar_select %p843, %s27, 1
      %p845 = scmp.lt.s32.totalorder %s842, 1
      %s846 = scalar_select %p845, %s842, 1
      %s847 = smul.addr %s844, 2
      %s848 = sadd.s32 %s846, %s847
      %s849 = smul.addr %s848, 8
      %s850 = scalar_lea.vmem %s10, %s849
      // Predicated region
      $region69: #{audio_encoder_forward.13} parent=59 // pred_check
        %p851 = pneg %p299
      $region70: #{audio_encoder_forward.13} parent=59 // pred_check_branch
        %853 = sbr.rel (%p851) target = $region72
      $region71: #{audio_encoder_forward.13} parent=59 // pred_region
        %s854 = smul.u32 2, %s26
      $region72: #{audio_encoder_forward.13} parent=59 // pred_fallthru
        _
    $region60: #{audio_encoder_forward.13} parent=5 // pred_fallthru
      _
    %p855 = scmp.le.s32.totalorder 2, %s16
    // Predicated region
    $region73: #{audio_encoder_forward.13} parent=5 // pred_check
      %p856 = pneg %p855
    $region74: #{audio_encoder_forward.13} parent=5 // pred_check_branch
      %858 = sbr.rel (%p856) target = $region76
    $region75: #{audio_encoder_forward.13} parent=5 // pred_region
      %s859 = ssub.s32 %s16, 2
      // Predicated region
      $region77: #{audio_encoder_forward.13} parent=75 // pred_check
        %p860 = pneg %p305
      $region78: #{audio_encoder_forward.13} parent=75 // pred_check_branch
        %862 = sbr.rel (%p860) target = $region80
      $region79: #{audio_encoder_forward.13} parent=75 // pred_region
        %s863 = smul.u32 2, %s29
        %p864 = scmp.lt.s32.totalorder %s30, 1
        %s865 = scalar_select %p864, %s30, 1
        %p866 = scmp.lt.s32.totalorder %s863, 1
        %s867 = scalar_select %p866, %s863, 1
        %s868 = smul.addr %s865, 2
        %s869 = sadd.s32 %s867, %s868
        %s870 = smul.addr %s869, 8
        %s871 = scalar_lea.vmem %s10, %s870
      $region80: #{audio_encoder_forward.13} parent=75 // pred_fallthru
        _
    $region76: #{audio_encoder_forward.13} parent=5 // pred_fallthru
      _
  $region6: #{audio_encoder_forward.13} parent=0 // loop_footer
    %s20 = sadd.s32 1, %s16
  $region7: #{audio_encoder_forward.13} parent=0 // loop_footer_branch
    %15 = sbr.rel target = $region3
  $region8: #{audio_encoder_forward.13} parent=0 // loop_exit
    _

</llo_original>
